<compile_context>
chip_gen: v5e
topology: v5e:2x2
jax: 0.10.0
libtpu: 0.0.40
codegen_flags: <defaults>
</compile_context>

<pallas_src>
import numpy as np

import jax
import jax.numpy as jnp
from jax.experimental import pallas as pl
from jax.experimental.pallas import tpu as pltpu


# ----------------------------------------------------------------------------
# Deterministic "parameter" construction (mirrors laplacian_of_gaussian_2d /
# create_window from the PyTorch module).  All channels share the same 2D LoG.
# ----------------------------------------------------------------------------
def laplacian_of_gaussian_2d(window_size: int, sigma: float) -> np.ndarray:
    log = np.zeros((window_size, window_size), dtype=np.float64)
    sd = sigma * sigma
    for x in range(window_size):
        for y in range(window_size):
            x_sq = (x - window_size // 2) ** 2 + (y - window_size // 2) ** 2
            log[x, y] = ((x_sq / (2.0 * sd) - 1.0) / (np.pi * sd ** 2)
                         * np.exp(-x_sq / (2.0 * sd)))
    return log


def _toeplitz_bank(log2d: np.ndarray, W: int) -> jnp.ndarray:
    """Build T with T[kh, w, ow] = log2d[kh, w - ow] (valid cross-corr along W).

    For a row r of the |image| (length W):  (r @ T[kh])[ow] =
        sum_kw r[ow + kw] * log2d[kh, kw]
    i.e. the width part of F.conv2d's valid cross-correlation for filter row kh.
    Built once at trace time -> compile-time constant operand of the matmuls.
    """
    ws = log2d.shape[0]
    OW = W - ws + 1
    t = np.zeros((ws, W, OW), dtype=np.float32)
    for kh in range(ws):
        row = log2d[kh].astype(np.float32)
        for ow in range(OW):
            t[kh, ow:ow + ws, ow] = row
    return jnp.asarray(t)


# ----------------------------------------------------------------------------
# Pallas kernel
# ----------------------------------------------------------------------------
def _make_hfen_kernel(window_size: int, C: int, H: int, W: int):
    ws = window_size
    OH = H - ws + 1
    OW = W - ws + 1

    def kernel(t_ref, x1_ref, x2_ref, out_ref):
        # t_ref  : (ws, W, OW) f32, VMEM -- Toeplitz bank of the LoG rows
        # x1_ref : (1, C, H, W)  native dtype, VMEM (one batch element)
        # x2_ref : (1, C, H, W)  native dtype, VMEM
        # out_ref: (1, 8, 128)   f32, VMEM -- lane-dense tile broadcast-filled
        #          with the per-batch HFEN value
        num_sq = jnp.zeros((), jnp.float32)   # sum (LoG1 - LoG2)^2
        den_sq = jnp.zeros((), jnp.float32)   # sum LoG1^2

        for c in range(C):
            # abs(img) like the reference; cast to f32 inside the kernel so the
            # HBM->VMEM DMA stays in the native dtype.
            a1 = jnp.abs(x1_ref[0, c, :, :]).astype(jnp.float32)   # (H, W)
            a2 = jnp.abs(x2_ref[0, c, :, :]).astype(jnp.float32)

            log1 = jnp.zeros((OH, OW), jnp.float32)
            log2 = jnp.zeros((OH, OW), jnp.float32)

            # One MXU matmul per filter row: rows [kh, kh+OH) of |img| times the
            # (W, OW) Toeplitz of filter row kh, accumulated in f32.  Only
            # sublane-offset slices; no lane-crossing kw shifts.
            for kh in range(ws):
                t_kh = t_ref[kh]                                   # (W, OW) f32
                log1 = log1 + jnp.dot(a1[kh:kh + OH, :], t_kh,
                                      preferred_element_type=jnp.float32)
                log2 = log2 + jnp.dot(a2[kh:kh + OH, :], t_kh,
                                      preferred_element_type=jnp.float32)

            d = log1 - log2
            num_sq = num_sq + jnp.sum(d * d)
            den_sq = den_sq + jnp.sum(log1 * log1)

        hfen_b = jnp.sqrt(num_sq) / jnp.sqrt(den_sq)   # ||d||_2 / ||LoG1||_2
        out_ref[...] = jnp.full((1, 8, 128), hfen_b, dtype=jnp.float32)

    return kernel


# ----------------------------------------------------------------------------
# Wrapper (the "HFEN.forward" equivalent)
# ----------------------------------------------------------------------------
def hfen(img1: jnp.ndarray, img2: jnp.ndarray,
         window_size: int = 13, sigma: float = 1.5) -> jnp.ndarray:
    assert img1.shape == img2.shape
    B, C, H, W = img1.shape
    OW = W - window_size + 1
    assert H >= window_size and W >= window_size

    log2d = laplacian_of_gaussian_2d(window_size, sigma)
    toep = _toeplitz_bank(log2d, W)                  # (ws, W, OW) f32 constant

    kernel = _make_hfen_kernel(window_size, C, H, W)

    per_batch = pl.pallas_call(
        kernel,
        out_shape=jax.ShapeDtypeStruct((B, 8, 128), jnp.float32),
        grid=(B,),
        in_specs=[
            pl.BlockSpec((window_size, W, OW), lambda b: (0, 0, 0)),   # Toeplitz
            pl.BlockSpec((1, C, H, W), lambda b: (b, 0, 0, 0)),        # img1
            pl.BlockSpec((1, C, H, W), lambda b: (b, 0, 0, 0)),        # img2
        ],
        out_specs=pl.BlockSpec((1, 8, 128), lambda b: (b, 0, 0)),
        compiler_params=pltpu.CompilerParams(
            dimension_semantics=("parallel",)),       # megacore on v7x
    )(toep, img1, img2)                               # native dtype, no cast

    # size_average=True -> mean over the batch
    return jnp.mean(per_batch[:, 0, 0])


# ----------------------------------------------------------------------------
# Pure-JAX reference (for a sanity check only)
# ----------------------------------------------------------------------------
def hfen_ref(img1, img2, window_size=13, sigma=1.5):
    B, C, H, W = img1.shape
    w2d = jnp.asarray(laplacian_of_gaussian_2d(window_size, sigma).astype(np.float32))
    wfull = jnp.broadcast_to(w2d[None, None], (C, 1, window_size, window_size))

    def conv(x):
        return jax.lax.conv_general_dilated(
            jnp.abs(x).astype(jnp.float32), wfull,
            window_strides=(1, 1), padding="VALID",
            dimension_numbers=("NCHW", "OIHW", "NCHW"),
            feature_group_count=C)

    l1 = conv(img1).reshape(B, -1)
    l2 = conv(img2).reshape(B, -1)
    norm = jnp.sqrt(jnp.sum((l1 - l2) ** 2, axis=1)) / jnp.sqrt(jnp.sum(l1 ** 2, axis=1))
    return jnp.mean(norm)


if __name__ == "__main__":
    key = jax.random.PRNGKey(0)
    k1, k2 = jax.random.split(key)
    B, C, H, W = 2, 4, 16, 16  # window_size=13 -> 4x4 valid conv output
    img1 = jax.random.normal(k1, (B, C, H, W), dtype=jnp.float32)
    img2 = jax.random.normal(k2, (B, C, H, W), dtype=jnp.float32)

    out = jax.block_until_ready(hfen(img1, img2))
    ref = jax.block_until_ready(hfen_ref(img1, img2))

    assert jnp.isfinite(out), "HFEN output is not finite"
    assert jnp.allclose(out, ref, rtol=1e-4, atol=1e-5), (out, ref)
    print("KERNEL_OK")
</pallas_src>

<mosaic_0001>
module attributes {stable_mosaic.version = 11 : i64} {
  func.func @kernel(%arg0: i32, %arg1: memref<13x16x4xf32, #tpu.memory_space<vmem>>, %arg2: memref<1x4x16x16xf32, #tpu.memory_space<vmem>>, %arg3: memref<1x4x16x16xf32, #tpu.memory_space<vmem>>, %arg4: memref<1x8x128xf32, #tpu.memory_space<vmem>>) attributes {dimension_semantics = [#tpu.dimension_semantics<parallel>], iteration_bounds = array<i64: 2>, scalar_prefetch = 0 : i64, scratch_operands = 0 : i64, tpu.core_type = #tpu.core_type<tc>, window_params = [{pipeline_mode = #tpu.pipeline_mode<synchronous>, transform_indices = @transform_0, window_bounds = array<i64: 13, 16, 4>}, {transform_indices = @transform_1, window_bounds = array<i64: 1, 4, 16, 16>}, {transform_indices = @transform_2, window_bounds = array<i64: 1, 4, 16, 16>}, {transform_indices = @transform_3, window_bounds = array<i64: 1, 8, 128>}]} {
    %c0 = arith.constant 0 : index
    %c0_0 = arith.constant 0 : index
    %c0_1 = arith.constant 0 : index
    %c0_2 = arith.constant 0 : index
    %0 = vector.load %arg2[%c0, %c0_0, %c0_1, %c0_2] : memref<1x4x16x16xf32, #tpu.memory_space<vmem>>, vector<1x1x16x16xf32>
    %1 = vector.shape_cast %0 : vector<1x1x16x16xf32> to vector<16x16xf32>
    %2 = math.absf %1 : vector<16x16xf32>
    %c0_3 = arith.constant 0 : index
    %c0_4 = arith.constant 0 : index
    %c0_5 = arith.constant 0 : index
    %c0_6 = arith.constant 0 : index
    %3 = vector.load %arg3[%c0_3, %c0_4, %c0_5, %c0_6] : memref<1x4x16x16xf32, #tpu.memory_space<vmem>>, vector<1x1x16x16xf32>
    %4 = vector.shape_cast %3 : vector<1x1x16x16xf32> to vector<16x16xf32>
    %5 = math.absf %4 : vector<16x16xf32>
    %cst = arith.constant 0.000000e+00 : f32
    %6 = vector.broadcast %cst : f32 to vector<4x4xf32>
    %cst_7 = arith.constant 0.000000e+00 : f32
    %7 = vector.broadcast %cst_7 : f32 to vector<4x4xf32>
    %c0_8 = arith.constant 0 : index
    %c0_9 = arith.constant 0 : index
    %c0_10 = arith.constant 0 : index
    %8 = vector.load %arg1[%c0_8, %c0_9, %c0_10] : memref<13x16x4xf32, #tpu.memory_space<vmem>>, vector<1x16x4xf32>
    %9 = vector.shape_cast %8 : vector<1x16x4xf32> to vector<16x4xf32>
    %10 = vector.extract_strided_slice %2 {offsets = [0, 0], sizes = [4, 16], strides = [1, 1]} : vector<16x16xf32> to vector<4x16xf32>
    %cst_11 = arith.constant dense<0.000000e+00> : vector<4x4xf32>
    %11 = tpu.matmul %10, %9, %cst_11 {dimension_numbers = #tpu.dot_dimension_numbers<[1], [0], [0], [1], [0, 0, 1, 1], [], []>} : vector<4x16xf32>, vector<16x4xf32>, vector<4x4xf32> -> vector<4x4xf32>
    %12 = arith.addf %6, %11 : vector<4x4xf32>
    %13 = vector.extract_strided_slice %5 {offsets = [0, 0], sizes = [4, 16], strides = [1, 1]} : vector<16x16xf32> to vector<4x16xf32>
    %cst_12 = arith.constant dense<0.000000e+00> : vector<4x4xf32>
    %14 = tpu.matmul %13, %9, %cst_12 {dimension_numbers = #tpu.dot_dimension_numbers<[1], [0], [0], [1], [0, 0, 1, 1], [], []>} : vector<4x16xf32>, vector<16x4xf32>, vector<4x4xf32> -> vector<4x4xf32>
    %15 = arith.addf %7, %14 : vector<4x4xf32>
    %c1 = arith.constant 1 : index
    %c0_13 = arith.constant 0 : index
    %c0_14 = arith.constant 0 : index
    %16 = vector.load %arg1[%c1, %c0_13, %c0_14] : memref<13x16x4xf32, #tpu.memory_space<vmem>>, vector<1x16x4xf32>
    %17 = vector.shape_cast %16 : vector<1x16x4xf32> to vector<16x4xf32>
    %18 = vector.extract_strided_slice %2 {offsets = [1, 0], sizes = [4, 16], strides = [1, 1]} : vector<16x16xf32> to vector<4x16xf32>
    %cst_15 = arith.constant dense<0.000000e+00> : vector<4x4xf32>
    %19 = tpu.matmul %18, %17, %cst_15 {dimension_numbers = #tpu.dot_dimension_numbers<[1], [0], [0], [1], [0, 0, 1, 1], [], []>} : vector<4x16xf32>, vector<16x4xf32>, vector<4x4xf32> -> vector<4x4xf32>
    %20 = arith.addf %12, %19 : vector<4x4xf32>
    %21 = vector.extract_strided_slice %5 {offsets = [1, 0], sizes = [4, 16], strides = [1, 1]} : vector<16x16xf32> to vector<4x16xf32>
    %cst_16 = arith.constant dense<0.000000e+00> : vector<4x4xf32>
    %22 = tpu.matmul %21, %17, %cst_16 {dimension_numbers = #tpu.dot_dimension_numbers<[1], [0], [0], [1], [0, 0, 1, 1], [], []>} : vector<4x16xf32>, vector<16x4xf32>, vector<4x4xf32> -> vector<4x4xf32>
    %23 = arith.addf %15, %22 : vector<4x4xf32>
    %c2 = arith.constant 2 : index
    %c0_17 = arith.constant 0 : index
    %c0_18 = arith.constant 0 : index
    %24 = vector.load %arg1[%c2, %c0_17, %c0_18] : memref<13x16x4xf32, #tpu.memory_space<vmem>>, vector<1x16x4xf32>
    %25 = vector.shape_cast %24 : vector<1x16x4xf32> to vector<16x4xf32>
    %26 = vector.extract_strided_slice %2 {offsets = [2, 0], sizes = [4, 16], strides = [1, 1]} : vector<16x16xf32> to vector<4x16xf32>
    %cst_19 = arith.constant dense<0.000000e+00> : vector<4x4xf32>
    %27 = tpu.matmul %26, %25, %cst_19 {dimension_numbers = #tpu.dot_dimension_numbers<[1], [0], [0], [1], [0, 0, 1, 1], [], []>} : vector<4x16xf32>, vector<16x4xf32>, vector<4x4xf32> -> vector<4x4xf32>
    %28 = arith.addf %20, %27 : vector<4x4xf32>
    %29 = vector.extract_strided_slice %5 {offsets = [2, 0], sizes = [4, 16], strides = [1, 1]} : vector<16x16xf32> to vector<4x16xf32>
    %cst_20 = arith.constant dense<0.000000e+00> : vector<4x4xf32>
    %30 = tpu.matmul %29, %25, %cst_20 {dimension_numbers = #tpu.dot_dimension_numbers<[1], [0], [0], [1], [0, 0, 1, 1], [], []>} : vector<4x16xf32>, vector<16x4xf32>, vector<4x4xf32> -> vector<4x4xf32>
    %31 = arith.addf %23, %30 : vector<4x4xf32>
    %c3 = arith.constant 3 : index
    %c0_21 = arith.constant 0 : index
    %c0_22 = arith.constant 0 : index
    %32 = vector.load %arg1[%c3, %c0_21, %c0_22] : memref<13x16x4xf32, #tpu.memory_space<vmem>>, vector<1x16x4xf32>
    %33 = vector.shape_cast %32 : vector<1x16x4xf32> to vector<16x4xf32>
    %34 = vector.extract_strided_slice %2 {offsets = [3, 0], sizes = [4, 16], strides = [1, 1]} : vector<16x16xf32> to vector<4x16xf32>
    %cst_23 = arith.constant dense<0.000000e+00> : vector<4x4xf32>
    %35 = tpu.matmul %34, %33, %cst_23 {dimension_numbers = #tpu.dot_dimension_numbers<[1], [0], [0], [1], [0, 0, 1, 1], [], []>} : vector<4x16xf32>, vector<16x4xf32>, vector<4x4xf32> -> vector<4x4xf32>
    %36 = arith.addf %28, %35 : vector<4x4xf32>
    %37 = vector.extract_strided_slice %5 {offsets = [3, 0], sizes = [4, 16], strides = [1, 1]} : vector<16x16xf32> to vector<4x16xf32>
    %cst_24 = arith.constant dense<0.000000e+00> : vector<4x4xf32>
    %38 = tpu.matmul %37, %33, %cst_24 {dimension_numbers = #tpu.dot_dimension_numbers<[1], [0], [0], [1], [0, 0, 1, 1], [], []>} : vector<4x16xf32>, vector<16x4xf32>, vector<4x4xf32> -> vector<4x4xf32>
    %39 = arith.addf %31, %38 : vector<4x4xf32>
    %c4 = arith.constant 4 : index
    %c0_25 = arith.constant 0 : index
    %c0_26 = arith.constant 0 : index
    %40 = vector.load %arg1[%c4, %c0_25, %c0_26] : memref<13x16x4xf32, #tpu.memory_space<vmem>>, vector<1x16x4xf32>
    %41 = vector.shape_cast %40 : vector<1x16x4xf32> to vector<16x4xf32>
    %42 = vector.extract_strided_slice %2 {offsets = [4, 0], sizes = [4, 16], strides = [1, 1]} : vector<16x16xf32> to vector<4x16xf32>
    %cst_27 = arith.constant dense<0.000000e+00> : vector<4x4xf32>
    %43 = tpu.matmul %42, %41, %cst_27 {dimension_numbers = #tpu.dot_dimension_numbers<[1], [0], [0], [1], [0, 0, 1, 1], [], []>} : vector<4x16xf32>, vector<16x4xf32>, vector<4x4xf32> -> vector<4x4xf32>
    %44 = arith.addf %36, %43 : vector<4x4xf32>
    %45 = vector.extract_strided_slice %5 {offsets = [4, 0], sizes = [4, 16], strides = [1, 1]} : vector<16x16xf32> to vector<4x16xf32>
    %cst_28 = arith.constant dense<0.000000e+00> : vector<4x4xf32>
    %46 = tpu.matmul %45, %41, %cst_28 {dimension_numbers = #tpu.dot_dimension_numbers<[1], [0], [0], [1], [0, 0, 1, 1], [], []>} : vector<4x16xf32>, vector<16x4xf32>, vector<4x4xf32> -> vector<4x4xf32>
    %47 = arith.addf %39, %46 : vector<4x4xf32>
    %c5 = arith.constant 5 : index
    %c0_29 = arith.constant 0 : index
    %c0_30 = arith.constant 0 : index
    %48 = vector.load %arg1[%c5, %c0_29, %c0_30] : memref<13x16x4xf32, #tpu.memory_space<vmem>>, vector<1x16x4xf32>
    %49 = vector.shape_cast %48 : vector<1x16x4xf32> to vector<16x4xf32>
    %50 = vector.extract_strided_slice %2 {offsets = [5, 0], sizes = [4, 16], strides = [1, 1]} : vector<16x16xf32> to vector<4x16xf32>
    %cst_31 = arith.constant dense<0.000000e+00> : vector<4x4xf32>
    %51 = tpu.matmul %50, %49, %cst_31 {dimension_numbers = #tpu.dot_dimension_numbers<[1], [0], [0], [1], [0, 0, 1, 1], [], []>} : vector<4x16xf32>, vector<16x4xf32>, vector<4x4xf32> -> vector<4x4xf32>
    %52 = arith.addf %44, %51 : vector<4x4xf32>
    %53 = vector.extract_strided_slice %5 {offsets = [5, 0], sizes = [4, 16], strides = [1, 1]} : vector<16x16xf32> to vector<4x16xf32>
    %cst_32 = arith.constant dense<0.000000e+00> : vector<4x4xf32>
    %54 = tpu.matmul %53, %49, %cst_32 {dimension_numbers = #tpu.dot_dimension_numbers<[1], [0], [0], [1], [0, 0, 1, 1], [], []>} : vector<4x16xf32>, vector<16x4xf32>, vector<4x4xf32> -> vector<4x4xf32>
    %55 = arith.addf %47, %54 : vector<4x4xf32>
    %c6 = arith.constant 6 : index
    %c0_33 = arith.constant 0 : index
    %c0_34 = arith.constant 0 : index
    %56 = vector.load %arg1[%c6, %c0_33, %c0_34] : memref<13x16x4xf32, #tpu.memory_space<vmem>>, vector<1x16x4xf32>
    %57 = vector.shape_cast %56 : vector<1x16x4xf32> to vector<16x4xf32>
    %58 = vector.extract_strided_slice %2 {offsets = [6, 0], sizes = [4, 16], strides = [1, 1]} : vector<16x16xf32> to vector<4x16xf32>
    %cst_35 = arith.constant dense<0.000000e+00> : vector<4x4xf32>
    %59 = tpu.matmul %58, %57, %cst_35 {dimension_numbers = #tpu.dot_dimension_numbers<[1], [0], [0], [1], [0, 0, 1, 1], [], []>} : vector<4x16xf32>, vector<16x4xf32>, vector<4x4xf32> -> vector<4x4xf32>
    %60 = arith.addf %52, %59 : vector<4x4xf32>
    %61 = vector.extract_strided_slice %5 {offsets = [6, 0], sizes = [4, 16], strides = [1, 1]} : vector<16x16xf32> to vector<4x16xf32>
    %cst_36 = arith.constant dense<0.000000e+00> : vector<4x4xf32>
    %62 = tpu.matmul %61, %57, %cst_36 {dimension_numbers = #tpu.dot_dimension_numbers<[1], [0], [0], [1], [0, 0, 1, 1], [], []>} : vector<4x16xf32>, vector<16x4xf32>, vector<4x4xf32> -> vector<4x4xf32>
    %63 = arith.addf %55, %62 : vector<4x4xf32>
    %c7 = arith.constant 7 : index
    %c0_37 = arith.constant 0 : index
    %c0_38 = arith.constant 0 : index
    %64 = vector.load %arg1[%c7, %c0_37, %c0_38] : memref<13x16x4xf32, #tpu.memory_space<vmem>>, vector<1x16x4xf32>
    %65 = vector.shape_cast %64 : vector<1x16x4xf32> to vector<16x4xf32>
    %66 = vector.extract_strided_slice %2 {offsets = [7, 0], sizes = [4, 16], strides = [1, 1]} : vector<16x16xf32> to vector<4x16xf32>
    %cst_39 = arith.constant dense<0.000000e+00> : vector<4x4xf32>
    %67 = tpu.matmul %66, %65, %cst_39 {dimension_numbers = #tpu.dot_dimension_numbers<[1], [0], [0], [1], [0, 0, 1, 1], [], []>} : vector<4x16xf32>, vector<16x4xf32>, vector<4x4xf32> -> vector<4x4xf32>
    %68 = arith.addf %60, %67 : vector<4x4xf32>
    %69 = vector.extract_strided_slice %5 {offsets = [7, 0], sizes = [4, 16], strides = [1, 1]} : vector<16x16xf32> to vector<4x16xf32>
    %cst_40 = arith.constant dense<0.000000e+00> : vector<4x4xf32>
    %70 = tpu.matmul %69, %65, %cst_40 {dimension_numbers = #tpu.dot_dimension_numbers<[1], [0], [0], [1], [0, 0, 1, 1], [], []>} : vector<4x16xf32>, vector<16x4xf32>, vector<4x4xf32> -> vector<4x4xf32>
    %71 = arith.addf %63, %70 : vector<4x4xf32>
    %c8 = arith.constant 8 : index
    %c0_41 = arith.constant 0 : index
    %c0_42 = arith.constant 0 : index
    %72 = vector.load %arg1[%c8, %c0_41, %c0_42] : memref<13x16x4xf32, #tpu.memory_space<vmem>>, vector<1x16x4xf32>
    %73 = vector.shape_cast %72 : vector<1x16x4xf32> to vector<16x4xf32>
    %74 = vector.extract_strided_slice %2 {offsets = [8, 0], sizes = [4, 16], strides = [1, 1]} : vector<16x16xf32> to vector<4x16xf32>
    %cst_43 = arith.constant dense<0.000000e+00> : vector<4x4xf32>
    %75 = tpu.matmul %74, %73, %cst_43 {dimension_numbers = #tpu.dot_dimension_numbers<[1], [0], [0], [1], [0, 0, 1, 1], [], []>} : vector<4x16xf32>, vector<16x4xf32>, vector<4x4xf32> -> vector<4x4xf32>
    %76 = arith.addf %68, %75 : vector<4x4xf32>
    %77 = vector.extract_strided_slice %5 {offsets = [8, 0], sizes = [4, 16], strides = [1, 1]} : vector<16x16xf32> to vector<4x16xf32>
    %cst_44 = arith.constant dense<0.000000e+00> : vector<4x4xf32>
    %78 = tpu.matmul %77, %73, %cst_44 {dimension_numbers = #tpu.dot_dimension_numbers<[1], [0], [0], [1], [0, 0, 1, 1], [], []>} : vector<4x16xf32>, vector<16x4xf32>, vector<4x4xf32> -> vector<4x4xf32>
    %79 = arith.addf %71, %78 : vector<4x4xf32>
    %c9 = arith.constant 9 : index
    %c0_45 = arith.constant 0 : index
    %c0_46 = arith.constant 0 : index
    %80 = vector.load %arg1[%c9, %c0_45, %c0_46] : memref<13x16x4xf32, #tpu.memory_space<vmem>>, vector<1x16x4xf32>
    %81 = vector.shape_cast %80 : vector<1x16x4xf32> to vector<16x4xf32>
    %82 = vector.extract_strided_slice %2 {offsets = [9, 0], sizes = [4, 16], strides = [1, 1]} : vector<16x16xf32> to vector<4x16xf32>
    %cst_47 = arith.constant dense<0.000000e+00> : vector<4x4xf32>
    %83 = tpu.matmul %82, %81, %cst_47 {dimension_numbers = #tpu.dot_dimension_numbers<[1], [0], [0], [1], [0, 0, 1, 1], [], []>} : vector<4x16xf32>, vector<16x4xf32>, vector<4x4xf32> -> vector<4x4xf32>
    %84 = arith.addf %76, %83 : vector<4x4xf32>
    %85 = vector.extract_strided_slice %5 {offsets = [9, 0], sizes = [4, 16], strides = [1, 1]} : vector<16x16xf32> to vector<4x16xf32>
    %cst_48 = arith.constant dense<0.000000e+00> : vector<4x4xf32>
    %86 = tpu.matmul %85, %81, %cst_48 {dimension_numbers = #tpu.dot_dimension_numbers<[1], [0], [0], [1], [0, 0, 1, 1], [], []>} : vector<4x16xf32>, vector<16x4xf32>, vector<4x4xf32> -> vector<4x4xf32>
    %87 = arith.addf %79, %86 : vector<4x4xf32>
    %c10 = arith.constant 10 : index
    %c0_49 = arith.constant 0 : index
    %c0_50 = arith.constant 0 : index
    %88 = vector.load %arg1[%c10, %c0_49, %c0_50] : memref<13x16x4xf32, #tpu.memory_space<vmem>>, vector<1x16x4xf32>
    %89 = vector.shape_cast %88 : vector<1x16x4xf32> to vector<16x4xf32>
    %90 = vector.extract_strided_slice %2 {offsets = [10, 0], sizes = [4, 16], strides = [1, 1]} : vector<16x16xf32> to vector<4x16xf32>
    %cst_51 = arith.constant dense<0.000000e+00> : vector<4x4xf32>
    %91 = tpu.matmul %90, %89, %cst_51 {dimension_numbers = #tpu.dot_dimension_numbers<[1], [0], [0], [1], [0, 0, 1, 1], [], []>} : vector<4x16xf32>, vector<16x4xf32>, vector<4x4xf32> -> vector<4x4xf32>
    %92 = arith.addf %84, %91 : vector<4x4xf32>
    %93 = vector.extract_strided_slice %5 {offsets = [10, 0], sizes = [4, 16], strides = [1, 1]} : vector<16x16xf32> to vector<4x16xf32>
    %cst_52 = arith.constant dense<0.000000e+00> : vector<4x4xf32>
    %94 = tpu.matmul %93, %89, %cst_52 {dimension_numbers = #tpu.dot_dimension_numbers<[1], [0], [0], [1], [0, 0, 1, 1], [], []>} : vector<4x16xf32>, vector<16x4xf32>, vector<4x4xf32> -> vector<4x4xf32>
    %95 = arith.addf %87, %94 : vector<4x4xf32>
    %c11 = arith.constant 11 : index
    %c0_53 = arith.constant 0 : index
    %c0_54 = arith.constant 0 : index
    %96 = vector.load %arg1[%c11, %c0_53, %c0_54] : memref<13x16x4xf32, #tpu.memory_space<vmem>>, vector<1x16x4xf32>
    %97 = vector.shape_cast %96 : vector<1x16x4xf32> to vector<16x4xf32>
    %98 = vector.extract_strided_slice %2 {offsets = [11, 0], sizes = [4, 16], strides = [1, 1]} : vector<16x16xf32> to vector<4x16xf32>
    %cst_55 = arith.constant dense<0.000000e+00> : vector<4x4xf32>
    %99 = tpu.matmul %98, %97, %cst_55 {dimension_numbers = #tpu.dot_dimension_numbers<[1], [0], [0], [1], [0, 0, 1, 1], [], []>} : vector<4x16xf32>, vector<16x4xf32>, vector<4x4xf32> -> vector<4x4xf32>
    %100 = arith.addf %92, %99 : vector<4x4xf32>
    %101 = vector.extract_strided_slice %5 {offsets = [11, 0], sizes = [4, 16], strides = [1, 1]} : vector<16x16xf32> to vector<4x16xf32>
    %cst_56 = arith.constant dense<0.000000e+00> : vector<4x4xf32>
    %102 = tpu.matmul %101, %97, %cst_56 {dimension_numbers = #tpu.dot_dimension_numbers<[1], [0], [0], [1], [0, 0, 1, 1], [], []>} : vector<4x16xf32>, vector<16x4xf32>, vector<4x4xf32> -> vector<4x4xf32>
    %103 = arith.addf %95, %102 : vector<4x4xf32>
    %c12 = arith.constant 12 : index
    %c0_57 = arith.constant 0 : index
    %c0_58 = arith.constant 0 : index
    %104 = vector.load %arg1[%c12, %c0_57, %c0_58] : memref<13x16x4xf32, #tpu.memory_space<vmem>>, vector<1x16x4xf32>
    %105 = vector.shape_cast %104 : vector<1x16x4xf32> to vector<16x4xf32>
    %106 = vector.extract_strided_slice %2 {offsets = [12, 0], sizes = [4, 16], strides = [1, 1]} : vector<16x16xf32> to vector<4x16xf32>
    %cst_59 = arith.constant dense<0.000000e+00> : vector<4x4xf32>
    %107 = tpu.matmul %106, %105, %cst_59 {dimension_numbers = #tpu.dot_dimension_numbers<[1], [0], [0], [1], [0, 0, 1, 1], [], []>} : vector<4x16xf32>, vector<16x4xf32>, vector<4x4xf32> -> vector<4x4xf32>
    %108 = arith.addf %100, %107 : vector<4x4xf32>
    %109 = vector.extract_strided_slice %5 {offsets = [12, 0], sizes = [4, 16], strides = [1, 1]} : vector<16x16xf32> to vector<4x16xf32>
    %cst_60 = arith.constant dense<0.000000e+00> : vector<4x4xf32>
    %110 = tpu.matmul %109, %105, %cst_60 {dimension_numbers = #tpu.dot_dimension_numbers<[1], [0], [0], [1], [0, 0, 1, 1], [], []>} : vector<4x16xf32>, vector<16x4xf32>, vector<4x4xf32> -> vector<4x4xf32>
    %111 = arith.addf %103, %110 : vector<4x4xf32>
    %112 = arith.subf %108, %111 : vector<4x4xf32>
    %113 = arith.mulf %112, %112 : vector<4x4xf32>
    %114 = vector.shape_cast %113 : vector<4x4xf32> to vector<1x4x4xf32>
    %cst_61 = arith.constant dense<0.000000e+00> : vector<1xf32>
    %115 = vector.multi_reduction <add>, %114, %cst_61 [1, 2] : vector<1x4x4xf32> to vector<1xf32>
    %116 = vector.shape_cast %115 : vector<1xf32> to vector<1x1x1xf32>
    %117 = vector.extract %116[0, 0, 0] : f32 from vector<1x1x1xf32>
    %cst_62 = arith.constant 0.000000e+00 : f32
    %118 = arith.addf %cst_62, %117 : f32
    %119 = arith.mulf %108, %108 : vector<4x4xf32>
    %120 = vector.shape_cast %119 : vector<4x4xf32> to vector<1x4x4xf32>
    %cst_63 = arith.constant dense<0.000000e+00> : vector<1xf32>
    %121 = vector.multi_reduction <add>, %120, %cst_63 [1, 2] : vector<1x4x4xf32> to vector<1xf32>
    %122 = vector.shape_cast %121 : vector<1xf32> to vector<1x1x1xf32>
    %123 = vector.extract %122[0, 0, 0] : f32 from vector<1x1x1xf32>
    %cst_64 = arith.constant 0.000000e+00 : f32
    %124 = arith.addf %cst_64, %123 : f32
    %c0_65 = arith.constant 0 : index
    %c1_66 = arith.constant 1 : index
    %c0_67 = arith.constant 0 : index
    %c0_68 = arith.constant 0 : index
    %125 = vector.load %arg2[%c0_65, %c1_66, %c0_67, %c0_68] : memref<1x4x16x16xf32, #tpu.memory_space<vmem>>, vector<1x1x16x16xf32>
    %126 = vector.shape_cast %125 : vector<1x1x16x16xf32> to vector<16x16xf32>
    %127 = math.absf %126 : vector<16x16xf32>
    %c0_69 = arith.constant 0 : index
    %c1_70 = arith.constant 1 : index
    %c0_71 = arith.constant 0 : index
    %c0_72 = arith.constant 0 : index
    %128 = vector.load %arg3[%c0_69, %c1_70, %c0_71, %c0_72] : memref<1x4x16x16xf32, #tpu.memory_space<vmem>>, vector<1x1x16x16xf32>
    %129 = vector.shape_cast %128 : vector<1x1x16x16xf32> to vector<16x16xf32>
    %130 = math.absf %129 : vector<16x16xf32>
    %cst_73 = arith.constant 0.000000e+00 : f32
    %131 = vector.broadcast %cst_73 : f32 to vector<4x4xf32>
    %cst_74 = arith.constant 0.000000e+00 : f32
    %132 = vector.broadcast %cst_74 : f32 to vector<4x4xf32>
    %c0_75 = arith.constant 0 : index
    %c0_76 = arith.constant 0 : index
    %c0_77 = arith.constant 0 : index
    %133 = vector.load %arg1[%c0_75, %c0_76, %c0_77] : memref<13x16x4xf32, #tpu.memory_space<vmem>>, vector<1x16x4xf32>
    %134 = vector.shape_cast %133 : vector<1x16x4xf32> to vector<16x4xf32>
    %135 = vector.extract_strided_slice %127 {offsets = [0, 0], sizes = [4, 16], strides = [1, 1]} : vector<16x16xf32> to vector<4x16xf32>
    %cst_78 = arith.constant dense<0.000000e+00> : vector<4x4xf32>
    %136 = tpu.matmul %135, %134, %cst_78 {dimension_numbers = #tpu.dot_dimension_numbers<[1], [0], [0], [1], [0, 0, 1, 1], [], []>} : vector<4x16xf32>, vector<16x4xf32>, vector<4x4xf32> -> vector<4x4xf32>
    %137 = arith.addf %131, %136 : vector<4x4xf32>
    %138 = vector.extract_strided_slice %130 {offsets = [0, 0], sizes = [4, 16], strides = [1, 1]} : vector<16x16xf32> to vector<4x16xf32>
    %cst_79 = arith.constant dense<0.000000e+00> : vector<4x4xf32>
    %139 = tpu.matmul %138, %134, %cst_79 {dimension_numbers = #tpu.dot_dimension_numbers<[1], [0], [0], [1], [0, 0, 1, 1], [], []>} : vector<4x16xf32>, vector<16x4xf32>, vector<4x4xf32> -> vector<4x4xf32>
    %140 = arith.addf %132, %139 : vector<4x4xf32>
    %c1_80 = arith.constant 1 : index
    %c0_81 = arith.constant 0 : index
    %c0_82 = arith.constant 0 : index
    %141 = vector.load %arg1[%c1_80, %c0_81, %c0_82] : memref<13x16x4xf32, #tpu.memory_space<vmem>>, vector<1x16x4xf32>
    %142 = vector.shape_cast %141 : vector<1x16x4xf32> to vector<16x4xf32>
    %143 = vector.extract_strided_slice %127 {offsets = [1, 0], sizes = [4, 16], strides = [1, 1]} : vector<16x16xf32> to vector<4x16xf32>
    %cst_83 = arith.constant dense<0.000000e+00> : vector<4x4xf32>
    %144 = tpu.matmul %143, %142, %cst_83 {dimension_numbers = #tpu.dot_dimension_numbers<[1], [0], [0], [1], [0, 0, 1, 1], [], []>} : vector<4x16xf32>, vector<16x4xf32>, vector<4x4xf32> -> vector<4x4xf32>
    %145 = arith.addf %137, %144 : vector<4x4xf32>
    %146 = vector.extract_strided_slice %130 {offsets = [1, 0], sizes = [4, 16], strides = [1, 1]} : vector<16x16xf32> to vector<4x16xf32>
    %cst_84 = arith.constant dense<0.000000e+00> : vector<4x4xf32>
    %147 = tpu.matmul %146, %142, %cst_84 {dimension_numbers = #tpu.dot_dimension_numbers<[1], [0], [0], [1], [0, 0, 1, 1], [], []>} : vector<4x16xf32>, vector<16x4xf32>, vector<4x4xf32> -> vector<4x4xf32>
    %148 = arith.addf %140, %147 : vector<4x4xf32>
    %c2_85 = arith.constant 2 : index
    %c0_86 = arith.constant 0 : index
    %c0_87 = arith.constant 0 : index
    %149 = vector.load %arg1[%c2_85, %c0_86, %c0_87] : memref<13x16x4xf32, #tpu.memory_space<vmem>>, vector<1x16x4xf32>
    %150 = vector.shape_cast %149 : vector<1x16x4xf32> to vector<16x4xf32>
    %151 = vector.extract_strided_slice %127 {offsets = [2, 0], sizes = [4, 16], strides = [1, 1]} : vector<16x16xf32> to vector<4x16xf32>
    %cst_88 = arith.constant dense<0.000000e+00> : vector<4x4xf32>
    %152 = tpu.matmul %151, %150, %cst_88 {dimension_numbers = #tpu.dot_dimension_numbers<[1], [0], [0], [1], [0, 0, 1, 1], [], []>} : vector<4x16xf32>, vector<16x4xf32>, vector<4x4xf32> -> vector<4x4xf32>
    %153 = arith.addf %145, %152 : vector<4x4xf32>
    %154 = vector.extract_strided_slice %130 {offsets = [2, 0], sizes = [4, 16], strides = [1, 1]} : vector<16x16xf32> to vector<4x16xf32>
    %cst_89 = arith.constant dense<0.000000e+00> : vector<4x4xf32>
    %155 = tpu.matmul %154, %150, %cst_89 {dimension_numbers = #tpu.dot_dimension_numbers<[1], [0], [0], [1], [0, 0, 1, 1], [], []>} : vector<4x16xf32>, vector<16x4xf32>, vector<4x4xf32> -> vector<4x4xf32>
    %156 = arith.addf %148, %155 : vector<4x4xf32>
    %c3_90 = arith.constant 3 : index
    %c0_91 = arith.constant 0 : index
    %c0_92 = arith.constant 0 : index
    %157 = vector.load %arg1[%c3_90, %c0_91, %c0_92] : memref<13x16x4xf32, #tpu.memory_space<vmem>>, vector<1x16x4xf32>
    %158 = vector.shape_cast %157 : vector<1x16x4xf32> to vector<16x4xf32>
    %159 = vector.extract_strided_slice %127 {offsets = [3, 0], sizes = [4, 16], strides = [1, 1]} : vector<16x16xf32> to vector<4x16xf32>
    %cst_93 = arith.constant dense<0.000000e+00> : vector<4x4xf32>
    %160 = tpu.matmul %159, %158, %cst_93 {dimension_numbers = #tpu.dot_dimension_numbers<[1], [0], [0], [1], [0, 0, 1, 1], [], []>} : vector<4x16xf32>, vector<16x4xf32>, vector<4x4xf32> -> vector<4x4xf32>
    %161 = arith.addf %153, %160 : vector<4x4xf32>
    %162 = vector.extract_strided_slice %130 {offsets = [3, 0], sizes = [4, 16], strides = [1, 1]} : vector<16x16xf32> to vector<4x16xf32>
    %cst_94 = arith.constant dense<0.000000e+00> : vector<4x4xf32>
    %163 = tpu.matmul %162, %158, %cst_94 {dimension_numbers = #tpu.dot_dimension_numbers<[1], [0], [0], [1], [0, 0, 1, 1], [], []>} : vector<4x16xf32>, vector<16x4xf32>, vector<4x4xf32> -> vector<4x4xf32>
    %164 = arith.addf %156, %163 : vector<4x4xf32>
    %c4_95 = arith.constant 4 : index
    %c0_96 = arith.constant 0 : index
    %c0_97 = arith.constant 0 : index
    %165 = vector.load %arg1[%c4_95, %c0_96, %c0_97] : memref<13x16x4xf32, #tpu.memory_space<vmem>>, vector<1x16x4xf32>
    %166 = vector.shape_cast %165 : vector<1x16x4xf32> to vector<16x4xf32>
    %167 = vector.extract_strided_slice %127 {offsets = [4, 0], sizes = [4, 16], strides = [1, 1]} : vector<16x16xf32> to vector<4x16xf32>
    %cst_98 = arith.constant dense<0.000000e+00> : vector<4x4xf32>
    %168 = tpu.matmul %167, %166, %cst_98 {dimension_numbers = #tpu.dot_dimension_numbers<[1], [0], [0], [1], [0, 0, 1, 1], [], []>} : vector<4x16xf32>, vector<16x4xf32>, vector<4x4xf32> -> vector<4x4xf32>
    %169 = arith.addf %161, %168 : vector<4x4xf32>
    %170 = vector.extract_strided_slice %130 {offsets = [4, 0], sizes = [4, 16], strides = [1, 1]} : vector<16x16xf32> to vector<4x16xf32>
    %cst_99 = arith.constant dense<0.000000e+00> : vector<4x4xf32>
    %171 = tpu.matmul %170, %166, %cst_99 {dimension_numbers = #tpu.dot_dimension_numbers<[1], [0], [0], [1], [0, 0, 1, 1], [], []>} : vector<4x16xf32>, vector<16x4xf32>, vector<4x4xf32> -> vector<4x4xf32>
    %172 = arith.addf %164, %171 : vector<4x4xf32>
    %c5_100 = arith.constant 5 : index
    %c0_101 = arith.constant 0 : index
    %c0_102 = arith.constant 0 : index
    %173 = vector.load %arg1[%c5_100, %c0_101, %c0_102] : memref<13x16x4xf32, #tpu.memory_space<vmem>>, vector<1x16x4xf32>
    %174 = vector.shape_cast %173 : vector<1x16x4xf32> to vector<16x4xf32>
    %175 = vector.extract_strided_slice %127 {offsets = [5, 0], sizes = [4, 16], strides = [1, 1]} : vector<16x16xf32> to vector<4x16xf32>
    %cst_103 = arith.constant dense<0.000000e+00> : vector<4x4xf32>
    %176 = tpu.matmul %175, %174, %cst_103 {dimension_numbers = #tpu.dot_dimension_numbers<[1], [0], [0], [1], [0, 0, 1, 1], [], []>} : vector<4x16xf32>, vector<16x4xf32>, vector<4x4xf32> -> vector<4x4xf32>
    %177 = arith.addf %169, %176 : vector<4x4xf32>
    %178 = vector.extract_strided_slice %130 {offsets = [5, 0], sizes = [4, 16], strides = [1, 1]} : vector<16x16xf32> to vector<4x16xf32>
    %cst_104 = arith.constant dense<0.000000e+00> : vector<4x4xf32>
    %179 = tpu.matmul %178, %174, %cst_104 {dimension_numbers = #tpu.dot_dimension_numbers<[1], [0], [0], [1], [0, 0, 1, 1], [], []>} : vector<4x16xf32>, vector<16x4xf32>, vector<4x4xf32> -> vector<4x4xf32>
    %180 = arith.addf %172, %179 : vector<4x4xf32>
    %c6_105 = arith.constant 6 : index
    %c0_106 = arith.constant 0 : index
    %c0_107 = arith.constant 0 : index
    %181 = vector.load %arg1[%c6_105, %c0_106, %c0_107] : memref<13x16x4xf32, #tpu.memory_space<vmem>>, vector<1x16x4xf32>
    %182 = vector.shape_cast %181 : vector<1x16x4xf32> to vector<16x4xf32>
    %183 = vector.extract_strided_slice %127 {offsets = [6, 0], sizes = [4, 16], strides = [1, 1]} : vector<16x16xf32> to vector<4x16xf32>
    %cst_108 = arith.constant dense<0.000000e+00> : vector<4x4xf32>
    %184 = tpu.matmul %183, %182, %cst_108 {dimension_numbers = #tpu.dot_dimension_numbers<[1], [0], [0], [1], [0, 0, 1, 1], [], []>} : vector<4x16xf32>, vector<16x4xf32>, vector<4x4xf32> -> vector<4x4xf32>
    %185 = arith.addf %177, %184 : vector<4x4xf32>
    %186 = vector.extract_strided_slice %130 {offsets = [6, 0], sizes = [4, 16], strides = [1, 1]} : vector<16x16xf32> to vector<4x16xf32>
    %cst_109 = arith.constant dense<0.000000e+00> : vector<4x4xf32>
    %187 = tpu.matmul %186, %182, %cst_109 {dimension_numbers = #tpu.dot_dimension_numbers<[1], [0], [0], [1], [0, 0, 1, 1], [], []>} : vector<4x16xf32>, vector<16x4xf32>, vector<4x4xf32> -> vector<4x4xf32>
    %188 = arith.addf %180, %187 : vector<4x4xf32>
    %c7_110 = arith.constant 7 : index
    %c0_111 = arith.constant 0 : index
    %c0_112 = arith.constant 0 : index
    %189 = vector.load %arg1[%c7_110, %c0_111, %c0_112] : memref<13x16x4xf32, #tpu.memory_space<vmem>>, vector<1x16x4xf32>
    %190 = vector.shape_cast %189 : vector<1x16x4xf32> to vector<16x4xf32>
    %191 = vector.extract_strided_slice %127 {offsets = [7, 0], sizes = [4, 16], strides = [1, 1]} : vector<16x16xf32> to vector<4x16xf32>
    %cst_113 = arith.constant dense<0.000000e+00> : vector<4x4xf32>
    %192 = tpu.matmul %191, %190, %cst_113 {dimension_numbers = #tpu.dot_dimension_numbers<[1], [0], [0], [1], [0, 0, 1, 1], [], []>} : vector<4x16xf32>, vector<16x4xf32>, vector<4x4xf32> -> vector<4x4xf32>
    %193 = arith.addf %185, %192 : vector<4x4xf32>
    %194 = vector.extract_strided_slice %130 {offsets = [7, 0], sizes = [4, 16], strides = [1, 1]} : vector<16x16xf32> to vector<4x16xf32>
    %cst_114 = arith.constant dense<0.000000e+00> : vector<4x4xf32>
    %195 = tpu.matmul %194, %190, %cst_114 {dimension_numbers = #tpu.dot_dimension_numbers<[1], [0], [0], [1], [0, 0, 1, 1], [], []>} : vector<4x16xf32>, vector<16x4xf32>, vector<4x4xf32> -> vector<4x4xf32>
    %196 = arith.addf %188, %195 : vector<4x4xf32>
    %c8_115 = arith.constant 8 : index
    %c0_116 = arith.constant 0 : index
    %c0_117 = arith.constant 0 : index
    %197 = vector.load %arg1[%c8_115, %c0_116, %c0_117] : memref<13x16x4xf32, #tpu.memory_space<vmem>>, vector<1x16x4xf32>
    %198 = vector.shape_cast %197 : vector<1x16x4xf32> to vector<16x4xf32>
    %199 = vector.extract_strided_slice %127 {offsets = [8, 0], sizes = [4, 16], strides = [1, 1]} : vector<16x16xf32> to vector<4x16xf32>
    %cst_118 = arith.constant dense<0.000000e+00> : vector<4x4xf32>
    %200 = tpu.matmul %199, %198, %cst_118 {dimension_numbers = #tpu.dot_dimension_numbers<[1], [0], [0], [1], [0, 0, 1, 1], [], []>} : vector<4x16xf32>, vector<16x4xf32>, vector<4x4xf32> -> vector<4x4xf32>
    %201 = arith.addf %193, %200 : vector<4x4xf32>
    %202 = vector.extract_strided_slice %130 {offsets = [8, 0], sizes = [4, 16], strides = [1, 1]} : vector<16x16xf32> to vector<4x16xf32>
    %cst_119 = arith.constant dense<0.000000e+00> : vector<4x4xf32>
    %203 = tpu.matmul %202, %198, %cst_119 {dimension_numbers = #tpu.dot_dimension_numbers<[1], [0], [0], [1], [0, 0, 1, 1], [], []>} : vector<4x16xf32>, vector<16x4xf32>, vector<4x4xf32> -> vector<4x4xf32>
    %204 = arith.addf %196, %203 : vector<4x4xf32>
    %c9_120 = arith.constant 9 : index
    %c0_121 = arith.constant 0 : index
    %c0_122 = arith.constant 0 : index
    %205 = vector.load %arg1[%c9_120, %c0_121, %c0_122] : memref<13x16x4xf32, #tpu.memory_space<vmem>>, vector<1x16x4xf32>
    %206 = vector.shape_cast %205 : vector<1x16x4xf32> to vector<16x4xf32>
    %207 = vector.extract_strided_slice %127 {offsets = [9, 0], sizes = [4, 16], strides = [1, 1]} : vector<16x16xf32> to vector<4x16xf32>
    %cst_123 = arith.constant dense<0.000000e+00> : vector<4x4xf32>
    %208 = tpu.matmul %207, %206, %cst_123 {dimension_numbers = #tpu.dot_dimension_numbers<[1], [0], [0], [1], [0, 0, 1, 1], [], []>} : vector<4x16xf32>, vector<16x4xf32>, vector<4x4xf32> -> vector<4x4xf32>
    %209 = arith.addf %201, %208 : vector<4x4xf32>
    %210 = vector.extract_strided_slice %130 {offsets = [9, 0], sizes = [4, 16], strides = [1, 1]} : vector<16x16xf32> to vector<4x16xf32>
    %cst_124 = arith.constant dense<0.000000e+00> : vector<4x4xf32>
    %211 = tpu.matmul %210, %206, %cst_124 {dimension_numbers = #tpu.dot_dimension_numbers<[1], [0], [0], [1], [0, 0, 1, 1], [], []>} : vector<4x16xf32>, vector<16x4xf32>, vector<4x4xf32> -> vector<4x4xf32>
    %212 = arith.addf %204, %211 : vector<4x4xf32>
    %c10_125 = arith.constant 10 : index
    %c0_126 = arith.constant 0 : index
    %c0_127 = arith.constant 0 : index
    %213 = vector.load %arg1[%c10_125, %c0_126, %c0_127] : memref<13x16x4xf32, #tpu.memory_space<vmem>>, vector<1x16x4xf32>
    %214 = vector.shape_cast %213 : vector<1x16x4xf32> to vector<16x4xf32>
    %215 = vector.extract_strided_slice %127 {offsets = [10, 0], sizes = [4, 16], strides = [1, 1]} : vector<16x16xf32> to vector<4x16xf32>
    %cst_128 = arith.constant dense<0.000000e+00> : vector<4x4xf32>
    %216 = tpu.matmul %215, %214, %cst_128 {dimension_numbers = #tpu.dot_dimension_numbers<[1], [0], [0], [1], [0, 0, 1, 1], [], []>} : vector<4x16xf32>, vector<16x4xf32>, vector<4x4xf32> -> vector<4x4xf32>
    %217 = arith.addf %209, %216 : vector<4x4xf32>
    %218 = vector.extract_strided_slice %130 {offsets = [10, 0], sizes = [4, 16], strides = [1, 1]} : vector<16x16xf32> to vector<4x16xf32>
    %cst_129 = arith.constant dense<0.000000e+00> : vector<4x4xf32>
    %219 = tpu.matmul %218, %214, %cst_129 {dimension_numbers = #tpu.dot_dimension_numbers<[1], [0], [0], [1], [0, 0, 1, 1], [], []>} : vector<4x16xf32>, vector<16x4xf32>, vector<4x4xf32> -> vector<4x4xf32>
    %220 = arith.addf %212, %219 : vector<4x4xf32>
    %c11_130 = arith.constant 11 : index
    %c0_131 = arith.constant 0 : index
    %c0_132 = arith.constant 0 : index
    %221 = vector.load %arg1[%c11_130, %c0_131, %c0_132] : memref<13x16x4xf32, #tpu.memory_space<vmem>>, vector<1x16x4xf32>
    %222 = vector.shape_cast %221 : vector<1x16x4xf32> to vector<16x4xf32>
    %223 = vector.extract_strided_slice %127 {offsets = [11, 0], sizes = [4, 16], strides = [1, 1]} : vector<16x16xf32> to vector<4x16xf32>
    %cst_133 = arith.constant dense<0.000000e+00> : vector<4x4xf32>
    %224 = tpu.matmul %223, %222, %cst_133 {dimension_numbers = #tpu.dot_dimension_numbers<[1], [0], [0], [1], [0, 0, 1, 1], [], []>} : vector<4x16xf32>, vector<16x4xf32>, vector<4x4xf32> -> vector<4x4xf32>
    %225 = arith.addf %217, %224 : vector<4x4xf32>
    %226 = vector.extract_strided_slice %130 {offsets = [11, 0], sizes = [4, 16], strides = [1, 1]} : vector<16x16xf32> to vector<4x16xf32>
    %cst_134 = arith.constant dense<0.000000e+00> : vector<4x4xf32>
    %227 = tpu.matmul %226, %222, %cst_134 {dimension_numbers = #tpu.dot_dimension_numbers<[1], [0], [0], [1], [0, 0, 1, 1], [], []>} : vector<4x16xf32>, vector<16x4xf32>, vector<4x4xf32> -> vector<4x4xf32>
    %228 = arith.addf %220, %227 : vector<4x4xf32>
    %c12_135 = arith.constant 12 : index
    %c0_136 = arith.constant 0 : index
    %c0_137 = arith.constant 0 : index
    %229 = vector.load %arg1[%c12_135, %c0_136, %c0_137] : memref<13x16x4xf32, #tpu.memory_space<vmem>>, vector<1x16x4xf32>
    %230 = vector.shape_cast %229 : vector<1x16x4xf32> to vector<16x4xf32>
    %231 = vector.extract_strided_slice %127 {offsets = [12, 0], sizes = [4, 16], strides = [1, 1]} : vector<16x16xf32> to vector<4x16xf32>
    %cst_138 = arith.constant dense<0.000000e+00> : vector<4x4xf32>
    %232 = tpu.matmul %231, %230, %cst_138 {dimension_numbers = #tpu.dot_dimension_numbers<[1], [0], [0], [1], [0, 0, 1, 1], [], []>} : vector<4x16xf32>, vector<16x4xf32>, vector<4x4xf32> -> vector<4x4xf32>
    %233 = arith.addf %225, %232 : vector<4x4xf32>
    %234 = vector.extract_strided_slice %130 {offsets = [12, 0], sizes = [4, 16], strides = [1, 1]} : vector<16x16xf32> to vector<4x16xf32>
    %cst_139 = arith.constant dense<0.000000e+00> : vector<4x4xf32>
    %235 = tpu.matmul %234, %230, %cst_139 {dimension_numbers = #tpu.dot_dimension_numbers<[1], [0], [0], [1], [0, 0, 1, 1], [], []>} : vector<4x16xf32>, vector<16x4xf32>, vector<4x4xf32> -> vector<4x4xf32>
    %236 = arith.addf %228, %235 : vector<4x4xf32>
    %237 = arith.subf %233, %236 : vector<4x4xf32>
    %238 = arith.mulf %237, %237 : vector<4x4xf32>
    %239 = vector.shape_cast %238 : vector<4x4xf32> to vector<1x4x4xf32>
    %cst_140 = arith.constant dense<0.000000e+00> : vector<1xf32>
    %240 = vector.multi_reduction <add>, %239, %cst_140 [1, 2] : vector<1x4x4xf32> to vector<1xf32>
    %241 = vector.shape_cast %240 : vector<1xf32> to vector<1x1x1xf32>
    %242 = vector.extract %241[0, 0, 0] : f32 from vector<1x1x1xf32>
    %243 = arith.addf %118, %242 : f32
    %244 = arith.mulf %233, %233 : vector<4x4xf32>
    %245 = vector.shape_cast %244 : vector<4x4xf32> to vector<1x4x4xf32>
    %cst_141 = arith.constant dense<0.000000e+00> : vector<1xf32>
    %246 = vector.multi_reduction <add>, %245, %cst_141 [1, 2] : vector<1x4x4xf32> to vector<1xf32>
    %247 = vector.shape_cast %246 : vector<1xf32> to vector<1x1x1xf32>
    %248 = vector.extract %247[0, 0, 0] : f32 from vector<1x1x1xf32>
    %249 = arith.addf %124, %248 : f32
    %c0_142 = arith.constant 0 : index
    %c2_143 = arith.constant 2 : index
    %c0_144 = arith.constant 0 : index
    %c0_145 = arith.constant 0 : index
    %250 = vector.load %arg2[%c0_142, %c2_143, %c0_144, %c0_145] : memref<1x4x16x16xf32, #tpu.memory_space<vmem>>, vector<1x1x16x16xf32>
    %251 = vector.shape_cast %250 : vector<1x1x16x16xf32> to vector<16x16xf32>
    %252 = math.absf %251 : vector<16x16xf32>
    %c0_146 = arith.constant 0 : index
    %c2_147 = arith.constant 2 : index
    %c0_148 = arith.constant 0 : index
    %c0_149 = arith.constant 0 : index
    %253 = vector.load %arg3[%c0_146, %c2_147, %c0_148, %c0_149] : memref<1x4x16x16xf32, #tpu.memory_space<vmem>>, vector<1x1x16x16xf32>
    %254 = vector.shape_cast %253 : vector<1x1x16x16xf32> to vector<16x16xf32>
    %255 = math.absf %254 : vector<16x16xf32>
    %cst_150 = arith.constant 0.000000e+00 : f32
    %256 = vector.broadcast %cst_150 : f32 to vector<4x4xf32>
    %cst_151 = arith.constant 0.000000e+00 : f32
    %257 = vector.broadcast %cst_151 : f32 to vector<4x4xf32>
    %c0_152 = arith.constant 0 : index
    %c0_153 = arith.constant 0 : index
    %c0_154 = arith.constant 0 : index
    %258 = vector.load %arg1[%c0_152, %c0_153, %c0_154] : memref<13x16x4xf32, #tpu.memory_space<vmem>>, vector<1x16x4xf32>
    %259 = vector.shape_cast %258 : vector<1x16x4xf32> to vector<16x4xf32>
    %260 = vector.extract_strided_slice %252 {offsets = [0, 0], sizes = [4, 16], strides = [1, 1]} : vector<16x16xf32> to vector<4x16xf32>
    %cst_155 = arith.constant dense<0.000000e+00> : vector<4x4xf32>
    %261 = tpu.matmul %260, %259, %cst_155 {dimension_numbers = #tpu.dot_dimension_numbers<[1], [0], [0], [1], [0, 0, 1, 1], [], []>} : vector<4x16xf32>, vector<16x4xf32>, vector<4x4xf32> -> vector<4x4xf32>
    %262 = arith.addf %256, %261 : vector<4x4xf32>
    %263 = vector.extract_strided_slice %255 {offsets = [0, 0], sizes = [4, 16], strides = [1, 1]} : vector<16x16xf32> to vector<4x16xf32>
    %cst_156 = arith.constant dense<0.000000e+00> : vector<4x4xf32>
    %264 = tpu.matmul %263, %259, %cst_156 {dimension_numbers = #tpu.dot_dimension_numbers<[1], [0], [0], [1], [0, 0, 1, 1], [], []>} : vector<4x16xf32>, vector<16x4xf32>, vector<4x4xf32> -> vector<4x4xf32>
    %265 = arith.addf %257, %264 : vector<4x4xf32>
    %c1_157 = arith.constant 1 : index
    %c0_158 = arith.constant 0 : index
    %c0_159 = arith.constant 0 : index
    %266 = vector.load %arg1[%c1_157, %c0_158, %c0_159] : memref<13x16x4xf32, #tpu.memory_space<vmem>>, vector<1x16x4xf32>
    %267 = vector.shape_cast %266 : vector<1x16x4xf32> to vector<16x4xf32>
    %268 = vector.extract_strided_slice %252 {offsets = [1, 0], sizes = [4, 16], strides = [1, 1]} : vector<16x16xf32> to vector<4x16xf32>
    %cst_160 = arith.constant dense<0.000000e+00> : vector<4x4xf32>
    %269 = tpu.matmul %268, %267, %cst_160 {dimension_numbers = #tpu.dot_dimension_numbers<[1], [0], [0], [1], [0, 0, 1, 1], [], []>} : vector<4x16xf32>, vector<16x4xf32>, vector<4x4xf32> -> vector<4x4xf32>
    %270 = arith.addf %262, %269 : vector<4x4xf32>
    %271 = vector.extract_strided_slice %255 {offsets = [1, 0], sizes = [4, 16], strides = [1, 1]} : vector<16x16xf32> to vector<4x16xf32>
    %cst_161 = arith.constant dense<0.000000e+00> : vector<4x4xf32>
    %272 = tpu.matmul %271, %267, %cst_161 {dimension_numbers = #tpu.dot_dimension_numbers<[1], [0], [0], [1], [0, 0, 1, 1], [], []>} : vector<4x16xf32>, vector<16x4xf32>, vector<4x4xf32> -> vector<4x4xf32>
    %273 = arith.addf %265, %272 : vector<4x4xf32>
    %c2_162 = arith.constant 2 : index
    %c0_163 = arith.constant 0 : index
    %c0_164 = arith.constant 0 : index
    %274 = vector.load %arg1[%c2_162, %c0_163, %c0_164] : memref<13x16x4xf32, #tpu.memory_space<vmem>>, vector<1x16x4xf32>
    %275 = vector.shape_cast %274 : vector<1x16x4xf32> to vector<16x4xf32>
    %276 = vector.extract_strided_slice %252 {offsets = [2, 0], sizes = [4, 16], strides = [1, 1]} : vector<16x16xf32> to vector<4x16xf32>
    %cst_165 = arith.constant dense<0.000000e+00> : vector<4x4xf32>
    %277 = tpu.matmul %276, %275, %cst_165 {dimension_numbers = #tpu.dot_dimension_numbers<[1], [0], [0], [1], [0, 0, 1, 1], [], []>} : vector<4x16xf32>, vector<16x4xf32>, vector<4x4xf32> -> vector<4x4xf32>
    %278 = arith.addf %270, %277 : vector<4x4xf32>
    %279 = vector.extract_strided_slice %255 {offsets = [2, 0], sizes = [4, 16], strides = [1, 1]} : vector<16x16xf32> to vector<4x16xf32>
    %cst_166 = arith.constant dense<0.000000e+00> : vector<4x4xf32>
    %280 = tpu.matmul %279, %275, %cst_166 {dimension_numbers = #tpu.dot_dimension_numbers<[1], [0], [0], [1], [0, 0, 1, 1], [], []>} : vector<4x16xf32>, vector<16x4xf32>, vector<4x4xf32> -> vector<4x4xf32>
    %281 = arith.addf %273, %280 : vector<4x4xf32>
    %c3_167 = arith.constant 3 : index
    %c0_168 = arith.constant 0 : index
    %c0_169 = arith.constant 0 : index
    %282 = vector.load %arg1[%c3_167, %c0_168, %c0_169] : memref<13x16x4xf32, #tpu.memory_space<vmem>>, vector<1x16x4xf32>
    %283 = vector.shape_cast %282 : vector<1x16x4xf32> to vector<16x4xf32>
    %284 = vector.extract_strided_slice %252 {offsets = [3, 0], sizes = [4, 16], strides = [1, 1]} : vector<16x16xf32> to vector<4x16xf32>
    %cst_170 = arith.constant dense<0.000000e+00> : vector<4x4xf32>
    %285 = tpu.matmul %284, %283, %cst_170 {dimension_numbers = #tpu.dot_dimension_numbers<[1], [0], [0], [1], [0, 0, 1, 1], [], []>} : vector<4x16xf32>, vector<16x4xf32>, vector<4x4xf32> -> vector<4x4xf32>
    %286 = arith.addf %278, %285 : vector<4x4xf32>
    %287 = vector.extract_strided_slice %255 {offsets = [3, 0], sizes = [4, 16], strides = [1, 1]} : vector<16x16xf32> to vector<4x16xf32>
    %cst_171 = arith.constant dense<0.000000e+00> : vector<4x4xf32>
    %288 = tpu.matmul %287, %283, %cst_171 {dimension_numbers = #tpu.dot_dimension_numbers<[1], [0], [0], [1], [0, 0, 1, 1], [], []>} : vector<4x16xf32>, vector<16x4xf32>, vector<4x4xf32> -> vector<4x4xf32>
    %289 = arith.addf %281, %288 : vector<4x4xf32>
    %c4_172 = arith.constant 4 : index
    %c0_173 = arith.constant 0 : index
    %c0_174 = arith.constant 0 : index
    %290 = vector.load %arg1[%c4_172, %c0_173, %c0_174] : memref<13x16x4xf32, #tpu.memory_space<vmem>>, vector<1x16x4xf32>
    %291 = vector.shape_cast %290 : vector<1x16x4xf32> to vector<16x4xf32>
    %292 = vector.extract_strided_slice %252 {offsets = [4, 0], sizes = [4, 16], strides = [1, 1]} : vector<16x16xf32> to vector<4x16xf32>
    %cst_175 = arith.constant dense<0.000000e+00> : vector<4x4xf32>
    %293 = tpu.matmul %292, %291, %cst_175 {dimension_numbers = #tpu.dot_dimension_numbers<[1], [0], [0], [1], [0, 0, 1, 1], [], []>} : vector<4x16xf32>, vector<16x4xf32>, vector<4x4xf32> -> vector<4x4xf32>
    %294 = arith.addf %286, %293 : vector<4x4xf32>
    %295 = vector.extract_strided_slice %255 {offsets = [4, 0], sizes = [4, 16], strides = [1, 1]} : vector<16x16xf32> to vector<4x16xf32>
    %cst_176 = arith.constant dense<0.000000e+00> : vector<4x4xf32>
    %296 = tpu.matmul %295, %291, %cst_176 {dimension_numbers = #tpu.dot_dimension_numbers<[1], [0], [0], [1], [0, 0, 1, 1], [], []>} : vector<4x16xf32>, vector<16x4xf32>, vector<4x4xf32> -> vector<4x4xf32>
    %297 = arith.addf %289, %296 : vector<4x4xf32>
    %c5_177 = arith.constant 5 : index
    %c0_178 = arith.constant 0 : index
    %c0_179 = arith.constant 0 : index
    %298 = vector.load %arg1[%c5_177, %c0_178, %c0_179] : memref<13x16x4xf32, #tpu.memory_space<vmem>>, vector<1x16x4xf32>
    %299 = vector.shape_cast %298 : vector<1x16x4xf32> to vector<16x4xf32>
    %300 = vector.extract_strided_slice %252 {offsets = [5, 0], sizes = [4, 16], strides = [1, 1]} : vector<16x16xf32> to vector<4x16xf32>
    %cst_180 = arith.constant dense<0.000000e+00> : vector<4x4xf32>
    %301 = tpu.matmul %300, %299, %cst_180 {dimension_numbers = #tpu.dot_dimension_numbers<[1], [0], [0], [1], [0, 0, 1, 1], [], []>} : vector<4x16xf32>, vector<16x4xf32>, vector<4x4xf32> -> vector<4x4xf32>
    %302 = arith.addf %294, %301 : vector<4x4xf32>
    %303 = vector.extract_strided_slice %255 {offsets = [5, 0], sizes = [4, 16], strides = [1, 1]} : vector<16x16xf32> to vector<4x16xf32>
    %cst_181 = arith.constant dense<0.000000e+00> : vector<4x4xf32>
    %304 = tpu.matmul %303, %299, %cst_181 {dimension_numbers = #tpu.dot_dimension_numbers<[1], [0], [0], [1], [0, 0, 1, 1], [], []>} : vector<4x16xf32>, vector<16x4xf32>, vector<4x4xf32> -> vector<4x4xf32>
    %305 = arith.addf %297, %304 : vector<4x4xf32>
    %c6_182 = arith.constant 6 : index
    %c0_183 = arith.constant 0 : index
    %c0_184 = arith.constant 0 : index
    %306 = vector.load %arg1[%c6_182, %c0_183, %c0_184] : memref<13x16x4xf32, #tpu.memory_space<vmem>>, vector<1x16x4xf32>
    %307 = vector.shape_cast %306 : vector<1x16x4xf32> to vector<16x4xf32>
    %308 = vector.extract_strided_slice %252 {offsets = [6, 0], sizes = [4, 16], strides = [1, 1]} : vector<16x16xf32> to vector<4x16xf32>
    %cst_185 = arith.constant dense<0.000000e+00> : vector<4x4xf32>
    %309 = tpu.matmul %308, %307, %cst_185 {dimension_numbers = #tpu.dot_dimension_numbers<[1], [0], [0], [1], [0, 0, 1, 1], [], []>} : vector<4x16xf32>, vector<16x4xf32>, vector<4x4xf32> -> vector<4x4xf32>
    %310 = arith.addf %302, %309 : vector<4x4xf32>
    %311 = vector.extract_strided_slice %255 {offsets = [6, 0], sizes = [4, 16], strides = [1, 1]} : vector<16x16xf32> to vector<4x16xf32>
    %cst_186 = arith.constant dense<0.000000e+00> : vector<4x4xf32>
    %312 = tpu.matmul %311, %307, %cst_186 {dimension_numbers = #tpu.dot_dimension_numbers<[1], [0], [0], [1], [0, 0, 1, 1], [], []>} : vector<4x16xf32>, vector<16x4xf32>, vector<4x4xf32> -> vector<4x4xf32>
    %313 = arith.addf %305, %312 : vector<4x4xf32>
    %c7_187 = arith.constant 7 : index
    %c0_188 = arith.constant 0 : index
    %c0_189 = arith.constant 0 : index
    %314 = vector.load %arg1[%c7_187, %c0_188, %c0_189] : memref<13x16x4xf32, #tpu.memory_space<vmem>>, vector<1x16x4xf32>
    %315 = vector.shape_cast %314 : vector<1x16x4xf32> to vector<16x4xf32>
    %316 = vector.extract_strided_slice %252 {offsets = [7, 0], sizes = [4, 16], strides = [1, 1]} : vector<16x16xf32> to vector<4x16xf32>
    %cst_190 = arith.constant dense<0.000000e+00> : vector<4x4xf32>
    %317 = tpu.matmul %316, %315, %cst_190 {dimension_numbers = #tpu.dot_dimension_numbers<[1], [0], [0], [1], [0, 0, 1, 1], [], []>} : vector<4x16xf32>, vector<16x4xf32>, vector<4x4xf32> -> vector<4x4xf32>
    %318 = arith.addf %310, %317 : vector<4x4xf32>
    %319 = vector.extract_strided_slice %255 {offsets = [7, 0], sizes = [4, 16], strides = [1, 1]} : vector<16x16xf32> to vector<4x16xf32>
    %cst_191 = arith.constant dense<0.000000e+00> : vector<4x4xf32>
    %320 = tpu.matmul %319, %315, %cst_191 {dimension_numbers = #tpu.dot_dimension_numbers<[1], [0], [0], [1], [0, 0, 1, 1], [], []>} : vector<4x16xf32>, vector<16x4xf32>, vector<4x4xf32> -> vector<4x4xf32>
    %321 = arith.addf %313, %320 : vector<4x4xf32>
    %c8_192 = arith.constant 8 : index
    %c0_193 = arith.constant 0 : index
    %c0_194 = arith.constant 0 : index
    %322 = vector.load %arg1[%c8_192, %c0_193, %c0_194] : memref<13x16x4xf32, #tpu.memory_space<vmem>>, vector<1x16x4xf32>
    %323 = vector.shape_cast %322 : vector<1x16x4xf32> to vector<16x4xf32>
    %324 = vector.extract_strided_slice %252 {offsets = [8, 0], sizes = [4, 16], strides = [1, 1]} : vector<16x16xf32> to vector<4x16xf32>
    %cst_195 = arith.constant dense<0.000000e+00> : vector<4x4xf32>
    %325 = tpu.matmul %324, %323, %cst_195 {dimension_numbers = #tpu.dot_dimension_numbers<[1], [0], [0], [1], [0, 0, 1, 1], [], []>} : vector<4x16xf32>, vector<16x4xf32>, vector<4x4xf32> -> vector<4x4xf32>
    %326 = arith.addf %318, %325 : vector<4x4xf32>
    %327 = vector.extract_strided_slice %255 {offsets = [8, 0], sizes = [4, 16], strides = [1, 1]} : vector<16x16xf32> to vector<4x16xf32>
    %cst_196 = arith.constant dense<0.000000e+00> : vector<4x4xf32>
    %328 = tpu.matmul %327, %323, %cst_196 {dimension_numbers = #tpu.dot_dimension_numbers<[1], [0], [0], [1], [0, 0, 1, 1], [], []>} : vector<4x16xf32>, vector<16x4xf32>, vector<4x4xf32> -> vector<4x4xf32>
    %329 = arith.addf %321, %328 : vector<4x4xf32>
    %c9_197 = arith.constant 9 : index
    %c0_198 = arith.constant 0 : index
    %c0_199 = arith.constant 0 : index
    %330 = vector.load %arg1[%c9_197, %c0_198, %c0_199] : memref<13x16x4xf32, #tpu.memory_space<vmem>>, vector<1x16x4xf32>
    %331 = vector.shape_cast %330 : vector<1x16x4xf32> to vector<16x4xf32>
    %332 = vector.extract_strided_slice %252 {offsets = [9, 0], sizes = [4, 16], strides = [1, 1]} : vector<16x16xf32> to vector<4x16xf32>
    %cst_200 = arith.constant dense<0.000000e+00> : vector<4x4xf32>
    %333 = tpu.matmul %332, %331, %cst_200 {dimension_numbers = #tpu.dot_dimension_numbers<[1], [0], [0], [1], [0, 0, 1, 1], [], []>} : vector<4x16xf32>, vector<16x4xf32>, vector<4x4xf32> -> vector<4x4xf32>
    %334 = arith.addf %326, %333 : vector<4x4xf32>
    %335 = vector.extract_strided_slice %255 {offsets = [9, 0], sizes = [4, 16], strides = [1, 1]} : vector<16x16xf32> to vector<4x16xf32>
    %cst_201 = arith.constant dense<0.000000e+00> : vector<4x4xf32>
    %336 = tpu.matmul %335, %331, %cst_201 {dimension_numbers = #tpu.dot_dimension_numbers<[1], [0], [0], [1], [0, 0, 1, 1], [], []>} : vector<4x16xf32>, vector<16x4xf32>, vector<4x4xf32> -> vector<4x4xf32>
    %337 = arith.addf %329, %336 : vector<4x4xf32>
    %c10_202 = arith.constant 10 : index
    %c0_203 = arith.constant 0 : index
    %c0_204 = arith.constant 0 : index
    %338 = vector.load %arg1[%c10_202, %c0_203, %c0_204] : memref<13x16x4xf32, #tpu.memory_space<vmem>>, vector<1x16x4xf32>
    %339 = vector.shape_cast %338 : vector<1x16x4xf32> to vector<16x4xf32>
    %340 = vector.extract_strided_slice %252 {offsets = [10, 0], sizes = [4, 16], strides = [1, 1]} : vector<16x16xf32> to vector<4x16xf32>
    %cst_205 = arith.constant dense<0.000000e+00> : vector<4x4xf32>
    %341 = tpu.matmul %340, %339, %cst_205 {dimension_numbers = #tpu.dot_dimension_numbers<[1], [0], [0], [1], [0, 0, 1, 1], [], []>} : vector<4x16xf32>, vector<16x4xf32>, vector<4x4xf32> -> vector<4x4xf32>
    %342 = arith.addf %334, %341 : vector<4x4xf32>
    %343 = vector.extract_strided_slice %255 {offsets = [10, 0], sizes = [4, 16], strides = [1, 1]} : vector<16x16xf32> to vector<4x16xf32>
    %cst_206 = arith.constant dense<0.000000e+00> : vector<4x4xf32>
    %344 = tpu.matmul %343, %339, %cst_206 {dimension_numbers = #tpu.dot_dimension_numbers<[1], [0], [0], [1], [0, 0, 1, 1], [], []>} : vector<4x16xf32>, vector<16x4xf32>, vector<4x4xf32> -> vector<4x4xf32>
    %345 = arith.addf %337, %344 : vector<4x4xf32>
    %c11_207 = arith.constant 11 : index
    %c0_208 = arith.constant 0 : index
    %c0_209 = arith.constant 0 : index
    %346 = vector.load %arg1[%c11_207, %c0_208, %c0_209] : memref<13x16x4xf32, #tpu.memory_space<vmem>>, vector<1x16x4xf32>
    %347 = vector.shape_cast %346 : vector<1x16x4xf32> to vector<16x4xf32>
    %348 = vector.extract_strided_slice %252 {offsets = [11, 0], sizes = [4, 16], strides = [1, 1]} : vector<16x16xf32> to vector<4x16xf32>
    %cst_210 = arith.constant dense<0.000000e+00> : vector<4x4xf32>
    %349 = tpu.matmul %348, %347, %cst_210 {dimension_numbers = #tpu.dot_dimension_numbers<[1], [0], [0], [1], [0, 0, 1, 1], [], []>} : vector<4x16xf32>, vector<16x4xf32>, vector<4x4xf32> -> vector<4x4xf32>
    %350 = arith.addf %342, %349 : vector<4x4xf32>
    %351 = vector.extract_strided_slice %255 {offsets = [11, 0], sizes = [4, 16], strides = [1, 1]} : vector<16x16xf32> to vector<4x16xf32>
    %cst_211 = arith.constant dense<0.000000e+00> : vector<4x4xf32>
    %352 = tpu.matmul %351, %347, %cst_211 {dimension_numbers = #tpu.dot_dimension_numbers<[1], [0], [0], [1], [0, 0, 1, 1], [], []>} : vector<4x16xf32>, vector<16x4xf32>, vector<4x4xf32> -> vector<4x4xf32>
    %353 = arith.addf %345, %352 : vector<4x4xf32>
    %c12_212 = arith.constant 12 : index
    %c0_213 = arith.constant 0 : index
    %c0_214 = arith.constant 0 : index
    %354 = vector.load %arg1[%c12_212, %c0_213, %c0_214] : memref<13x16x4xf32, #tpu.memory_space<vmem>>, vector<1x16x4xf32>
    %355 = vector.shape_cast %354 : vector<1x16x4xf32> to vector<16x4xf32>
    %356 = vector.extract_strided_slice %252 {offsets = [12, 0], sizes = [4, 16], strides = [1, 1]} : vector<16x16xf32> to vector<4x16xf32>
    %cst_215 = arith.constant dense<0.000000e+00> : vector<4x4xf32>
    %357 = tpu.matmul %356, %355, %cst_215 {dimension_numbers = #tpu.dot_dimension_numbers<[1], [0], [0], [1], [0, 0, 1, 1], [], []>} : vector<4x16xf32>, vector<16x4xf32>, vector<4x4xf32> -> vector<4x4xf32>
    %358 = arith.addf %350, %357 : vector<4x4xf32>
    %359 = vector.extract_strided_slice %255 {offsets = [12, 0], sizes = [4, 16], strides = [1, 1]} : vector<16x16xf32> to vector<4x16xf32>
    %cst_216 = arith.constant dense<0.000000e+00> : vector<4x4xf32>
    %360 = tpu.matmul %359, %355, %cst_216 {dimension_numbers = #tpu.dot_dimension_numbers<[1], [0], [0], [1], [0, 0, 1, 1], [], []>} : vector<4x16xf32>, vector<16x4xf32>, vector<4x4xf32> -> vector<4x4xf32>
    %361 = arith.addf %353, %360 : vector<4x4xf32>
    %362 = arith.subf %358, %361 : vector<4x4xf32>
    %363 = arith.mulf %362, %362 : vector<4x4xf32>
    %364 = vector.shape_cast %363 : vector<4x4xf32> to vector<1x4x4xf32>
    %cst_217 = arith.constant dense<0.000000e+00> : vector<1xf32>
    %365 = vector.multi_reduction <add>, %364, %cst_217 [1, 2] : vector<1x4x4xf32> to vector<1xf32>
    %366 = vector.shape_cast %365 : vector<1xf32> to vector<1x1x1xf32>
    %367 = vector.extract %366[0, 0, 0] : f32 from vector<1x1x1xf32>
    %368 = arith.addf %243, %367 : f32
    %369 = arith.mulf %358, %358 : vector<4x4xf32>
    %370 = vector.shape_cast %369 : vector<4x4xf32> to vector<1x4x4xf32>
    %cst_218 = arith.constant dense<0.000000e+00> : vector<1xf32>
    %371 = vector.multi_reduction <add>, %370, %cst_218 [1, 2] : vector<1x4x4xf32> to vector<1xf32>
    %372 = vector.shape_cast %371 : vector<1xf32> to vector<1x1x1xf32>
    %373 = vector.extract %372[0, 0, 0] : f32 from vector<1x1x1xf32>
    %374 = arith.addf %249, %373 : f32
    %c0_219 = arith.constant 0 : index
    %c3_220 = arith.constant 3 : index
    %c0_221 = arith.constant 0 : index
    %c0_222 = arith.constant 0 : index
    %375 = vector.load %arg2[%c0_219, %c3_220, %c0_221, %c0_222] : memref<1x4x16x16xf32, #tpu.memory_space<vmem>>, vector<1x1x16x16xf32>
    %376 = vector.shape_cast %375 : vector<1x1x16x16xf32> to vector<16x16xf32>
    %377 = math.absf %376 : vector<16x16xf32>
    %c0_223 = arith.constant 0 : index
    %c3_224 = arith.constant 3 : index
    %c0_225 = arith.constant 0 : index
    %c0_226 = arith.constant 0 : index
    %378 = vector.load %arg3[%c0_223, %c3_224, %c0_225, %c0_226] : memref<1x4x16x16xf32, #tpu.memory_space<vmem>>, vector<1x1x16x16xf32>
    %379 = vector.shape_cast %378 : vector<1x1x16x16xf32> to vector<16x16xf32>
    %380 = math.absf %379 : vector<16x16xf32>
    %cst_227 = arith.constant 0.000000e+00 : f32
    %381 = vector.broadcast %cst_227 : f32 to vector<4x4xf32>
    %cst_228 = arith.constant 0.000000e+00 : f32
    %382 = vector.broadcast %cst_228 : f32 to vector<4x4xf32>
    %c0_229 = arith.constant 0 : index
    %c0_230 = arith.constant 0 : index
    %c0_231 = arith.constant 0 : index
    %383 = vector.load %arg1[%c0_229, %c0_230, %c0_231] : memref<13x16x4xf32, #tpu.memory_space<vmem>>, vector<1x16x4xf32>
    %384 = vector.shape_cast %383 : vector<1x16x4xf32> to vector<16x4xf32>
    %385 = vector.extract_strided_slice %377 {offsets = [0, 0], sizes = [4, 16], strides = [1, 1]} : vector<16x16xf32> to vector<4x16xf32>
    %cst_232 = arith.constant dense<0.000000e+00> : vector<4x4xf32>
    %386 = tpu.matmul %385, %384, %cst_232 {dimension_numbers = #tpu.dot_dimension_numbers<[1], [0], [0], [1], [0, 0, 1, 1], [], []>} : vector<4x16xf32>, vector<16x4xf32>, vector<4x4xf32> -> vector<4x4xf32>
    %387 = arith.addf %381, %386 : vector<4x4xf32>
    %388 = vector.extract_strided_slice %380 {offsets = [0, 0], sizes = [4, 16], strides = [1, 1]} : vector<16x16xf32> to vector<4x16xf32>
    %cst_233 = arith.constant dense<0.000000e+00> : vector<4x4xf32>
    %389 = tpu.matmul %388, %384, %cst_233 {dimension_numbers = #tpu.dot_dimension_numbers<[1], [0], [0], [1], [0, 0, 1, 1], [], []>} : vector<4x16xf32>, vector<16x4xf32>, vector<4x4xf32> -> vector<4x4xf32>
    %390 = arith.addf %382, %389 : vector<4x4xf32>
    %c1_234 = arith.constant 1 : index
    %c0_235 = arith.constant 0 : index
    %c0_236 = arith.constant 0 : index
    %391 = vector.load %arg1[%c1_234, %c0_235, %c0_236] : memref<13x16x4xf32, #tpu.memory_space<vmem>>, vector<1x16x4xf32>
    %392 = vector.shape_cast %391 : vector<1x16x4xf32> to vector<16x4xf32>
    %393 = vector.extract_strided_slice %377 {offsets = [1, 0], sizes = [4, 16], strides = [1, 1]} : vector<16x16xf32> to vector<4x16xf32>
    %cst_237 = arith.constant dense<0.000000e+00> : vector<4x4xf32>
    %394 = tpu.matmul %393, %392, %cst_237 {dimension_numbers = #tpu.dot_dimension_numbers<[1], [0], [0], [1], [0, 0, 1, 1], [], []>} : vector<4x16xf32>, vector<16x4xf32>, vector<4x4xf32> -> vector<4x4xf32>
    %395 = arith.addf %387, %394 : vector<4x4xf32>
    %396 = vector.extract_strided_slice %380 {offsets = [1, 0], sizes = [4, 16], strides = [1, 1]} : vector<16x16xf32> to vector<4x16xf32>
    %cst_238 = arith.constant dense<0.000000e+00> : vector<4x4xf32>
    %397 = tpu.matmul %396, %392, %cst_238 {dimension_numbers = #tpu.dot_dimension_numbers<[1], [0], [0], [1], [0, 0, 1, 1], [], []>} : vector<4x16xf32>, vector<16x4xf32>, vector<4x4xf32> -> vector<4x4xf32>
    %398 = arith.addf %390, %397 : vector<4x4xf32>
    %c2_239 = arith.constant 2 : index
    %c0_240 = arith.constant 0 : index
    %c0_241 = arith.constant 0 : index
    %399 = vector.load %arg1[%c2_239, %c0_240, %c0_241] : memref<13x16x4xf32, #tpu.memory_space<vmem>>, vector<1x16x4xf32>
    %400 = vector.shape_cast %399 : vector<1x16x4xf32> to vector<16x4xf32>
    %401 = vector.extract_strided_slice %377 {offsets = [2, 0], sizes = [4, 16], strides = [1, 1]} : vector<16x16xf32> to vector<4x16xf32>
    %cst_242 = arith.constant dense<0.000000e+00> : vector<4x4xf32>
    %402 = tpu.matmul %401, %400, %cst_242 {dimension_numbers = #tpu.dot_dimension_numbers<[1], [0], [0], [1], [0, 0, 1, 1], [], []>} : vector<4x16xf32>, vector<16x4xf32>, vector<4x4xf32> -> vector<4x4xf32>
    %403 = arith.addf %395, %402 : vector<4x4xf32>
    %404 = vector.extract_strided_slice %380 {offsets = [2, 0], sizes = [4, 16], strides = [1, 1]} : vector<16x16xf32> to vector<4x16xf32>
    %cst_243 = arith.constant dense<0.000000e+00> : vector<4x4xf32>
    %405 = tpu.matmul %404, %400, %cst_243 {dimension_numbers = #tpu.dot_dimension_numbers<[1], [0], [0], [1], [0, 0, 1, 1], [], []>} : vector<4x16xf32>, vector<16x4xf32>, vector<4x4xf32> -> vector<4x4xf32>
    %406 = arith.addf %398, %405 : vector<4x4xf32>
    %c3_244 = arith.constant 3 : index
    %c0_245 = arith.constant 0 : index
    %c0_246 = arith.constant 0 : index
    %407 = vector.load %arg1[%c3_244, %c0_245, %c0_246] : memref<13x16x4xf32, #tpu.memory_space<vmem>>, vector<1x16x4xf32>
    %408 = vector.shape_cast %407 : vector<1x16x4xf32> to vector<16x4xf32>
    %409 = vector.extract_strided_slice %377 {offsets = [3, 0], sizes = [4, 16], strides = [1, 1]} : vector<16x16xf32> to vector<4x16xf32>
    %cst_247 = arith.constant dense<0.000000e+00> : vector<4x4xf32>
    %410 = tpu.matmul %409, %408, %cst_247 {dimension_numbers = #tpu.dot_dimension_numbers<[1], [0], [0], [1], [0, 0, 1, 1], [], []>} : vector<4x16xf32>, vector<16x4xf32>, vector<4x4xf32> -> vector<4x4xf32>
    %411 = arith.addf %403, %410 : vector<4x4xf32>
    %412 = vector.extract_strided_slice %380 {offsets = [3, 0], sizes = [4, 16], strides = [1, 1]} : vector<16x16xf32> to vector<4x16xf32>
    %cst_248 = arith.constant dense<0.000000e+00> : vector<4x4xf32>
    %413 = tpu.matmul %412, %408, %cst_248 {dimension_numbers = #tpu.dot_dimension_numbers<[1], [0], [0], [1], [0, 0, 1, 1], [], []>} : vector<4x16xf32>, vector<16x4xf32>, vector<4x4xf32> -> vector<4x4xf32>
    %414 = arith.addf %406, %413 : vector<4x4xf32>
    %c4_249 = arith.constant 4 : index
    %c0_250 = arith.constant 0 : index
    %c0_251 = arith.constant 0 : index
    %415 = vector.load %arg1[%c4_249, %c0_250, %c0_251] : memref<13x16x4xf32, #tpu.memory_space<vmem>>, vector<1x16x4xf32>
    %416 = vector.shape_cast %415 : vector<1x16x4xf32> to vector<16x4xf32>
    %417 = vector.extract_strided_slice %377 {offsets = [4, 0], sizes = [4, 16], strides = [1, 1]} : vector<16x16xf32> to vector<4x16xf32>
    %cst_252 = arith.constant dense<0.000000e+00> : vector<4x4xf32>
    %418 = tpu.matmul %417, %416, %cst_252 {dimension_numbers = #tpu.dot_dimension_numbers<[1], [0], [0], [1], [0, 0, 1, 1], [], []>} : vector<4x16xf32>, vector<16x4xf32>, vector<4x4xf32> -> vector<4x4xf32>
    %419 = arith.addf %411, %418 : vector<4x4xf32>
    %420 = vector.extract_strided_slice %380 {offsets = [4, 0], sizes = [4, 16], strides = [1, 1]} : vector<16x16xf32> to vector<4x16xf32>
    %cst_253 = arith.constant dense<0.000000e+00> : vector<4x4xf32>
    %421 = tpu.matmul %420, %416, %cst_253 {dimension_numbers = #tpu.dot_dimension_numbers<[1], [0], [0], [1], [0, 0, 1, 1], [], []>} : vector<4x16xf32>, vector<16x4xf32>, vector<4x4xf32> -> vector<4x4xf32>
    %422 = arith.addf %414, %421 : vector<4x4xf32>
    %c5_254 = arith.constant 5 : index
    %c0_255 = arith.constant 0 : index
    %c0_256 = arith.constant 0 : index
    %423 = vector.load %arg1[%c5_254, %c0_255, %c0_256] : memref<13x16x4xf32, #tpu.memory_space<vmem>>, vector<1x16x4xf32>
    %424 = vector.shape_cast %423 : vector<1x16x4xf32> to vector<16x4xf32>
    %425 = vector.extract_strided_slice %377 {offsets = [5, 0], sizes = [4, 16], strides = [1, 1]} : vector<16x16xf32> to vector<4x16xf32>
    %cst_257 = arith.constant dense<0.000000e+00> : vector<4x4xf32>
    %426 = tpu.matmul %425, %424, %cst_257 {dimension_numbers = #tpu.dot_dimension_numbers<[1], [0], [0], [1], [0, 0, 1, 1], [], []>} : vector<4x16xf32>, vector<16x4xf32>, vector<4x4xf32> -> vector<4x4xf32>
    %427 = arith.addf %419, %426 : vector<4x4xf32>
    %428 = vector.extract_strided_slice %380 {offsets = [5, 0], sizes = [4, 16], strides = [1, 1]} : vector<16x16xf32> to vector<4x16xf32>
    %cst_258 = arith.constant dense<0.000000e+00> : vector<4x4xf32>
    %429 = tpu.matmul %428, %424, %cst_258 {dimension_numbers = #tpu.dot_dimension_numbers<[1], [0], [0], [1], [0, 0, 1, 1], [], []>} : vector<4x16xf32>, vector<16x4xf32>, vector<4x4xf32> -> vector<4x4xf32>
    %430 = arith.addf %422, %429 : vector<4x4xf32>
    %c6_259 = arith.constant 6 : index
    %c0_260 = arith.constant 0 : index
    %c0_261 = arith.constant 0 : index
    %431 = vector.load %arg1[%c6_259, %c0_260, %c0_261] : memref<13x16x4xf32, #tpu.memory_space<vmem>>, vector<1x16x4xf32>
    %432 = vector.shape_cast %431 : vector<1x16x4xf32> to vector<16x4xf32>
    %433 = vector.extract_strided_slice %377 {offsets = [6, 0], sizes = [4, 16], strides = [1, 1]} : vector<16x16xf32> to vector<4x16xf32>
    %cst_262 = arith.constant dense<0.000000e+00> : vector<4x4xf32>
    %434 = tpu.matmul %433, %432, %cst_262 {dimension_numbers = #tpu.dot_dimension_numbers<[1], [0], [0], [1], [0, 0, 1, 1], [], []>} : vector<4x16xf32>, vector<16x4xf32>, vector<4x4xf32> -> vector<4x4xf32>
    %435 = arith.addf %427, %434 : vector<4x4xf32>
    %436 = vector.extract_strided_slice %380 {offsets = [6, 0], sizes = [4, 16], strides = [1, 1]} : vector<16x16xf32> to vector<4x16xf32>
    %cst_263 = arith.constant dense<0.000000e+00> : vector<4x4xf32>
    %437 = tpu.matmul %436, %432, %cst_263 {dimension_numbers = #tpu.dot_dimension_numbers<[1], [0], [0], [1], [0, 0, 1, 1], [], []>} : vector<4x16xf32>, vector<16x4xf32>, vector<4x4xf32> -> vector<4x4xf32>
    %438 = arith.addf %430, %437 : vector<4x4xf32>
    %c7_264 = arith.constant 7 : index
    %c0_265 = arith.constant 0 : index
    %c0_266 = arith.constant 0 : index
    %439 = vector.load %arg1[%c7_264, %c0_265, %c0_266] : memref<13x16x4xf32, #tpu.memory_space<vmem>>, vector<1x16x4xf32>
    %440 = vector.shape_cast %439 : vector<1x16x4xf32> to vector<16x4xf32>
    %441 = vector.extract_strided_slice %377 {offsets = [7, 0], sizes = [4, 16], strides = [1, 1]} : vector<16x16xf32> to vector<4x16xf32>
    %cst_267 = arith.constant dense<0.000000e+00> : vector<4x4xf32>
    %442 = tpu.matmul %441, %440, %cst_267 {dimension_numbers = #tpu.dot_dimension_numbers<[1], [0], [0], [1], [0, 0, 1, 1], [], []>} : vector<4x16xf32>, vector<16x4xf32>, vector<4x4xf32> -> vector<4x4xf32>
    %443 = arith.addf %435, %442 : vector<4x4xf32>
    %444 = vector.extract_strided_slice %380 {offsets = [7, 0], sizes = [4, 16], strides = [1, 1]} : vector<16x16xf32> to vector<4x16xf32>
    %cst_268 = arith.constant dense<0.000000e+00> : vector<4x4xf32>
    %445 = tpu.matmul %444, %440, %cst_268 {dimension_numbers = #tpu.dot_dimension_numbers<[1], [0], [0], [1], [0, 0, 1, 1], [], []>} : vector<4x16xf32>, vector<16x4xf32>, vector<4x4xf32> -> vector<4x4xf32>
    %446 = arith.addf %438, %445 : vector<4x4xf32>
    %c8_269 = arith.constant 8 : index
    %c0_270 = arith.constant 0 : index
    %c0_271 = arith.constant 0 : index
    %447 = vector.load %arg1[%c8_269, %c0_270, %c0_271] : memref<13x16x4xf32, #tpu.memory_space<vmem>>, vector<1x16x4xf32>
    %448 = vector.shape_cast %447 : vector<1x16x4xf32> to vector<16x4xf32>
    %449 = vector.extract_strided_slice %377 {offsets = [8, 0], sizes = [4, 16], strides = [1, 1]} : vector<16x16xf32> to vector<4x16xf32>
    %cst_272 = arith.constant dense<0.000000e+00> : vector<4x4xf32>
    %450 = tpu.matmul %449, %448, %cst_272 {dimension_numbers = #tpu.dot_dimension_numbers<[1], [0], [0], [1], [0, 0, 1, 1], [], []>} : vector<4x16xf32>, vector<16x4xf32>, vector<4x4xf32> -> vector<4x4xf32>
    %451 = arith.addf %443, %450 : vector<4x4xf32>
    %452 = vector.extract_strided_slice %380 {offsets = [8, 0], sizes = [4, 16], strides = [1, 1]} : vector<16x16xf32> to vector<4x16xf32>
    %cst_273 = arith.constant dense<0.000000e+00> : vector<4x4xf32>
    %453 = tpu.matmul %452, %448, %cst_273 {dimension_numbers = #tpu.dot_dimension_numbers<[1], [0], [0], [1], [0, 0, 1, 1], [], []>} : vector<4x16xf32>, vector<16x4xf32>, vector<4x4xf32> -> vector<4x4xf32>
    %454 = arith.addf %446, %453 : vector<4x4xf32>
    %c9_274 = arith.constant 9 : index
    %c0_275 = arith.constant 0 : index
    %c0_276 = arith.constant 0 : index
    %455 = vector.load %arg1[%c9_274, %c0_275, %c0_276] : memref<13x16x4xf32, #tpu.memory_space<vmem>>, vector<1x16x4xf32>
    %456 = vector.shape_cast %455 : vector<1x16x4xf32> to vector<16x4xf32>
    %457 = vector.extract_strided_slice %377 {offsets = [9, 0], sizes = [4, 16], strides = [1, 1]} : vector<16x16xf32> to vector<4x16xf32>
    %cst_277 = arith.constant dense<0.000000e+00> : vector<4x4xf32>
    %458 = tpu.matmul %457, %456, %cst_277 {dimension_numbers = #tpu.dot_dimension_numbers<[1], [0], [0], [1], [0, 0, 1, 1], [], []>} : vector<4x16xf32>, vector<16x4xf32>, vector<4x4xf32> -> vector<4x4xf32>
    %459 = arith.addf %451, %458 : vector<4x4xf32>
    %460 = vector.extract_strided_slice %380 {offsets = [9, 0], sizes = [4, 16], strides = [1, 1]} : vector<16x16xf32> to vector<4x16xf32>
    %cst_278 = arith.constant dense<0.000000e+00> : vector<4x4xf32>
    %461 = tpu.matmul %460, %456, %cst_278 {dimension_numbers = #tpu.dot_dimension_numbers<[1], [0], [0], [1], [0, 0, 1, 1], [], []>} : vector<4x16xf32>, vector<16x4xf32>, vector<4x4xf32> -> vector<4x4xf32>
    %462 = arith.addf %454, %461 : vector<4x4xf32>
    %c10_279 = arith.constant 10 : index
    %c0_280 = arith.constant 0 : index
    %c0_281 = arith.constant 0 : index
    %463 = vector.load %arg1[%c10_279, %c0_280, %c0_281] : memref<13x16x4xf32, #tpu.memory_space<vmem>>, vector<1x16x4xf32>
    %464 = vector.shape_cast %463 : vector<1x16x4xf32> to vector<16x4xf32>
    %465 = vector.extract_strided_slice %377 {offsets = [10, 0], sizes = [4, 16], strides = [1, 1]} : vector<16x16xf32> to vector<4x16xf32>
    %cst_282 = arith.constant dense<0.000000e+00> : vector<4x4xf32>
    %466 = tpu.matmul %465, %464, %cst_282 {dimension_numbers = #tpu.dot_dimension_numbers<[1], [0], [0], [1], [0, 0, 1, 1], [], []>} : vector<4x16xf32>, vector<16x4xf32>, vector<4x4xf32> -> vector<4x4xf32>
    %467 = arith.addf %459, %466 : vector<4x4xf32>
    %468 = vector.extract_strided_slice %380 {offsets = [10, 0], sizes = [4, 16], strides = [1, 1]} : vector<16x16xf32> to vector<4x16xf32>
    %cst_283 = arith.constant dense<0.000000e+00> : vector<4x4xf32>
    %469 = tpu.matmul %468, %464, %cst_283 {dimension_numbers = #tpu.dot_dimension_numbers<[1], [0], [0], [1], [0, 0, 1, 1], [], []>} : vector<4x16xf32>, vector<16x4xf32>, vector<4x4xf32> -> vector<4x4xf32>
    %470 = arith.addf %462, %469 : vector<4x4xf32>
    %c11_284 = arith.constant 11 : index
    %c0_285 = arith.constant 0 : index
    %c0_286 = arith.constant 0 : index
    %471 = vector.load %arg1[%c11_284, %c0_285, %c0_286] : memref<13x16x4xf32, #tpu.memory_space<vmem>>, vector<1x16x4xf32>
    %472 = vector.shape_cast %471 : vector<1x16x4xf32> to vector<16x4xf32>
    %473 = vector.extract_strided_slice %377 {offsets = [11, 0], sizes = [4, 16], strides = [1, 1]} : vector<16x16xf32> to vector<4x16xf32>
    %cst_287 = arith.constant dense<0.000000e+00> : vector<4x4xf32>
    %474 = tpu.matmul %473, %472, %cst_287 {dimension_numbers = #tpu.dot_dimension_numbers<[1], [0], [0], [1], [0, 0, 1, 1], [], []>} : vector<4x16xf32>, vector<16x4xf32>, vector<4x4xf32> -> vector<4x4xf32>
    %475 = arith.addf %467, %474 : vector<4x4xf32>
    %476 = vector.extract_strided_slice %380 {offsets = [11, 0], sizes = [4, 16], strides = [1, 1]} : vector<16x16xf32> to vector<4x16xf32>
    %cst_288 = arith.constant dense<0.000000e+00> : vector<4x4xf32>
    %477 = tpu.matmul %476, %472, %cst_288 {dimension_numbers = #tpu.dot_dimension_numbers<[1], [0], [0], [1], [0, 0, 1, 1], [], []>} : vector<4x16xf32>, vector<16x4xf32>, vector<4x4xf32> -> vector<4x4xf32>
    %478 = arith.addf %470, %477 : vector<4x4xf32>
    %c12_289 = arith.constant 12 : index
    %c0_290 = arith.constant 0 : index
    %c0_291 = arith.constant 0 : index
    %479 = vector.load %arg1[%c12_289, %c0_290, %c0_291] : memref<13x16x4xf32, #tpu.memory_space<vmem>>, vector<1x16x4xf32>
    %480 = vector.shape_cast %479 : vector<1x16x4xf32> to vector<16x4xf32>
    %481 = vector.extract_strided_slice %377 {offsets = [12, 0], sizes = [4, 16], strides = [1, 1]} : vector<16x16xf32> to vector<4x16xf32>
    %cst_292 = arith.constant dense<0.000000e+00> : vector<4x4xf32>
    %482 = tpu.matmul %481, %480, %cst_292 {dimension_numbers = #tpu.dot_dimension_numbers<[1], [0], [0], [1], [0, 0, 1, 1], [], []>} : vector<4x16xf32>, vector<16x4xf32>, vector<4x4xf32> -> vector<4x4xf32>
    %483 = arith.addf %475, %482 : vector<4x4xf32>
    %484 = vector.extract_strided_slice %380 {offsets = [12, 0], sizes = [4, 16], strides = [1, 1]} : vector<16x16xf32> to vector<4x16xf32>
    %cst_293 = arith.constant dense<0.000000e+00> : vector<4x4xf32>
    %485 = tpu.matmul %484, %480, %cst_293 {dimension_numbers = #tpu.dot_dimension_numbers<[1], [0], [0], [1], [0, 0, 1, 1], [], []>} : vector<4x16xf32>, vector<16x4xf32>, vector<4x4xf32> -> vector<4x4xf32>
    %486 = arith.addf %478, %485 : vector<4x4xf32>
    %487 = arith.subf %483, %486 : vector<4x4xf32>
    %488 = arith.mulf %487, %487 : vector<4x4xf32>
    %489 = vector.shape_cast %488 : vector<4x4xf32> to vector<1x4x4xf32>
    %cst_294 = arith.constant dense<0.000000e+00> : vector<1xf32>
    %490 = vector.multi_reduction <add>, %489, %cst_294 [1, 2] : vector<1x4x4xf32> to vector<1xf32>
    %491 = vector.shape_cast %490 : vector<1xf32> to vector<1x1x1xf32>
    %492 = vector.extract %491[0, 0, 0] : f32 from vector<1x1x1xf32>
    %493 = arith.addf %368, %492 : f32
    %494 = arith.mulf %483, %483 : vector<4x4xf32>
    %495 = vector.shape_cast %494 : vector<4x4xf32> to vector<1x4x4xf32>
    %cst_295 = arith.constant dense<0.000000e+00> : vector<1xf32>
    %496 = vector.multi_reduction <add>, %495, %cst_295 [1, 2] : vector<1x4x4xf32> to vector<1xf32>
    %497 = vector.shape_cast %496 : vector<1xf32> to vector<1x1x1xf32>
    %498 = vector.extract %497[0, 0, 0] : f32 from vector<1x1x1xf32>
    %499 = arith.addf %374, %498 : f32
    %500 = math.sqrt %493 : f32
    %501 = math.sqrt %499 : f32
    %502 = arith.divf %500, %501 : f32
    %503 = vector.broadcast %502 : f32 to vector<1x8x128xf32>
    %c0_296 = arith.constant 0 : index
    %c0_297 = arith.constant 0 : index
    %c0_298 = arith.constant 0 : index
    %504 = vector.load %arg4[%c0_296, %c0_297, %c0_298] : memref<1x8x128xf32, #tpu.memory_space<vmem>>, vector<1x8x128xf32>
    tpu.vector_store %arg4[%c0_296, %c0_297, %c0_298], %503 {strides = array<i32>} : memref<1x8x128xf32, #tpu.memory_space<vmem>>, vector<1x8x128xf32>,
    return
  }
  func.func @transform_0(%arg0: i32) -> (i32, i32, i32) {
    %c0_i32 = arith.constant 0 : i32
    %c0_i32_0 = arith.constant 0 : i32
    %c0_i32_1 = arith.constant 0 : i32
    %c0_i32_2 = arith.constant 0 : i32
    return %c0_i32, %c0_i32_0, %c0_i32_1 : i32, i32, i32
  }
  func.func @transform_1(%arg0: i32) -> (i32, i32, i32, i32) {
    %c0_i32 = arith.constant 0 : i32
    %c0_i32_0 = arith.constant 0 : i32
    %c0_i32_1 = arith.constant 0 : i32
    %c0_i32_2 = arith.constant 0 : i32
    return %arg0, %c0_i32, %c0_i32_0, %c0_i32_1 : i32, i32, i32, i32
  }
  func.func @transform_2(%arg0: i32) -> (i32, i32, i32, i32) {
    %c0_i32 = arith.constant 0 : i32
    %c0_i32_0 = arith.constant 0 : i32
    %c0_i32_1 = arith.constant 0 : i32
    %c0_i32_2 = arith.constant 0 : i32
    return %arg0, %c0_i32, %c0_i32_0, %c0_i32_1 : i32, i32, i32, i32
  }
  func.func @transform_3(%arg0: i32) -> (i32, i32, i32) {
    %c0_i32 = arith.constant 0 : i32
    %c0_i32_0 = arith.constant 0 : i32
    %c0_i32_1 = arith.constant 0 : i32
    return %arg0, %c0_i32, %c0_i32_0 : i32, i32, i32
  }
}

</mosaic_0001>

<llo_original>
// kernel: tpu_custom_call.1
$region0: #{tpu_custom_call.1}
  #allocation0 [shape = 'u32[]', space=smem, size = 0x4, offset = 0x4, fixed_abs, tag = 'smem constant byte address 0x4 - core index']
  #allocation1 [shape = 'u32[72,128]{1,0:T(1,128)}', space=vmem, size = 0x9000, scoped, tag = 'internal scratch']
  %s0 = inlined_call_operand.vmem [shape: f32[13,16,4], index: 0, kind: input, shape index: {}]
  %s1 = inlined_call_operand.vmem [shape: f32[2,4,16,16], index: 1, kind: input, shape index: {}]
  %s2 = inlined_call_operand.vmem [shape: f32[2,4,16,16], index: 2, kind: input, shape index: {}]
  %s3 = inlined_call_operand.hbm [shape: f32[2,8,128], index: 3, kind: output, shape index: {}]
  %s4 = sld [smem:[#allocation0]]
  $region45: #{tpu_custom_call.1} parent=0
    _
  %s6 = ssub.s32 1, %s4
  %s7 = scalar_select 0, %s6, %s4
  $region1: #{tpu_custom_call.1} parent=0
    #allocation2 [shape = 'u8[8192]{0}', space=vmem, size = 0x2000, scoped, tag = 'output window, operand 0']
    #allocation3 [shape = 's32[2]{0}', space=sflag, size = 0x8, scoped, tag = 'scoped memory for tpu_custom_call.1']
    %8 = vsyncpa [#allocation3], 0
    %s9 = scalar_lea.sflag [#allocation3], 1
    %10 = vsyncpa %s9, 0
    loop: start=0, step=1, limit=4
    $region2: #{tpu_custom_call.1} parent=1 // loop_pre_header
      _
    $region3: #{tpu_custom_call.1} parent=1 // loop_header
      %s12 = sphi 0, %s16
      %p13 = scmp.ge.s32.totalorder %s12, 4
      %s20 = sphi 0, %s20
      %s22 = sphi 0, %s20
      %s23 = sphi 0, %s22
      %s37 = sphi 0, %s23
      %s43 = sphi 0, %s45
      %s46 = sphi 0, %s43
      %s47 = sphi 0, %s46
      %s63 = sphi 0, %s47
      %s69 = sphi 0, %s71
      %s72 = sphi 0, %s69
      %s73 = sphi 0, %s72
      %s89 = sphi 0, %s73
      %s95 = sphi 0, %s97
      %s98 = sphi 0, %s95
      %s99 = sphi 0, %s98
      %s115 = sphi 0, %s99
    $region4: #{tpu_custom_call.1} parent=1 // loop_header_branch
      %15 = sbr.rel (%p13) target = $region8
    $region5: #{tpu_custom_call.1} parent=1 // loop_body
      %s17 = ssub.s32 %s12, 1
      %s18 = ssub.s32 %s12, 2
      %s19 = sadd.s32 %s12, 1
      %s21 = sadd.s32 %s20, 1
      %p24 = scmp.eq.s32.totalorder %s12, 1
      %p25 = scmp.ne.s32.totalorder %s20, %s22
      %p26 = scmp.eq.s32.totalorder %s12, 0
      %p27 = por %p25, %p26
      %p28 = scmp.ne.s32.totalorder %s20, %s22
      %p29 = scmp.eq.s32.totalorder %s17, 1
      %p30 = por %p28, %p29
      %p31 = scmp.ne.s32.totalorder %s22, %s23
      %p32 = scmp.eq.s32.totalorder %s17, 0
      %p33 = por %p31, %p32
      %p34 = scmp.ne.s32.totalorder %s22, %s23
      %p35 = scmp.eq.s32.totalorder %s18, 1
      %p36 = por %p34, %p35
      %p38 = scmp.ne.s32.totalorder %s23, %s37
      %p39 = scmp.eq.s32.totalorder %s18, 0
      %p40 = por %p38, %p39
      %s41 = ssub.s32 %s12, %s19
      %p42 = scmp.eq.s32.totalorder %s41, 0
      %s44 = sadd.s32 %s43, 1
      %s45 = scalar_select %p42, %s43, %s44
      %p48 = pneg %p42
      %p49 = scmp.eq.s32.totalorder %s12, 1
      %p50 = por %p48, %p49
      %p51 = scmp.ne.s32.totalorder %s43, %s46
      %p52 = scmp.eq.s32.totalorder %s12, 0
      %p53 = por %p51, %p52
      %p54 = scmp.ne.s32.totalorder %s43, %s46
      %p55 = scmp.eq.s32.totalorder %s17, 1
      %p56 = por %p54, %p55
      %p57 = scmp.ne.s32.totalorder %s46, %s47
      %p58 = scmp.eq.s32.totalorder %s17, 0
      %p59 = por %p57, %p58
      %p60 = scmp.ne.s32.totalorder %s46, %s47
      %p61 = scmp.eq.s32.totalorder %s18, 1
      %p62 = por %p60, %p61
      %p64 = scmp.ne.s32.totalorder %s47, %s63
      %p65 = scmp.eq.s32.totalorder %s18, 0
      %p66 = por %p64, %p65
      %s67 = ssub.s32 %s12, %s19
      %p68 = scmp.eq.s32.totalorder %s67, 0
      %s70 = sadd.s32 %s69, 1
      %s71 = scalar_select %p68, %s69, %s70
      %p74 = pneg %p68
      %p75 = scmp.eq.s32.totalorder %s12, 1
      %p76 = por %p74, %p75
      %p77 = scmp.ne.s32.totalorder %s69, %s72
      %p78 = scmp.eq.s32.totalorder %s12, 0
      %p79 = por %p77, %p78
      %p80 = scmp.ne.s32.totalorder %s69, %s72
      %p81 = scmp.eq.s32.totalorder %s17, 1
      %p82 = por %p80, %p81
      %p83 = scmp.ne.s32.totalorder %s72, %s73
      %p84 = scmp.eq.s32.totalorder %s17, 0
      %p85 = por %p83, %p84
      %p86 = scmp.ne.s32.totalorder %s72, %s73
      %p87 = scmp.eq.s32.totalorder %s18, 1
      %p88 = por %p86, %p87
      %p90 = scmp.ne.s32.totalorder %s73, %s89
      %p91 = scmp.eq.s32.totalorder %s18, 0
      %p92 = por %p90, %p91
      %s93 = ssub.s32 %s12, %s19
      %p94 = scmp.eq.s32.totalorder %s93, 0
      %s96 = sadd.s32 %s95, 1
      %s97 = scalar_select %p94, %s95, %s96
      %p100 = pneg %p94
      %p101 = scmp.eq.s32.totalorder %s12, 1
      %p102 = por %p100, %p101
      %p103 = scmp.ne.s32.totalorder %s95, %s98
      %p104 = scmp.eq.s32.totalorder %s12, 0
      %p105 = por %p103, %p104
      %p106 = scmp.ne.s32.totalorder %s95, %s98
      %p107 = scmp.eq.s32.totalorder %s17, 1
      %p108 = por %p106, %p107
      %p109 = scmp.ne.s32.totalorder %s98, %s99
      %p110 = scmp.eq.s32.totalorder %s17, 0
      %p111 = por %p109, %p110
      %p112 = scmp.ne.s32.totalorder %s98, %s99
      %p113 = scmp.eq.s32.totalorder %s18, 1
      %p114 = por %p112, %p113
      %p116 = scmp.ne.s32.totalorder %s99, %s115
      %p117 = scmp.eq.s32.totalorder %s18, 0
      %p118 = por %p116, %p117
      %p119 = scmp.le.s32.totalorder 1, %s12
      %p120 = scmp.lt.s32.totalorder %s12, 3
      %p121 = pnand %p119, %p120
      %p122 = pneg %p121
      // Predicated region
      $region9: #{tpu_custom_call.1} parent=5 // pred_check
        _
      $region10: #{tpu_custom_call.1} parent=5 // pred_check_branch
        %124 = sbr.rel (%p121) target = $region12
      $region11: #{tpu_custom_call.1} parent=5 // pred_region
        %s125 = ssub.s32 %s12, 1
        // Predicated region
        $region13: #{tpu_custom_call.1} parent=11 // pred_check
          %p126 = pneg %p33
        $region14: #{tpu_custom_call.1} parent=11 // pred_check_branch
          %128 = sbr.rel (%p126) target = $region16
        $region15: #{tpu_custom_call.1} parent=11 // pred_region
          _
        $region16: #{tpu_custom_call.1} parent=11 // pred_fallthru
          _
      $region12: #{tpu_custom_call.1} parent=5 // pred_fallthru
        _
      %p129 = scmp.lt.s32.totalorder %s12, 2
      // Predicated region
      $region17: #{tpu_custom_call.1} parent=5 // pred_check
        %p130 = pneg %p129
      $region18: #{tpu_custom_call.1} parent=5 // pred_check_branch
        %132 = sbr.rel (%p130) target = $region20
      $region19: #{tpu_custom_call.1} parent=5 // pred_region
        // Predicated region
        $region21: #{tpu_custom_call.1} parent=19 // pred_check
          %p133 = pneg %p53
        $region22: #{tpu_custom_call.1} parent=19 // pred_check_branch
          %135 = sbr.rel (%p133) target = $region24
        $region23: #{tpu_custom_call.1} parent=19 // pred_region
          %p136 = scmp.lt.s32.totalorder %s12, 1
          %s137 = scalar_select %p136, %s12, 1
          %s138 = smul.addr %s137, 8
          %s139 = smul.addr %s138, 8
          %s140 = scalar_lea.vmem %s1, %s139
        $region24: #{tpu_custom_call.1} parent=19 // pred_fallthru
          _
        // Predicated region
        $region25: #{tpu_custom_call.1} parent=19 // pred_check
          %p141 = pneg %p79
        $region26: #{tpu_custom_call.1} parent=19 // pred_check_branch
          %143 = sbr.rel (%p141) target = $region28
        $region27: #{tpu_custom_call.1} parent=19 // pred_region
          %p144 = scmp.lt.s32.totalorder %s12, 1
          %s145 = scalar_select %p144, %s12, 1
          %s146 = smul.addr %s145, 8
          %s147 = smul.addr %s146, 8
          %s148 = scalar_lea.vmem %s2, %s147
        $region28: #{tpu_custom_call.1} parent=19 // pred_fallthru
          _
      $region20: #{tpu_custom_call.1} parent=5 // pred_fallthru
        _
      %p149 = scmp.le.s32.totalorder 1, %s12
      %p150 = scmp.lt.s32.totalorder %s12, 3
      %p151 = pnand %p149, %p150
      %p152 = pneg %p151
      // Predicated region
      $region29: #{tpu_custom_call.1} parent=5 // pred_check
        _
      $region30: #{tpu_custom_call.1} parent=5 // pred_check_branch
        %154 = sbr.rel (%p151) target = $region32
      $region31: #{tpu_custom_call.1} parent=5 // pred_region
        %s155 = ssub.s32 %s12, 1
        %p156 = pneg %p33
        %p157 = pneg %p30
        %p158 = scmp.lt.s32.totalorder %s17, 1
        %s159 = scalar_select %p158, %s17, 1
        %s160 = smul.addr %s159, 8
        %s161 = smul.addr %s160, 8
        %s162 = scalar_lea.vmem %s1, %s161
        %p163 = pneg %p59
        %p164 = pneg %p56
        %p165 = scmp.lt.s32.totalorder %s17, 1
        %s166 = scalar_select %p165, %s17, 1
        %s167 = smul.addr %s166, 8
        %s168 = smul.addr %s167, 8
        %s169 = scalar_lea.vmem %s2, %s168
        %p170 = pneg %p85
        %p171 = pneg %p82
        %p172 = pneg %p111
        %p173 = pneg %p108
        %s174 = sand.u32 %s98, 1
        %s175 = scalar_lea.sflag [#allocation3], %s174
        %s176 = sand.u32 %s98, 1
        %s177 = smul.addr %s176, 8
        %s178 = scalar_lea.vmem [#allocation2], %s177
        %p179 = scmp.lt.s32.totalorder %s17, 1
        %s180 = scalar_select %p179, %s17, 1
        %s181 = smul.addr %s180, 8
        %s182 = smul.addr %s181, 8
        %s183 = scalar_lea.vmem %s1, %s182
        %p184 = scmp.lt.s32.totalorder %s17, 1
        %s185 = scalar_select %p184, %s17, 1
        %s186 = smul.addr %s185, 8
        %s187 = smul.addr %s186, 8
        %s188 = scalar_lea.vmem %s2, %s187
        %v189 = vld [vmem:[%s183] sm:$0xff]
        %v190 = vld [vmem:[%s183 + $0x8] sm:$0xff]
        %v191 = vand.u32 2147483647, %v189
        %v192 = vand.u32 2147483647, %v190
        %v193 = vld [vmem:[%s188] sm:$0xff]
        %v194 = vld [vmem:[%s188 + $0x8] sm:$0xff]
        %v195 = vand.u32 2147483647, %v193
        %v196 = vand.u32 2147483647, %v194
        %v197 = vld [vmem:[%s0] sm:$0xff]
        %v198 = vld [vmem:[%s0 + $0x8] sm:$0xff]
        %s199 = scalar_lea.vmem %s0, 16
        %v200 = vld [vmem:[%s199] sm:$0xff]
        %v201 = vld [vmem:[%s199 + $0x8] sm:$0xff]
        %v203 = vrot.slane %v191, 1
        %vm204 = vcmask 130048
        %v205 = vsel %vm204, %v203, 0
        %207 = vmatpush.msra.mxu0 0.0
        %208 = vmatpush.msra.mxu0 0.0
        %209 = vmatpush.msra.mxu0 0.0
        %210 = vmatpush.msra.mxu0 0.0
        %211 = vmatpush.msra.mxu0 0.0
        %212 = vmatpush.msra.mxu0 0.0
        %213 = vmatpush.msra.mxu0 0.0
        %214 = vmatpush.msra.mxu0 0.0
        %215 = vmatpush.msra.mxu0 0.0
        %216 = vmatpush.msra.mxu0 0.0
        %217 = vmatpush.msra.mxu0 0.0
        %218 = vmatpush.msra.mxu0 0.0
        %219 = vmatpush.msra.mxu0 0.0
        %220 = vmatpush.msra.mxu0 0.0
        %221 = vmatpush.msra.mxu0 %v201
        %222 = vmatpush.msra.mxu0 %v200
        %223 = vmatmul.f32.gmra.mxu0 %v205
        %v224 = vpop.f32.mrf.mxu0
        %v225 = vadd.f32 0.0, %v224
        %226 = vdwg.mxu0
        %v227 = vsel %vm204, %v191, 0
        %229 = vmatpush.msra.mxu0 0.0
        %230 = vmatpush.msra.mxu0 0.0
        %231 = vmatpush.msra.mxu0 0.0
        %232 = vmatpush.msra.mxu0 0.0
        %233 = vmatpush.msra.mxu0 0.0
        %234 = vmatpush.msra.mxu0 0.0
        %235 = vmatpush.msra.mxu0 0.0
        %236 = vmatpush.msra.mxu0 0.0
        %237 = vmatpush.msra.mxu0 0.0
        %238 = vmatpush.msra.mxu0 0.0
        %239 = vmatpush.msra.mxu0 0.0
        %240 = vmatpush.msra.mxu0 0.0
        %241 = vmatpush.msra.mxu0 0.0
        %242 = vmatpush.msra.mxu0 0.0
        %243 = vmatpush.msra.mxu0 %v198
        %244 = vmatpush.msra.mxu0 %v197
        %245 = vmatmul.f32.gmra.mxu0 %v227
        %v246 = vpop.f32.mrf.mxu0
        %v247 = vadd.f32 %v225, %v246
        %248 = vdwg.mxu0
        %v250 = vrot.slane %v195, 1
        %v251 = vsel %vm204, %v250, 0
        %253 = vmatpush.msra.mxu0 0.0
        %254 = vmatpush.msra.mxu0 0.0
        %255 = vmatpush.msra.mxu0 0.0
        %256 = vmatpush.msra.mxu0 0.0
        %257 = vmatpush.msra.mxu0 0.0
        %258 = vmatpush.msra.mxu0 0.0
        %259 = vmatpush.msra.mxu0 0.0
        %260 = vmatpush.msra.mxu0 0.0
        %261 = vmatpush.msra.mxu0 0.0
        %262 = vmatpush.msra.mxu0 0.0
        %263 = vmatpush.msra.mxu0 0.0
        %264 = vmatpush.msra.mxu0 0.0
        %265 = vmatpush.msra.mxu0 0.0
        %266 = vmatpush.msra.mxu0 0.0
        %267 = vmatpush.msra.mxu0 %v201
        %268 = vmatpush.msra.mxu0 %v200
        %269 = vmatmul.f32.gmra.mxu0 %v251
        %v270 = vpop.f32.mrf.mxu0
        %v271 = vadd.f32 0.0, %v270
        %272 = vdwg.mxu0
        %v273 = vsel %vm204, %v195, 0
        %275 = vmatpush.msra.mxu0 0.0
        %276 = vmatpush.msra.mxu0 0.0
        %277 = vmatpush.msra.mxu0 0.0
        %278 = vmatpush.msra.mxu0 0.0
        %279 = vmatpush.msra.mxu0 0.0
        %280 = vmatpush.msra.mxu0 0.0
        %281 = vmatpush.msra.mxu0 0.0
        %282 = vmatpush.msra.mxu0 0.0
        %283 = vmatpush.msra.mxu0 0.0
        %284 = vmatpush.msra.mxu0 0.0
        %285 = vmatpush.msra.mxu0 0.0
        %286 = vmatpush.msra.mxu0 0.0
        %287 = vmatpush.msra.mxu0 0.0
        %288 = vmatpush.msra.mxu0 0.0
        %289 = vmatpush.msra.mxu0 %v198
        %290 = vmatpush.msra.mxu0 %v197
        %291 = vmatmul.f32.gmra.mxu0 %v273
        %v292 = vpop.f32.mrf.mxu0
        %v293 = vadd.f32 %v271, %v292
        %294 = vdwg.mxu0
        %s295 = scalar_lea.vmem %s0, 32
        %v296 = vld [vmem:[%s295] sm:$0xff]
        %v297 = vld [vmem:[%s295 + $0x8] sm:$0xff]
        %v298 = vrot.slane %v191, 2
        %v299 = vsel %vm204, %v298, 0
        %301 = vmatpush.msra.mxu0 0.0
        %302 = vmatpush.msra.mxu0 0.0
        %303 = vmatpush.msra.mxu0 0.0
        %304 = vmatpush.msra.mxu0 0.0
        %305 = vmatpush.msra.mxu0 0.0
        %306 = vmatpush.msra.mxu0 0.0
        %307 = vmatpush.msra.mxu0 0.0
        %308 = vmatpush.msra.mxu0 0.0
        %309 = vmatpush.msra.mxu0 0.0
        %310 = vmatpush.msra.mxu0 0.0
        %311 = vmatpush.msra.mxu0 0.0
        %312 = vmatpush.msra.mxu0 0.0
        %313 = vmatpush.msra.mxu0 0.0
        %314 = vmatpush.msra.mxu0 0.0
        %315 = vmatpush.msra.mxu0 %v297
        %316 = vmatpush.msra.mxu0 %v296
        %317 = vmatmul.f32.gmra.mxu0 %v299
        %v318 = vpop.f32.mrf.mxu0
        %v319 = vadd.f32 0.0, %v318
        %320 = vdwg.mxu0
        %v321 = vadd.f32 %v247, %v319
        %v322 = vrot.slane %v195, 2
        %v323 = vsel %vm204, %v322, 0
        %325 = vmatpush.msra.mxu0 0.0
        %326 = vmatpush.msra.mxu0 0.0
        %327 = vmatpush.msra.mxu0 0.0
        %328 = vmatpush.msra.mxu0 0.0
        %329 = vmatpush.msra.mxu0 0.0
        %330 = vmatpush.msra.mxu0 0.0
        %331 = vmatpush.msra.mxu0 0.0
        %332 = vmatpush.msra.mxu0 0.0
        %333 = vmatpush.msra.mxu0 0.0
        %334 = vmatpush.msra.mxu0 0.0
        %335 = vmatpush.msra.mxu0 0.0
        %336 = vmatpush.msra.mxu0 0.0
        %337 = vmatpush.msra.mxu0 0.0
        %338 = vmatpush.msra.mxu0 0.0
        %339 = vmatpush.msra.mxu0 %v297
        %340 = vmatpush.msra.mxu0 %v296
        %341 = vmatmul.f32.gmra.mxu0 %v323
        %v342 = vpop.f32.mrf.mxu0
        %v343 = vadd.f32 0.0, %v342
        %344 = vdwg.mxu0
        %v345 = vadd.f32 %v293, %v343
        %s346 = scalar_lea.vmem %s0, 48
        %v347 = vld [vmem:[%s346] sm:$0xff]
        %v348 = vld [vmem:[%s346 + $0x8] sm:$0xff]
        %v349 = vrot.slane %v191, 3
        %v350 = vsel %vm204, %v349, 0
        %352 = vmatpush.msra.mxu0 0.0
        %353 = vmatpush.msra.mxu0 0.0
        %354 = vmatpush.msra.mxu0 0.0
        %355 = vmatpush.msra.mxu0 0.0
        %356 = vmatpush.msra.mxu0 0.0
        %357 = vmatpush.msra.mxu0 0.0
        %358 = vmatpush.msra.mxu0 0.0
        %359 = vmatpush.msra.mxu0 0.0
        %360 = vmatpush.msra.mxu0 0.0
        %361 = vmatpush.msra.mxu0 0.0
        %362 = vmatpush.msra.mxu0 0.0
        %363 = vmatpush.msra.mxu0 0.0
        %364 = vmatpush.msra.mxu0 0.0
        %365 = vmatpush.msra.mxu0 0.0
        %366 = vmatpush.msra.mxu0 %v348
        %367 = vmatpush.msra.mxu0 %v347
        %368 = vmatmul.f32.gmra.mxu0 %v350
        %v369 = vpop.f32.mrf.mxu0
        %v370 = vadd.f32 0.0, %v369
        %371 = vdwg.mxu0
        %v372 = vadd.f32 %v321, %v370
        %v373 = vrot.slane %v195, 3
        %v374 = vsel %vm204, %v373, 0
        %376 = vmatpush.msra.mxu0 0.0
        %377 = vmatpush.msra.mxu0 0.0
        %378 = vmatpush.msra.mxu0 0.0
        %379 = vmatpush.msra.mxu0 0.0
        %380 = vmatpush.msra.mxu0 0.0
        %381 = vmatpush.msra.mxu0 0.0
        %382 = vmatpush.msra.mxu0 0.0
        %383 = vmatpush.msra.mxu0 0.0
        %384 = vmatpush.msra.mxu0 0.0
        %385 = vmatpush.msra.mxu0 0.0
        %386 = vmatpush.msra.mxu0 0.0
        %387 = vmatpush.msra.mxu0 0.0
        %388 = vmatpush.msra.mxu0 0.0
        %389 = vmatpush.msra.mxu0 0.0
        %390 = vmatpush.msra.mxu0 %v348
        %391 = vmatpush.msra.mxu0 %v347
        %392 = vmatmul.f32.gmra.mxu0 %v374
        %v393 = vpop.f32.mrf.mxu0
        %v394 = vadd.f32 0.0, %v393
        %395 = vdwg.mxu0
        %v396 = vadd.f32 %v345, %v394
        %s397 = scalar_lea.vmem %s0, 64
        %v398 = vld [vmem:[%s397] sm:$0xff]
        %v399 = vld [vmem:[%s397 + $0x8] sm:$0xff]
        %v400 = vrot.slane %v191, 4
        %v401 = vsel %vm204, %v400, 0
        %403 = vmatpush.msra.mxu0 0.0
        %404 = vmatpush.msra.mxu0 0.0
        %405 = vmatpush.msra.mxu0 0.0
        %406 = vmatpush.msra.mxu0 0.0
        %407 = vmatpush.msra.mxu0 0.0
        %408 = vmatpush.msra.mxu0 0.0
        %409 = vmatpush.msra.mxu0 0.0
        %410 = vmatpush.msra.mxu0 0.0
        %411 = vmatpush.msra.mxu0 0.0
        %412 = vmatpush.msra.mxu0 0.0
        %413 = vmatpush.msra.mxu0 0.0
        %414 = vmatpush.msra.mxu0 0.0
        %415 = vmatpush.msra.mxu0 0.0
        %416 = vmatpush.msra.mxu0 0.0
        %417 = vmatpush.msra.mxu0 %v399
        %418 = vmatpush.msra.mxu0 %v398
        %419 = vmatmul.f32.gmra.mxu0 %v401
        %v420 = vpop.f32.mrf.mxu0
        %v421 = vadd.f32 0.0, %v420
        %422 = vdwg.mxu0
        %v423 = vadd.f32 %v372, %v421
        %v424 = vrot.slane %v195, 4
        %v425 = vsel %vm204, %v424, 0
        %427 = vmatpush.msra.mxu0 0.0
        %428 = vmatpush.msra.mxu0 0.0
        %429 = vmatpush.msra.mxu0 0.0
        %430 = vmatpush.msra.mxu0 0.0
        %431 = vmatpush.msra.mxu0 0.0
        %432 = vmatpush.msra.mxu0 0.0
        %433 = vmatpush.msra.mxu0 0.0
        %434 = vmatpush.msra.mxu0 0.0
        %435 = vmatpush.msra.mxu0 0.0
        %436 = vmatpush.msra.mxu0 0.0
        %437 = vmatpush.msra.mxu0 0.0
        %438 = vmatpush.msra.mxu0 0.0
        %439 = vmatpush.msra.mxu0 0.0
        %440 = vmatpush.msra.mxu0 0.0
        %441 = vmatpush.msra.mxu0 %v399
        %442 = vmatpush.msra.mxu0 %v398
        %443 = vmatmul.f32.gmra.mxu0 %v425
        %v444 = vpop.f32.mrf.mxu0
        %v445 = vadd.f32 0.0, %v444
        %446 = vdwg.mxu0
        %v447 = vadd.f32 %v396, %v445
        %s448 = scalar_lea.vmem %s0, 80
        %v449 = vld [vmem:[%s448] sm:$0xff]
        %v450 = vld [vmem:[%s448 + $0x8] sm:$0xff]
        %vm452 = vcmask 1042432
        %v453 = vrot.slane %v191, 5
        %v454 = vrot.slane %v192, 5
        %v455 = vsel %vm452, %v453, %v454
        %v456 = vsel %vm204, %v455, 0
        %458 = vmatpush.msra.mxu0 0.0
        %459 = vmatpush.msra.mxu0 0.0
        %460 = vmatpush.msra.mxu0 0.0
        %461 = vmatpush.msra.mxu0 0.0
        %462 = vmatpush.msra.mxu0 0.0
        %463 = vmatpush.msra.mxu0 0.0
        %464 = vmatpush.msra.mxu0 0.0
        %465 = vmatpush.msra.mxu0 0.0
        %466 = vmatpush.msra.mxu0 0.0
        %467 = vmatpush.msra.mxu0 0.0
        %468 = vmatpush.msra.mxu0 0.0
        %469 = vmatpush.msra.mxu0 0.0
        %470 = vmatpush.msra.mxu0 0.0
        %471 = vmatpush.msra.mxu0 0.0
        %472 = vmatpush.msra.mxu0 %v450
        %473 = vmatpush.msra.mxu0 %v449
        %474 = vmatmul.f32.gmra.mxu0 %v456
        %v475 = vpop.f32.mrf.mxu0
        %v476 = vadd.f32 0.0, %v475
        %477 = vdwg.mxu0
        %v478 = vadd.f32 %v423, %v476
        %v480 = vrot.slane %v195, 5
        %v481 = vrot.slane %v196, 5
        %v482 = vsel %vm452, %v480, %v481
        %v483 = vsel %vm204, %v482, 0
        %485 = vmatpush.msra.mxu0 0.0
        %486 = vmatpush.msra.mxu0 0.0
        %487 = vmatpush.msra.mxu0 0.0
        %488 = vmatpush.msra.mxu0 0.0
        %489 = vmatpush.msra.mxu0 0.0
        %490 = vmatpush.msra.mxu0 0.0
        %491 = vmatpush.msra.mxu0 0.0
        %492 = vmatpush.msra.mxu0 0.0
        %493 = vmatpush.msra.mxu0 0.0
        %494 = vmatpush.msra.mxu0 0.0
        %495 = vmatpush.msra.mxu0 0.0
        %496 = vmatpush.msra.mxu0 0.0
        %497 = vmatpush.msra.mxu0 0.0
        %498 = vmatpush.msra.mxu0 0.0
        %499 = vmatpush.msra.mxu0 %v450
        %500 = vmatpush.msra.mxu0 %v449
        %501 = vmatmul.f32.gmra.mxu0 %v483
        %v502 = vpop.f32.mrf.mxu0
        %v503 = vadd.f32 0.0, %v502
        %504 = vdwg.mxu0
        %v505 = vadd.f32 %v447, %v503
        %s506 = scalar_lea.vmem %s0, 96
        %v507 = vld [vmem:[%s506] sm:$0xff]
        %v508 = vld [vmem:[%s506 + $0x8] sm:$0xff]
        %vm509 = vcmask 1041408
        %v510 = vrot.slane %v191, 6
        %v511 = vrot.slane %v192, 6
        %v512 = vsel %vm509, %v510, %v511
        %v513 = vsel %vm204, %v512, 0
        %515 = vmatpush.msra.mxu0 0.0
        %516 = vmatpush.msra.mxu0 0.0
        %517 = vmatpush.msra.mxu0 0.0
        %518 = vmatpush.msra.mxu0 0.0
        %519 = vmatpush.msra.mxu0 0.0
        %520 = vmatpush.msra.mxu0 0.0
        %521 = vmatpush.msra.mxu0 0.0
        %522 = vmatpush.msra.mxu0 0.0
        %523 = vmatpush.msra.mxu0 0.0
        %524 = vmatpush.msra.mxu0 0.0
        %525 = vmatpush.msra.mxu0 0.0
        %526 = vmatpush.msra.mxu0 0.0
        %527 = vmatpush.msra.mxu0 0.0
        %528 = vmatpush.msra.mxu0 0.0
        %529 = vmatpush.msra.mxu0 %v508
        %530 = vmatpush.msra.mxu0 %v507
        %531 = vmatmul.f32.gmra.mxu0 %v513
        %v532 = vpop.f32.mrf.mxu0
        %v533 = vadd.f32 0.0, %v532
        %534 = vdwg.mxu0
        %v535 = vadd.f32 %v478, %v533
        %v536 = vrot.slane %v195, 6
        %v537 = vrot.slane %v196, 6
        %v538 = vsel %vm509, %v536, %v537
        %v539 = vsel %vm204, %v538, 0
        %541 = vmatpush.msra.mxu0 0.0
        %542 = vmatpush.msra.mxu0 0.0
        %543 = vmatpush.msra.mxu0 0.0
        %544 = vmatpush.msra.mxu0 0.0
        %545 = vmatpush.msra.mxu0 0.0
        %546 = vmatpush.msra.mxu0 0.0
        %547 = vmatpush.msra.mxu0 0.0
        %548 = vmatpush.msra.mxu0 0.0
        %549 = vmatpush.msra.mxu0 0.0
        %550 = vmatpush.msra.mxu0 0.0
        %551 = vmatpush.msra.mxu0 0.0
        %552 = vmatpush.msra.mxu0 0.0
        %553 = vmatpush.msra.mxu0 0.0
        %554 = vmatpush.msra.mxu0 0.0
        %555 = vmatpush.msra.mxu0 %v508
        %556 = vmatpush.msra.mxu0 %v507
        %557 = vmatmul.f32.gmra.mxu0 %v539
        %v558 = vpop.f32.mrf.mxu0
        %v559 = vadd.f32 0.0, %v558
        %560 = vdwg.mxu0
        %v561 = vadd.f32 %v505, %v559
        %s562 = scalar_lea.vmem %s0, 112
        %v563 = vld [vmem:[%s562] sm:$0xff]
        %v564 = vld [vmem:[%s562 + $0x8] sm:$0xff]
        %vm565 = vcmask 1040384
        %v566 = vrot.slane %v191, 7
        %v567 = vrot.slane %v192, 7
        %v568 = vsel %vm565, %v566, %v567
        %v569 = vsel %vm204, %v568, 0
        %571 = vmatpush.msra.mxu0 0.0
        %572 = vmatpush.msra.mxu0 0.0
        %573 = vmatpush.msra.mxu0 0.0
        %574 = vmatpush.msra.mxu0 0.0
        %575 = vmatpush.msra.mxu0 0.0
        %576 = vmatpush.msra.mxu0 0.0
        %577 = vmatpush.msra.mxu0 0.0
        %578 = vmatpush.msra.mxu0 0.0
        %579 = vmatpush.msra.mxu0 0.0
        %580 = vmatpush.msra.mxu0 0.0
        %581 = vmatpush.msra.mxu0 0.0
        %582 = vmatpush.msra.mxu0 0.0
        %583 = vmatpush.msra.mxu0 0.0
        %584 = vmatpush.msra.mxu0 0.0
        %585 = vmatpush.msra.mxu0 %v564
        %586 = vmatpush.msra.mxu0 %v563
        %587 = vmatmul.f32.gmra.mxu0 %v569
        %v588 = vpop.f32.mrf.mxu0
        %v589 = vadd.f32 0.0, %v588
        %590 = vdwg.mxu0
        %v591 = vadd.f32 %v535, %v589
        %v592 = vrot.slane %v195, 7
        %v593 = vrot.slane %v196, 7
        %v594 = vsel %vm565, %v592, %v593
        %v595 = vsel %vm204, %v594, 0
        %597 = vmatpush.msra.mxu0 0.0
        %598 = vmatpush.msra.mxu0 0.0
        %599 = vmatpush.msra.mxu0 0.0
        %600 = vmatpush.msra.mxu0 0.0
        %601 = vmatpush.msra.mxu0 0.0
        %602 = vmatpush.msra.mxu0 0.0
        %603 = vmatpush.msra.mxu0 0.0
        %604 = vmatpush.msra.mxu0 0.0
        %605 = vmatpush.msra.mxu0 0.0
        %606 = vmatpush.msra.mxu0 0.0
        %607 = vmatpush.msra.mxu0 0.0
        %608 = vmatpush.msra.mxu0 0.0
        %609 = vmatpush.msra.mxu0 0.0
        %610 = vmatpush.msra.mxu0 0.0
        %611 = vmatpush.msra.mxu0 %v564
        %612 = vmatpush.msra.mxu0 %v563
        %613 = vmatmul.f32.gmra.mxu0 %v595
        %v614 = vpop.f32.mrf.mxu0
        %v615 = vadd.f32 0.0, %v614
        %616 = vdwg.mxu0
        %v617 = vadd.f32 %v561, %v615
        %s618 = scalar_lea.vmem %s0, 128
        %v619 = vld [vmem:[%s618] sm:$0xff]
        %v620 = vld [vmem:[%s618 + $0x8] sm:$0xff]
        %v621 = vsel %vm204, %v192, 0
        %623 = vmatpush.msra.mxu0 0.0
        %624 = vmatpush.msra.mxu0 0.0
        %625 = vmatpush.msra.mxu0 0.0
        %626 = vmatpush.msra.mxu0 0.0
        %627 = vmatpush.msra.mxu0 0.0
        %628 = vmatpush.msra.mxu0 0.0
        %629 = vmatpush.msra.mxu0 0.0
        %630 = vmatpush.msra.mxu0 0.0
        %631 = vmatpush.msra.mxu0 0.0
        %632 = vmatpush.msra.mxu0 0.0
        %633 = vmatpush.msra.mxu0 0.0
        %634 = vmatpush.msra.mxu0 0.0
        %635 = vmatpush.msra.mxu0 0.0
        %636 = vmatpush.msra.mxu0 0.0
        %637 = vmatpush.msra.mxu0 %v620
        %638 = vmatpush.msra.mxu0 %v619
        %639 = vmatmul.f32.gmra.mxu0 %v621
        %v640 = vpop.f32.mrf.mxu0
        %v641 = vadd.f32 0.0, %v640
        %642 = vdwg.mxu0
        %v643 = vadd.f32 %v591, %v641
        %v644 = vsel %vm204, %v196, 0
        %646 = vmatpush.msra.mxu0 0.0
        %647 = vmatpush.msra.mxu0 0.0
        %648 = vmatpush.msra.mxu0 0.0
        %649 = vmatpush.msra.mxu0 0.0
        %650 = vmatpush.msra.mxu0 0.0
        %651 = vmatpush.msra.mxu0 0.0
        %652 = vmatpush.msra.mxu0 0.0
        %653 = vmatpush.msra.mxu0 0.0
        %654 = vmatpush.msra.mxu0 0.0
        %655 = vmatpush.msra.mxu0 0.0
        %656 = vmatpush.msra.mxu0 0.0
        %657 = vmatpush.msra.mxu0 0.0
        %658 = vmatpush.msra.mxu0 0.0
        %659 = vmatpush.msra.mxu0 0.0
        %660 = vmatpush.msra.mxu0 %v620
        %661 = vmatpush.msra.mxu0 %v619
        %662 = vmatmul.f32.gmra.mxu0 %v644
        %v663 = vpop.f32.mrf.mxu0
        %v664 = vadd.f32 0.0, %v663
        %665 = vdwg.mxu0
        %v666 = vadd.f32 %v617, %v664
        %s667 = scalar_lea.vmem %s0, 144
        %v668 = vld [vmem:[%s667] sm:$0xff]
        %v669 = vld [vmem:[%s667 + $0x8] sm:$0xff]
        %v670 = vrot.slane %v192, 1
        %v671 = vsel %vm204, %v670, 0
        %673 = vmatpush.msra.mxu0 0.0
        %674 = vmatpush.msra.mxu0 0.0
        %675 = vmatpush.msra.mxu0 0.0
        %676 = vmatpush.msra.mxu0 0.0
        %677 = vmatpush.msra.mxu0 0.0
        %678 = vmatpush.msra.mxu0 0.0
        %679 = vmatpush.msra.mxu0 0.0
        %680 = vmatpush.msra.mxu0 0.0
        %681 = vmatpush.msra.mxu0 0.0
        %682 = vmatpush.msra.mxu0 0.0
        %683 = vmatpush.msra.mxu0 0.0
        %684 = vmatpush.msra.mxu0 0.0
        %685 = vmatpush.msra.mxu0 0.0
        %686 = vmatpush.msra.mxu0 0.0
        %687 = vmatpush.msra.mxu0 %v669
        %688 = vmatpush.msra.mxu0 %v668
        %689 = vmatmul.f32.gmra.mxu0 %v671
        %v690 = vpop.f32.mrf.mxu0
        %v691 = vadd.f32 0.0, %v690
        %692 = vdwg.mxu0
        %v693 = vadd.f32 %v643, %v691
        %v694 = vrot.slane %v196, 1
        %v695 = vsel %vm204, %v694, 0
        %697 = vmatpush.msra.mxu0 0.0
        %698 = vmatpush.msra.mxu0 0.0
        %699 = vmatpush.msra.mxu0 0.0
        %700 = vmatpush.msra.mxu0 0.0
        %701 = vmatpush.msra.mxu0 0.0
        %702 = vmatpush.msra.mxu0 0.0
        %703 = vmatpush.msra.mxu0 0.0
        %704 = vmatpush.msra.mxu0 0.0
        %705 = vmatpush.msra.mxu0 0.0
        %706 = vmatpush.msra.mxu0 0.0
        %707 = vmatpush.msra.mxu0 0.0
        %708 = vmatpush.msra.mxu0 0.0
        %709 = vmatpush.msra.mxu0 0.0
        %710 = vmatpush.msra.mxu0 0.0
        %711 = vmatpush.msra.mxu0 %v669
        %712 = vmatpush.msra.mxu0 %v668
        %713 = vmatmul.f32.gmra.mxu0 %v695
        %v714 = vpop.f32.mrf.mxu0
        %v715 = vadd.f32 0.0, %v714
        %716 = vdwg.mxu0
        %v717 = vadd.f32 %v666, %v715
        %s718 = scalar_lea.vmem %s0, 160
        %v719 = vld [vmem:[%s718] sm:$0xff]
        %v720 = vld [vmem:[%s718 + $0x8] sm:$0xff]
        %v721 = vrot.slane %v192, 2
        %v722 = vsel %vm204, %v721, 0
        %724 = vmatpush.msra.mxu0 0.0
        %725 = vmatpush.msra.mxu0 0.0
        %726 = vmatpush.msra.mxu0 0.0
        %727 = vmatpush.msra.mxu0 0.0
        %728 = vmatpush.msra.mxu0 0.0
        %729 = vmatpush.msra.mxu0 0.0
        %730 = vmatpush.msra.mxu0 0.0
        %731 = vmatpush.msra.mxu0 0.0
        %732 = vmatpush.msra.mxu0 0.0
        %733 = vmatpush.msra.mxu0 0.0
        %734 = vmatpush.msra.mxu0 0.0
        %735 = vmatpush.msra.mxu0 0.0
        %736 = vmatpush.msra.mxu0 0.0
        %737 = vmatpush.msra.mxu0 0.0
        %738 = vmatpush.msra.mxu0 %v720
        %739 = vmatpush.msra.mxu0 %v719
        %740 = vmatmul.f32.gmra.mxu0 %v722
        %v741 = vpop.f32.mrf.mxu0
        %v742 = vadd.f32 0.0, %v741
        %743 = vdwg.mxu0
        %v744 = vadd.f32 %v693, %v742
        %v745 = vrot.slane %v196, 2
        %v746 = vsel %vm204, %v745, 0
        %748 = vmatpush.msra.mxu0 0.0
        %749 = vmatpush.msra.mxu0 0.0
        %750 = vmatpush.msra.mxu0 0.0
        %751 = vmatpush.msra.mxu0 0.0
        %752 = vmatpush.msra.mxu0 0.0
        %753 = vmatpush.msra.mxu0 0.0
        %754 = vmatpush.msra.mxu0 0.0
        %755 = vmatpush.msra.mxu0 0.0
        %756 = vmatpush.msra.mxu0 0.0
        %757 = vmatpush.msra.mxu0 0.0
        %758 = vmatpush.msra.mxu0 0.0
        %759 = vmatpush.msra.mxu0 0.0
        %760 = vmatpush.msra.mxu0 0.0
        %761 = vmatpush.msra.mxu0 0.0
        %762 = vmatpush.msra.mxu0 %v720
        %763 = vmatpush.msra.mxu0 %v719
        %764 = vmatmul.f32.gmra.mxu0 %v746
        %v765 = vpop.f32.mrf.mxu0
        %v766 = vadd.f32 0.0, %v765
        %767 = vdwg.mxu0
        %v768 = vadd.f32 %v717, %v766
        %s769 = scalar_lea.vmem %s0, 176
        %v770 = vld [vmem:[%s769] sm:$0xff]
        %v771 = vld [vmem:[%s769 + $0x8] sm:$0xff]
        %v772 = vrot.slane %v192, 3
        %v773 = vsel %vm204, %v772, 0
        %775 = vmatpush.msra.mxu0 0.0
        %776 = vmatpush.msra.mxu0 0.0
        %777 = vmatpush.msra.mxu0 0.0
        %778 = vmatpush.msra.mxu0 0.0
        %779 = vmatpush.msra.mxu0 0.0
        %780 = vmatpush.msra.mxu0 0.0
        %781 = vmatpush.msra.mxu0 0.0
        %782 = vmatpush.msra.mxu0 0.0
        %783 = vmatpush.msra.mxu0 0.0
        %784 = vmatpush.msra.mxu0 0.0
        %785 = vmatpush.msra.mxu0 0.0
        %786 = vmatpush.msra.mxu0 0.0
        %787 = vmatpush.msra.mxu0 0.0
        %788 = vmatpush.msra.mxu0 0.0
        %789 = vmatpush.msra.mxu0 %v771
        %790 = vmatpush.msra.mxu0 %v770
        %791 = vmatmul.f32.gmra.mxu0 %v773
        %v792 = vpop.f32.mrf.mxu0
        %v793 = vadd.f32 0.0, %v792
        %794 = vdwg.mxu0
        %v795 = vadd.f32 %v744, %v793
        %v796 = vrot.slane %v196, 3
        %v797 = vsel %vm204, %v796, 0
        %799 = vmatpush.msra.mxu0 0.0
        %800 = vmatpush.msra.mxu0 0.0
        %801 = vmatpush.msra.mxu0 0.0
        %802 = vmatpush.msra.mxu0 0.0
        %803 = vmatpush.msra.mxu0 0.0
        %804 = vmatpush.msra.mxu0 0.0
        %805 = vmatpush.msra.mxu0 0.0
        %806 = vmatpush.msra.mxu0 0.0
        %807 = vmatpush.msra.mxu0 0.0
        %808 = vmatpush.msra.mxu0 0.0
        %809 = vmatpush.msra.mxu0 0.0
        %810 = vmatpush.msra.mxu0 0.0
        %811 = vmatpush.msra.mxu0 0.0
        %812 = vmatpush.msra.mxu0 0.0
        %813 = vmatpush.msra.mxu0 %v771
        %814 = vmatpush.msra.mxu0 %v770
        %815 = vmatmul.f32.gmra.mxu0 %v797
        %v816 = vpop.f32.mrf.mxu0
        %v817 = vadd.f32 0.0, %v816
        %818 = vdwg.mxu0
        %v819 = vadd.f32 %v768, %v817
        %s820 = scalar_lea.vmem %s0, 192
        %v821 = vld [vmem:[%s820] sm:$0xff]
        %v822 = vld [vmem:[%s820 + $0x8] sm:$0xff]
        %v823 = vrot.slane %v192, 4
        %v824 = vsel %vm204, %v823, 0
        %826 = vmatpush.msra.mxu0 0.0
        %827 = vmatpush.msra.mxu0 0.0
        %828 = vmatpush.msra.mxu0 0.0
        %829 = vmatpush.msra.mxu0 0.0
        %830 = vmatpush.msra.mxu0 0.0
        %831 = vmatpush.msra.mxu0 0.0
        %832 = vmatpush.msra.mxu0 0.0
        %833 = vmatpush.msra.mxu0 0.0
        %834 = vmatpush.msra.mxu0 0.0
        %835 = vmatpush.msra.mxu0 0.0
        %836 = vmatpush.msra.mxu0 0.0
        %837 = vmatpush.msra.mxu0 0.0
        %838 = vmatpush.msra.mxu0 0.0
        %839 = vmatpush.msra.mxu0 0.0
        %840 = vmatpush.msra.mxu0 %v822
        %841 = vmatpush.msra.mxu0 %v821
        %842 = vmatmul.f32.gmra.mxu0 %v824
        %v843 = vpop.f32.mrf.mxu0
        %v844 = vadd.f32 0.0, %v843
        %845 = vdwg.mxu0
        %v846 = vadd.f32 %v795, %v844
        %v847 = vrot.slane %v196, 4
        %v848 = vsel %vm204, %v847, 0
        %850 = vmatpush.msra.mxu0 0.0
        %851 = vmatpush.msra.mxu0 0.0
        %852 = vmatpush.msra.mxu0 0.0
        %853 = vmatpush.msra.mxu0 0.0
        %854 = vmatpush.msra.mxu0 0.0
        %855 = vmatpush.msra.mxu0 0.0
        %856 = vmatpush.msra.mxu0 0.0
        %857 = vmatpush.msra.mxu0 0.0
        %858 = vmatpush.msra.mxu0 0.0
        %859 = vmatpush.msra.mxu0 0.0
        %860 = vmatpush.msra.mxu0 0.0
        %861 = vmatpush.msra.mxu0 0.0
        %862 = vmatpush.msra.mxu0 0.0
        %863 = vmatpush.msra.mxu0 0.0
        %864 = vmatpush.msra.mxu0 %v822
        %865 = vmatpush.msra.mxu0 %v821
        %866 = vmatmul.f32.gmra.mxu0 %v848
        %v867 = vpop.f32.mrf.mxu0
        %v868 = vadd.f32 0.0, %v867
        %869 = vdwg.mxu0
        %v870 = vadd.f32 %v819, %v868
        %v871 = vsub.f32 %v846, %v870
        %v872 = vmul.f32 %v871, %v871
        %vm873 = vcmask 27648
        %v874 = vsel %vm873, %v872, 0.0
        %875 = vadd.xlane.f32.xlu0 %v874
        %v876 = vpop.xlane.xlu0 %875
        %v877 = vrot.slane %v876, 4
        %v878 = vadd.f32 %v876, %v877
        %v879 = vrot.slane %v878, 2
        %v880 = vadd.f32 %v878, %v879
        %v881 = vrot.slane %v880, 1
        %v882 = vadd.f32 %v880, %v881
        %s883 = vtos %v882
        %s884 = sadd.f32 %s883, 0.0
        %v885 = vmul.f32 %v846, %v846
        %v886 = vsel %vm873, %v885, 0.0
        %887 = vadd.xlane.f32.xlu0 %v886
        %v888 = vpop.xlane.xlu0 %887
        %v889 = vrot.slane %v888, 4
        %v890 = vadd.f32 %v888, %v889
        %v891 = vrot.slane %v890, 2
        %v892 = vadd.f32 %v890, %v891
        %v893 = vrot.slane %v892, 1
        %v894 = vadd.f32 %v892, %v893
        %s895 = vtos %v894
        %s896 = sadd.f32 %s895, 0.0
        %s897 = scalar_lea.vmem %s183, 16
        %v898 = vld [vmem:[%s897] sm:$0xff]
        %v899 = vld [vmem:[%s897 + $0x8] sm:$0xff]
        %v900 = vand.u32 2147483647, %v898
        %v901 = vand.u32 2147483647, %v899
        %s902 = scalar_lea.vmem %s188, 16
        %v903 = vld [vmem:[%s902] sm:$0xff]
        %v904 = vld [vmem:[%s902 + $0x8] sm:$0xff]
        %v905 = vand.u32 2147483647, %v903
        %v906 = vand.u32 2147483647, %v904
        %v908 = vrot.slane %v900, 1
        %v909 = vsel %vm204, %v908, 0
        %911 = vmatpush.msra.mxu0 0.0
        %912 = vmatpush.msra.mxu0 0.0
        %913 = vmatpush.msra.mxu0 0.0
        %914 = vmatpush.msra.mxu0 0.0
        %915 = vmatpush.msra.mxu0 0.0
        %916 = vmatpush.msra.mxu0 0.0
        %917 = vmatpush.msra.mxu0 0.0
        %918 = vmatpush.msra.mxu0 0.0
        %919 = vmatpush.msra.mxu0 0.0
        %920 = vmatpush.msra.mxu0 0.0
        %921 = vmatpush.msra.mxu0 0.0
        %922 = vmatpush.msra.mxu0 0.0
        %923 = vmatpush.msra.mxu0 0.0
        %924 = vmatpush.msra.mxu0 0.0
        %925 = vmatpush.msra.mxu0 %v201
        %926 = vmatpush.msra.mxu0 %v200
        %927 = vmatmul.f32.gmra.mxu0 %v909
        %v928 = vpop.f32.mrf.mxu0
        %v929 = vadd.f32 0.0, %v928
        %930 = vdwg.mxu0
        %v931 = vsel %vm204, %v900, 0
        %933 = vmatpush.msra.mxu0 0.0
        %934 = vmatpush.msra.mxu0 0.0
        %935 = vmatpush.msra.mxu0 0.0
        %936 = vmatpush.msra.mxu0 0.0
        %937 = vmatpush.msra.mxu0 0.0
        %938 = vmatpush.msra.mxu0 0.0
        %939 = vmatpush.msra.mxu0 0.0
        %940 = vmatpush.msra.mxu0 0.0
        %941 = vmatpush.msra.mxu0 0.0
        %942 = vmatpush.msra.mxu0 0.0
        %943 = vmatpush.msra.mxu0 0.0
        %944 = vmatpush.msra.mxu0 0.0
        %945 = vmatpush.msra.mxu0 0.0
        %946 = vmatpush.msra.mxu0 0.0
        %947 = vmatpush.msra.mxu0 %v198
        %948 = vmatpush.msra.mxu0 %v197
        %949 = vmatmul.f32.gmra.mxu0 %v931
        %v950 = vpop.f32.mrf.mxu0
        %v951 = vadd.f32 %v929, %v950
        %952 = vdwg.mxu0
        %v954 = vrot.slane %v905, 1
        %v955 = vsel %vm204, %v954, 0
        %957 = vmatpush.msra.mxu0 0.0
        %958 = vmatpush.msra.mxu0 0.0
        %959 = vmatpush.msra.mxu0 0.0
        %960 = vmatpush.msra.mxu0 0.0
        %961 = vmatpush.msra.mxu0 0.0
        %962 = vmatpush.msra.mxu0 0.0
        %963 = vmatpush.msra.mxu0 0.0
        %964 = vmatpush.msra.mxu0 0.0
        %965 = vmatpush.msra.mxu0 0.0
        %966 = vmatpush.msra.mxu0 0.0
        %967 = vmatpush.msra.mxu0 0.0
        %968 = vmatpush.msra.mxu0 0.0
        %969 = vmatpush.msra.mxu0 0.0
        %970 = vmatpush.msra.mxu0 0.0
        %971 = vmatpush.msra.mxu0 %v201
        %972 = vmatpush.msra.mxu0 %v200
        %973 = vmatmul.f32.gmra.mxu0 %v955
        %v974 = vpop.f32.mrf.mxu0
        %v975 = vadd.f32 0.0, %v974
        %976 = vdwg.mxu0
        %v977 = vsel %vm204, %v905, 0
        %979 = vmatpush.msra.mxu0 0.0
        %980 = vmatpush.msra.mxu0 0.0
        %981 = vmatpush.msra.mxu0 0.0
        %982 = vmatpush.msra.mxu0 0.0
        %983 = vmatpush.msra.mxu0 0.0
        %984 = vmatpush.msra.mxu0 0.0
        %985 = vmatpush.msra.mxu0 0.0
        %986 = vmatpush.msra.mxu0 0.0
        %987 = vmatpush.msra.mxu0 0.0
        %988 = vmatpush.msra.mxu0 0.0
        %989 = vmatpush.msra.mxu0 0.0
        %990 = vmatpush.msra.mxu0 0.0
        %991 = vmatpush.msra.mxu0 0.0
        %992 = vmatpush.msra.mxu0 0.0
        %993 = vmatpush.msra.mxu0 %v198
        %994 = vmatpush.msra.mxu0 %v197
        %995 = vmatmul.f32.gmra.mxu0 %v977
        %v996 = vpop.f32.mrf.mxu0
        %v997 = vadd.f32 %v975, %v996
        %998 = vdwg.mxu0
        %v999 = vrot.slane %v900, 2
        %v1000 = vsel %vm204, %v999, 0
        %1002 = vmatpush.msra.mxu0 0.0
        %1003 = vmatpush.msra.mxu0 0.0
        %1004 = vmatpush.msra.mxu0 0.0
        %1005 = vmatpush.msra.mxu0 0.0
        %1006 = vmatpush.msra.mxu0 0.0
        %1007 = vmatpush.msra.mxu0 0.0
        %1008 = vmatpush.msra.mxu0 0.0
        %1009 = vmatpush.msra.mxu0 0.0
        %1010 = vmatpush.msra.mxu0 0.0
        %1011 = vmatpush.msra.mxu0 0.0
        %1012 = vmatpush.msra.mxu0 0.0
        %1013 = vmatpush.msra.mxu0 0.0
        %1014 = vmatpush.msra.mxu0 0.0
        %1015 = vmatpush.msra.mxu0 0.0
        %1016 = vmatpush.msra.mxu0 %v297
        %1017 = vmatpush.msra.mxu0 %v296
        %1018 = vmatmul.f32.gmra.mxu0 %v1000
        %v1019 = vpop.f32.mrf.mxu0
        %v1020 = vadd.f32 0.0, %v1019
        %1021 = vdwg.mxu0
        %v1022 = vadd.f32 %v951, %v1020
        %v1023 = vrot.slane %v905, 2
        %v1024 = vsel %vm204, %v1023, 0
        %1026 = vmatpush.msra.mxu0 0.0
        %1027 = vmatpush.msra.mxu0 0.0
        %1028 = vmatpush.msra.mxu0 0.0
        %1029 = vmatpush.msra.mxu0 0.0
        %1030 = vmatpush.msra.mxu0 0.0
        %1031 = vmatpush.msra.mxu0 0.0
        %1032 = vmatpush.msra.mxu0 0.0
        %1033 = vmatpush.msra.mxu0 0.0
        %1034 = vmatpush.msra.mxu0 0.0
        %1035 = vmatpush.msra.mxu0 0.0
        %1036 = vmatpush.msra.mxu0 0.0
        %1037 = vmatpush.msra.mxu0 0.0
        %1038 = vmatpush.msra.mxu0 0.0
        %1039 = vmatpush.msra.mxu0 0.0
        %1040 = vmatpush.msra.mxu0 %v297
        %1041 = vmatpush.msra.mxu0 %v296
        %1042 = vmatmul.f32.gmra.mxu0 %v1024
        %v1043 = vpop.f32.mrf.mxu0
        %v1044 = vadd.f32 0.0, %v1043
        %1045 = vdwg.mxu0
        %v1046 = vadd.f32 %v997, %v1044
        %v1047 = vrot.slane %v900, 3
        %v1048 = vsel %vm204, %v1047, 0
        %1050 = vmatpush.msra.mxu0 0.0
        %1051 = vmatpush.msra.mxu0 0.0
        %1052 = vmatpush.msra.mxu0 0.0
        %1053 = vmatpush.msra.mxu0 0.0
        %1054 = vmatpush.msra.mxu0 0.0
        %1055 = vmatpush.msra.mxu0 0.0
        %1056 = vmatpush.msra.mxu0 0.0
        %1057 = vmatpush.msra.mxu0 0.0
        %1058 = vmatpush.msra.mxu0 0.0
        %1059 = vmatpush.msra.mxu0 0.0
        %1060 = vmatpush.msra.mxu0 0.0
        %1061 = vmatpush.msra.mxu0 0.0
        %1062 = vmatpush.msra.mxu0 0.0
        %1063 = vmatpush.msra.mxu0 0.0
        %1064 = vmatpush.msra.mxu0 %v348
        %1065 = vmatpush.msra.mxu0 %v347
        %1066 = vmatmul.f32.gmra.mxu0 %v1048
        %v1067 = vpop.f32.mrf.mxu0
        %v1068 = vadd.f32 0.0, %v1067
        %1069 = vdwg.mxu0
        %v1070 = vadd.f32 %v1022, %v1068
        %v1071 = vrot.slane %v905, 3
        %v1072 = vsel %vm204, %v1071, 0
        %1074 = vmatpush.msra.mxu0 0.0
        %1075 = vmatpush.msra.mxu0 0.0
        %1076 = vmatpush.msra.mxu0 0.0
        %1077 = vmatpush.msra.mxu0 0.0
        %1078 = vmatpush.msra.mxu0 0.0
        %1079 = vmatpush.msra.mxu0 0.0
        %1080 = vmatpush.msra.mxu0 0.0
        %1081 = vmatpush.msra.mxu0 0.0
        %1082 = vmatpush.msra.mxu0 0.0
        %1083 = vmatpush.msra.mxu0 0.0
        %1084 = vmatpush.msra.mxu0 0.0
        %1085 = vmatpush.msra.mxu0 0.0
        %1086 = vmatpush.msra.mxu0 0.0
        %1087 = vmatpush.msra.mxu0 0.0
        %1088 = vmatpush.msra.mxu0 %v348
        %1089 = vmatpush.msra.mxu0 %v347
        %1090 = vmatmul.f32.gmra.mxu0 %v1072
        %v1091 = vpop.f32.mrf.mxu0
        %v1092 = vadd.f32 0.0, %v1091
        %1093 = vdwg.mxu0
        %v1094 = vadd.f32 %v1046, %v1092
        %v1095 = vrot.slane %v900, 4
        %v1096 = vsel %vm204, %v1095, 0
        %1098 = vmatpush.msra.mxu0 0.0
        %1099 = vmatpush.msra.mxu0 0.0
        %1100 = vmatpush.msra.mxu0 0.0
        %1101 = vmatpush.msra.mxu0 0.0
        %1102 = vmatpush.msra.mxu0 0.0
        %1103 = vmatpush.msra.mxu0 0.0
        %1104 = vmatpush.msra.mxu0 0.0
        %1105 = vmatpush.msra.mxu0 0.0
        %1106 = vmatpush.msra.mxu0 0.0
        %1107 = vmatpush.msra.mxu0 0.0
        %1108 = vmatpush.msra.mxu0 0.0
        %1109 = vmatpush.msra.mxu0 0.0
        %1110 = vmatpush.msra.mxu0 0.0
        %1111 = vmatpush.msra.mxu0 0.0
        %1112 = vmatpush.msra.mxu0 %v399
        %1113 = vmatpush.msra.mxu0 %v398
        %1114 = vmatmul.f32.gmra.mxu0 %v1096
        %v1115 = vpop.f32.mrf.mxu0
        %v1116 = vadd.f32 0.0, %v1115
        %1117 = vdwg.mxu0
        %v1118 = vadd.f32 %v1070, %v1116
        %v1119 = vrot.slane %v905, 4
        %v1120 = vsel %vm204, %v1119, 0
        %1122 = vmatpush.msra.mxu0 0.0
        %1123 = vmatpush.msra.mxu0 0.0
        %1124 = vmatpush.msra.mxu0 0.0
        %1125 = vmatpush.msra.mxu0 0.0
        %1126 = vmatpush.msra.mxu0 0.0
        %1127 = vmatpush.msra.mxu0 0.0
        %1128 = vmatpush.msra.mxu0 0.0
        %1129 = vmatpush.msra.mxu0 0.0
        %1130 = vmatpush.msra.mxu0 0.0
        %1131 = vmatpush.msra.mxu0 0.0
        %1132 = vmatpush.msra.mxu0 0.0
        %1133 = vmatpush.msra.mxu0 0.0
        %1134 = vmatpush.msra.mxu0 0.0
        %1135 = vmatpush.msra.mxu0 0.0
        %1136 = vmatpush.msra.mxu0 %v399
        %1137 = vmatpush.msra.mxu0 %v398
        %1138 = vmatmul.f32.gmra.mxu0 %v1120
        %v1139 = vpop.f32.mrf.mxu0
        %v1140 = vadd.f32 0.0, %v1139
        %1141 = vdwg.mxu0
        %v1142 = vadd.f32 %v1094, %v1140
        %v1144 = vrot.slane %v900, 5
        %v1145 = vrot.slane %v901, 5
        %v1146 = vsel %vm452, %v1144, %v1145
        %v1147 = vsel %vm204, %v1146, 0
        %1149 = vmatpush.msra.mxu0 0.0
        %1150 = vmatpush.msra.mxu0 0.0
        %1151 = vmatpush.msra.mxu0 0.0
        %1152 = vmatpush.msra.mxu0 0.0
        %1153 = vmatpush.msra.mxu0 0.0
        %1154 = vmatpush.msra.mxu0 0.0
        %1155 = vmatpush.msra.mxu0 0.0
        %1156 = vmatpush.msra.mxu0 0.0
        %1157 = vmatpush.msra.mxu0 0.0
        %1158 = vmatpush.msra.mxu0 0.0
        %1159 = vmatpush.msra.mxu0 0.0
        %1160 = vmatpush.msra.mxu0 0.0
        %1161 = vmatpush.msra.mxu0 0.0
        %1162 = vmatpush.msra.mxu0 0.0
        %1163 = vmatpush.msra.mxu0 %v450
        %1164 = vmatpush.msra.mxu0 %v449
        %1165 = vmatmul.f32.gmra.mxu0 %v1147
        %v1166 = vpop.f32.mrf.mxu0
        %v1167 = vadd.f32 0.0, %v1166
        %1168 = vdwg.mxu0
        %v1169 = vadd.f32 %v1118, %v1167
        %v1171 = vrot.slane %v905, 5
        %v1172 = vrot.slane %v906, 5
        %v1173 = vsel %vm452, %v1171, %v1172
        %v1174 = vsel %vm204, %v1173, 0
        %1176 = vmatpush.msra.mxu0 0.0
        %1177 = vmatpush.msra.mxu0 0.0
        %1178 = vmatpush.msra.mxu0 0.0
        %1179 = vmatpush.msra.mxu0 0.0
        %1180 = vmatpush.msra.mxu0 0.0
        %1181 = vmatpush.msra.mxu0 0.0
        %1182 = vmatpush.msra.mxu0 0.0
        %1183 = vmatpush.msra.mxu0 0.0
        %1184 = vmatpush.msra.mxu0 0.0
        %1185 = vmatpush.msra.mxu0 0.0
        %1186 = vmatpush.msra.mxu0 0.0
        %1187 = vmatpush.msra.mxu0 0.0
        %1188 = vmatpush.msra.mxu0 0.0
        %1189 = vmatpush.msra.mxu0 0.0
        %1190 = vmatpush.msra.mxu0 %v450
        %1191 = vmatpush.msra.mxu0 %v449
        %1192 = vmatmul.f32.gmra.mxu0 %v1174
        %v1193 = vpop.f32.mrf.mxu0
        %v1194 = vadd.f32 0.0, %v1193
        %1195 = vdwg.mxu0
        %v1196 = vadd.f32 %v1142, %v1194
        %v1197 = vrot.slane %v900, 6
        %v1198 = vrot.slane %v901, 6
        %v1199 = vsel %vm509, %v1197, %v1198
        %v1200 = vsel %vm204, %v1199, 0
        %1202 = vmatpush.msra.mxu0 0.0
        %1203 = vmatpush.msra.mxu0 0.0
        %1204 = vmatpush.msra.mxu0 0.0
        %1205 = vmatpush.msra.mxu0 0.0
        %1206 = vmatpush.msra.mxu0 0.0
        %1207 = vmatpush.msra.mxu0 0.0
        %1208 = vmatpush.msra.mxu0 0.0
        %1209 = vmatpush.msra.mxu0 0.0
        %1210 = vmatpush.msra.mxu0 0.0
        %1211 = vmatpush.msra.mxu0 0.0
        %1212 = vmatpush.msra.mxu0 0.0
        %1213 = vmatpush.msra.mxu0 0.0
        %1214 = vmatpush.msra.mxu0 0.0
        %1215 = vmatpush.msra.mxu0 0.0
        %1216 = vmatpush.msra.mxu0 %v508
        %1217 = vmatpush.msra.mxu0 %v507
        %1218 = vmatmul.f32.gmra.mxu0 %v1200
        %v1219 = vpop.f32.mrf.mxu0
        %v1220 = vadd.f32 0.0, %v1219
        %1221 = vdwg.mxu0
        %v1222 = vadd.f32 %v1169, %v1220
        %v1223 = vrot.slane %v905, 6
        %v1224 = vrot.slane %v906, 6
        %v1225 = vsel %vm509, %v1223, %v1224
        %v1226 = vsel %vm204, %v1225, 0
        %1228 = vmatpush.msra.mxu0 0.0
        %1229 = vmatpush.msra.mxu0 0.0
        %1230 = vmatpush.msra.mxu0 0.0
        %1231 = vmatpush.msra.mxu0 0.0
        %1232 = vmatpush.msra.mxu0 0.0
        %1233 = vmatpush.msra.mxu0 0.0
        %1234 = vmatpush.msra.mxu0 0.0
        %1235 = vmatpush.msra.mxu0 0.0
        %1236 = vmatpush.msra.mxu0 0.0
        %1237 = vmatpush.msra.mxu0 0.0
        %1238 = vmatpush.msra.mxu0 0.0
        %1239 = vmatpush.msra.mxu0 0.0
        %1240 = vmatpush.msra.mxu0 0.0
        %1241 = vmatpush.msra.mxu0 0.0
        %1242 = vmatpush.msra.mxu0 %v508
        %1243 = vmatpush.msra.mxu0 %v507
        %1244 = vmatmul.f32.gmra.mxu0 %v1226
        %v1245 = vpop.f32.mrf.mxu0
        %v1246 = vadd.f32 0.0, %v1245
        %1247 = vdwg.mxu0
        %v1248 = vadd.f32 %v1196, %v1246
        %v1249 = vrot.slane %v900, 7
        %v1250 = vrot.slane %v901, 7
        %v1251 = vsel %vm565, %v1249, %v1250
        %v1252 = vsel %vm204, %v1251, 0
        %1254 = vmatpush.msra.mxu0 0.0
        %1255 = vmatpush.msra.mxu0 0.0
        %1256 = vmatpush.msra.mxu0 0.0
        %1257 = vmatpush.msra.mxu0 0.0
        %1258 = vmatpush.msra.mxu0 0.0
        %1259 = vmatpush.msra.mxu0 0.0
        %1260 = vmatpush.msra.mxu0 0.0
        %1261 = vmatpush.msra.mxu0 0.0
        %1262 = vmatpush.msra.mxu0 0.0
        %1263 = vmatpush.msra.mxu0 0.0
        %1264 = vmatpush.msra.mxu0 0.0
        %1265 = vmatpush.msra.mxu0 0.0
        %1266 = vmatpush.msra.mxu0 0.0
        %1267 = vmatpush.msra.mxu0 0.0
        %1268 = vmatpush.msra.mxu0 %v564
        %1269 = vmatpush.msra.mxu0 %v563
        %1270 = vmatmul.f32.gmra.mxu0 %v1252
        %v1271 = vpop.f32.mrf.mxu0
        %v1272 = vadd.f32 0.0, %v1271
        %1273 = vdwg.mxu0
        %v1274 = vadd.f32 %v1222, %v1272
        %v1275 = vrot.slane %v905, 7
        %v1276 = vrot.slane %v906, 7
        %v1277 = vsel %vm565, %v1275, %v1276
        %v1278 = vsel %vm204, %v1277, 0
        %1280 = vmatpush.msra.mxu0 0.0
        %1281 = vmatpush.msra.mxu0 0.0
        %1282 = vmatpush.msra.mxu0 0.0
        %1283 = vmatpush.msra.mxu0 0.0
        %1284 = vmatpush.msra.mxu0 0.0
        %1285 = vmatpush.msra.mxu0 0.0
        %1286 = vmatpush.msra.mxu0 0.0
        %1287 = vmatpush.msra.mxu0 0.0
        %1288 = vmatpush.msra.mxu0 0.0
        %1289 = vmatpush.msra.mxu0 0.0
        %1290 = vmatpush.msra.mxu0 0.0
        %1291 = vmatpush.msra.mxu0 0.0
        %1292 = vmatpush.msra.mxu0 0.0
        %1293 = vmatpush.msra.mxu0 0.0
        %1294 = vmatpush.msra.mxu0 %v564
        %1295 = vmatpush.msra.mxu0 %v563
        %1296 = vmatmul.f32.gmra.mxu0 %v1278
        %v1297 = vpop.f32.mrf.mxu0
        %v1298 = vadd.f32 0.0, %v1297
        %1299 = vdwg.mxu0
        %v1300 = vadd.f32 %v1248, %v1298
        %v1301 = vsel %vm204, %v901, 0
        %1303 = vmatpush.msra.mxu0 0.0
        %1304 = vmatpush.msra.mxu0 0.0
        %1305 = vmatpush.msra.mxu0 0.0
        %1306 = vmatpush.msra.mxu0 0.0
        %1307 = vmatpush.msra.mxu0 0.0
        %1308 = vmatpush.msra.mxu0 0.0
        %1309 = vmatpush.msra.mxu0 0.0
        %1310 = vmatpush.msra.mxu0 0.0
        %1311 = vmatpush.msra.mxu0 0.0
        %1312 = vmatpush.msra.mxu0 0.0
        %1313 = vmatpush.msra.mxu0 0.0
        %1314 = vmatpush.msra.mxu0 0.0
        %1315 = vmatpush.msra.mxu0 0.0
        %1316 = vmatpush.msra.mxu0 0.0
        %1317 = vmatpush.msra.mxu0 %v620
        %1318 = vmatpush.msra.mxu0 %v619
        %1319 = vmatmul.f32.gmra.mxu0 %v1301
        %v1320 = vpop.f32.mrf.mxu0
        %v1321 = vadd.f32 0.0, %v1320
        %1322 = vdwg.mxu0
        %v1323 = vadd.f32 %v1274, %v1321
        %v1324 = vsel %vm204, %v906, 0
        %1326 = vmatpush.msra.mxu0 0.0
        %1327 = vmatpush.msra.mxu0 0.0
        %1328 = vmatpush.msra.mxu0 0.0
        %1329 = vmatpush.msra.mxu0 0.0
        %1330 = vmatpush.msra.mxu0 0.0
        %1331 = vmatpush.msra.mxu0 0.0
        %1332 = vmatpush.msra.mxu0 0.0
        %1333 = vmatpush.msra.mxu0 0.0
        %1334 = vmatpush.msra.mxu0 0.0
        %1335 = vmatpush.msra.mxu0 0.0
        %1336 = vmatpush.msra.mxu0 0.0
        %1337 = vmatpush.msra.mxu0 0.0
        %1338 = vmatpush.msra.mxu0 0.0
        %1339 = vmatpush.msra.mxu0 0.0
        %1340 = vmatpush.msra.mxu0 %v620
        %1341 = vmatpush.msra.mxu0 %v619
        %1342 = vmatmul.f32.gmra.mxu0 %v1324
        %v1343 = vpop.f32.mrf.mxu0
        %v1344 = vadd.f32 0.0, %v1343
        %1345 = vdwg.mxu0
        %v1346 = vadd.f32 %v1300, %v1344
        %v1347 = vrot.slane %v901, 1
        %v1348 = vsel %vm204, %v1347, 0
        %1350 = vmatpush.msra.mxu0 0.0
        %1351 = vmatpush.msra.mxu0 0.0
        %1352 = vmatpush.msra.mxu0 0.0
        %1353 = vmatpush.msra.mxu0 0.0
        %1354 = vmatpush.msra.mxu0 0.0
        %1355 = vmatpush.msra.mxu0 0.0
        %1356 = vmatpush.msra.mxu0 0.0
        %1357 = vmatpush.msra.mxu0 0.0
        %1358 = vmatpush.msra.mxu0 0.0
        %1359 = vmatpush.msra.mxu0 0.0
        %1360 = vmatpush.msra.mxu0 0.0
        %1361 = vmatpush.msra.mxu0 0.0
        %1362 = vmatpush.msra.mxu0 0.0
        %1363 = vmatpush.msra.mxu0 0.0
        %1364 = vmatpush.msra.mxu0 %v669
        %1365 = vmatpush.msra.mxu0 %v668
        %1366 = vmatmul.f32.gmra.mxu0 %v1348
        %v1367 = vpop.f32.mrf.mxu0
        %v1368 = vadd.f32 0.0, %v1367
        %1369 = vdwg.mxu0
        %v1370 = vadd.f32 %v1323, %v1368
        %v1371 = vrot.slane %v906, 1
        %v1372 = vsel %vm204, %v1371, 0
        %1374 = vmatpush.msra.mxu0 0.0
        %1375 = vmatpush.msra.mxu0 0.0
        %1376 = vmatpush.msra.mxu0 0.0
        %1377 = vmatpush.msra.mxu0 0.0
        %1378 = vmatpush.msra.mxu0 0.0
        %1379 = vmatpush.msra.mxu0 0.0
        %1380 = vmatpush.msra.mxu0 0.0
        %1381 = vmatpush.msra.mxu0 0.0
        %1382 = vmatpush.msra.mxu0 0.0
        %1383 = vmatpush.msra.mxu0 0.0
        %1384 = vmatpush.msra.mxu0 0.0
        %1385 = vmatpush.msra.mxu0 0.0
        %1386 = vmatpush.msra.mxu0 0.0
        %1387 = vmatpush.msra.mxu0 0.0
        %1388 = vmatpush.msra.mxu0 %v669
        %1389 = vmatpush.msra.mxu0 %v668
        %1390 = vmatmul.f32.gmra.mxu0 %v1372
        %v1391 = vpop.f32.mrf.mxu0
        %v1392 = vadd.f32 0.0, %v1391
        %1393 = vdwg.mxu0
        %v1394 = vadd.f32 %v1346, %v1392
        %v1395 = vrot.slane %v901, 2
        %v1396 = vsel %vm204, %v1395, 0
        %1398 = vmatpush.msra.mxu0 0.0
        %1399 = vmatpush.msra.mxu0 0.0
        %1400 = vmatpush.msra.mxu0 0.0
        %1401 = vmatpush.msra.mxu0 0.0
        %1402 = vmatpush.msra.mxu0 0.0
        %1403 = vmatpush.msra.mxu0 0.0
        %1404 = vmatpush.msra.mxu0 0.0
        %1405 = vmatpush.msra.mxu0 0.0
        %1406 = vmatpush.msra.mxu0 0.0
        %1407 = vmatpush.msra.mxu0 0.0
        %1408 = vmatpush.msra.mxu0 0.0
        %1409 = vmatpush.msra.mxu0 0.0
        %1410 = vmatpush.msra.mxu0 0.0
        %1411 = vmatpush.msra.mxu0 0.0
        %1412 = vmatpush.msra.mxu0 %v720
        %1413 = vmatpush.msra.mxu0 %v719
        %1414 = vmatmul.f32.gmra.mxu0 %v1396
        %v1415 = vpop.f32.mrf.mxu0
        %v1416 = vadd.f32 0.0, %v1415
        %1417 = vdwg.mxu0
        %v1418 = vadd.f32 %v1370, %v1416
        %v1419 = vrot.slane %v906, 2
        %v1420 = vsel %vm204, %v1419, 0
        %1422 = vmatpush.msra.mxu0 0.0
        %1423 = vmatpush.msra.mxu0 0.0
        %1424 = vmatpush.msra.mxu0 0.0
        %1425 = vmatpush.msra.mxu0 0.0
        %1426 = vmatpush.msra.mxu0 0.0
        %1427 = vmatpush.msra.mxu0 0.0
        %1428 = vmatpush.msra.mxu0 0.0
        %1429 = vmatpush.msra.mxu0 0.0
        %1430 = vmatpush.msra.mxu0 0.0
        %1431 = vmatpush.msra.mxu0 0.0
        %1432 = vmatpush.msra.mxu0 0.0
        %1433 = vmatpush.msra.mxu0 0.0
        %1434 = vmatpush.msra.mxu0 0.0
        %1435 = vmatpush.msra.mxu0 0.0
        %1436 = vmatpush.msra.mxu0 %v720
        %1437 = vmatpush.msra.mxu0 %v719
        %1438 = vmatmul.f32.gmra.mxu0 %v1420
        %v1439 = vpop.f32.mrf.mxu0
        %v1440 = vadd.f32 0.0, %v1439
        %1441 = vdwg.mxu0
        %v1442 = vadd.f32 %v1394, %v1440
        %v1443 = vrot.slane %v901, 3
        %v1444 = vsel %vm204, %v1443, 0
        %1446 = vmatpush.msra.mxu0 0.0
        %1447 = vmatpush.msra.mxu0 0.0
        %1448 = vmatpush.msra.mxu0 0.0
        %1449 = vmatpush.msra.mxu0 0.0
        %1450 = vmatpush.msra.mxu0 0.0
        %1451 = vmatpush.msra.mxu0 0.0
        %1452 = vmatpush.msra.mxu0 0.0
        %1453 = vmatpush.msra.mxu0 0.0
        %1454 = vmatpush.msra.mxu0 0.0
        %1455 = vmatpush.msra.mxu0 0.0
        %1456 = vmatpush.msra.mxu0 0.0
        %1457 = vmatpush.msra.mxu0 0.0
        %1458 = vmatpush.msra.mxu0 0.0
        %1459 = vmatpush.msra.mxu0 0.0
        %1460 = vmatpush.msra.mxu0 %v771
        %1461 = vmatpush.msra.mxu0 %v770
        %1462 = vmatmul.f32.gmra.mxu0 %v1444
        %v1463 = vpop.f32.mrf.mxu0
        %v1464 = vadd.f32 0.0, %v1463
        %1465 = vdwg.mxu0
        %v1466 = vadd.f32 %v1418, %v1464
        %v1467 = vrot.slane %v906, 3
        %v1468 = vsel %vm204, %v1467, 0
        %1470 = vmatpush.msra.mxu0 0.0
        %1471 = vmatpush.msra.mxu0 0.0
        %1472 = vmatpush.msra.mxu0 0.0
        %1473 = vmatpush.msra.mxu0 0.0
        %1474 = vmatpush.msra.mxu0 0.0
        %1475 = vmatpush.msra.mxu0 0.0
        %1476 = vmatpush.msra.mxu0 0.0
        %1477 = vmatpush.msra.mxu0 0.0
        %1478 = vmatpush.msra.mxu0 0.0
        %1479 = vmatpush.msra.mxu0 0.0
        %1480 = vmatpush.msra.mxu0 0.0
        %1481 = vmatpush.msra.mxu0 0.0
        %1482 = vmatpush.msra.mxu0 0.0
        %1483 = vmatpush.msra.mxu0 0.0
        %1484 = vmatpush.msra.mxu0 %v771
        %1485 = vmatpush.msra.mxu0 %v770
        %1486 = vmatmul.f32.gmra.mxu0 %v1468
        %v1487 = vpop.f32.mrf.mxu0
        %v1488 = vadd.f32 0.0, %v1487
        %1489 = vdwg.mxu0
        %v1490 = vadd.f32 %v1442, %v1488
        %v1491 = vrot.slane %v901, 4
        %v1492 = vsel %vm204, %v1491, 0
        %1494 = vmatpush.msra.mxu0 0.0
        %1495 = vmatpush.msra.mxu0 0.0
        %1496 = vmatpush.msra.mxu0 0.0
        %1497 = vmatpush.msra.mxu0 0.0
        %1498 = vmatpush.msra.mxu0 0.0
        %1499 = vmatpush.msra.mxu0 0.0
        %1500 = vmatpush.msra.mxu0 0.0
        %1501 = vmatpush.msra.mxu0 0.0
        %1502 = vmatpush.msra.mxu0 0.0
        %1503 = vmatpush.msra.mxu0 0.0
        %1504 = vmatpush.msra.mxu0 0.0
        %1505 = vmatpush.msra.mxu0 0.0
        %1506 = vmatpush.msra.mxu0 0.0
        %1507 = vmatpush.msra.mxu0 0.0
        %1508 = vmatpush.msra.mxu0 %v822
        %1509 = vmatpush.msra.mxu0 %v821
        %1510 = vmatmul.f32.gmra.mxu0 %v1492
        %v1511 = vpop.f32.mrf.mxu0
        %v1512 = vadd.f32 0.0, %v1511
        %1513 = vdwg.mxu0
        %v1514 = vadd.f32 %v1466, %v1512
        %v1515 = vrot.slane %v906, 4
        %v1516 = vsel %vm204, %v1515, 0
        %1518 = vmatpush.msra.mxu0 0.0
        %1519 = vmatpush.msra.mxu0 0.0
        %1520 = vmatpush.msra.mxu0 0.0
        %1521 = vmatpush.msra.mxu0 0.0
        %1522 = vmatpush.msra.mxu0 0.0
        %1523 = vmatpush.msra.mxu0 0.0
        %1524 = vmatpush.msra.mxu0 0.0
        %1525 = vmatpush.msra.mxu0 0.0
        %1526 = vmatpush.msra.mxu0 0.0
        %1527 = vmatpush.msra.mxu0 0.0
        %1528 = vmatpush.msra.mxu0 0.0
        %1529 = vmatpush.msra.mxu0 0.0
        %1530 = vmatpush.msra.mxu0 0.0
        %1531 = vmatpush.msra.mxu0 0.0
        %1532 = vmatpush.msra.mxu0 %v822
        %1533 = vmatpush.msra.mxu0 %v821
        %1534 = vmatmul.f32.gmra.mxu0 %v1516
        %v1535 = vpop.f32.mrf.mxu0
        %v1536 = vadd.f32 0.0, %v1535
        %1537 = vdwg.mxu0
        %v1538 = vadd.f32 %v1490, %v1536
        %v1539 = vsub.f32 %v1514, %v1538
        %v1540 = vmul.f32 %v1539, %v1539
        %v1541 = vsel %vm873, %v1540, 0.0
        %1542 = vadd.xlane.f32.xlu0 %v1541
        %v1543 = vpop.xlane.xlu0 %1542
        %v1544 = vrot.slane %v1543, 4
        %v1545 = vadd.f32 %v1543, %v1544
        %v1546 = vrot.slane %v1545, 2
        %v1547 = vadd.f32 %v1545, %v1546
        %v1548 = vrot.slane %v1547, 1
        %v1549 = vadd.f32 %v1547, %v1548
        %s1550 = vtos %v1549
        %s1551 = sadd.f32 %s884, %s1550
        %v1552 = vmul.f32 %v1514, %v1514
        %v1553 = vsel %vm873, %v1552, 0.0
        %1554 = vadd.xlane.f32.xlu0 %v1553
        %v1555 = vpop.xlane.xlu0 %1554
        %v1556 = vrot.slane %v1555, 4
        %v1557 = vadd.f32 %v1555, %v1556
        %v1558 = vrot.slane %v1557, 2
        %v1559 = vadd.f32 %v1557, %v1558
        %v1560 = vrot.slane %v1559, 1
        %v1561 = vadd.f32 %v1559, %v1560
        %s1562 = vtos %v1561
        %s1563 = sadd.f32 %s896, %s1562
        %s1564 = scalar_lea.vmem %s183, 32
        %v1565 = vld [vmem:[%s1564] sm:$0xff]
        %v1566 = vld [vmem:[%s1564 + $0x8] sm:$0xff]
        %v1567 = vand.u32 2147483647, %v1565
        %v1568 = vand.u32 2147483647, %v1566
        %s1569 = scalar_lea.vmem %s188, 32
        %v1570 = vld [vmem:[%s1569] sm:$0xff]
        %v1571 = vld [vmem:[%s1569 + $0x8] sm:$0xff]
        %v1572 = vand.u32 2147483647, %v1570
        %v1573 = vand.u32 2147483647, %v1571
        %v1575 = vrot.slane %v1567, 1
        %v1576 = vsel %vm204, %v1575, 0
        %1578 = vmatpush.msra.mxu0 0.0
        %1579 = vmatpush.msra.mxu0 0.0
        %1580 = vmatpush.msra.mxu0 0.0
        %1581 = vmatpush.msra.mxu0 0.0
        %1582 = vmatpush.msra.mxu0 0.0
        %1583 = vmatpush.msra.mxu0 0.0
        %1584 = vmatpush.msra.mxu0 0.0
        %1585 = vmatpush.msra.mxu0 0.0
        %1586 = vmatpush.msra.mxu0 0.0
        %1587 = vmatpush.msra.mxu0 0.0
        %1588 = vmatpush.msra.mxu0 0.0
        %1589 = vmatpush.msra.mxu0 0.0
        %1590 = vmatpush.msra.mxu0 0.0
        %1591 = vmatpush.msra.mxu0 0.0
        %1592 = vmatpush.msra.mxu0 %v201
        %1593 = vmatpush.msra.mxu0 %v200
        %1594 = vmatmul.f32.gmra.mxu0 %v1576
        %v1595 = vpop.f32.mrf.mxu0
        %v1596 = vadd.f32 0.0, %v1595
        %1597 = vdwg.mxu0
        %v1598 = vsel %vm204, %v1567, 0
        %1600 = vmatpush.msra.mxu0 0.0
        %1601 = vmatpush.msra.mxu0 0.0
        %1602 = vmatpush.msra.mxu0 0.0
        %1603 = vmatpush.msra.mxu0 0.0
        %1604 = vmatpush.msra.mxu0 0.0
        %1605 = vmatpush.msra.mxu0 0.0
        %1606 = vmatpush.msra.mxu0 0.0
        %1607 = vmatpush.msra.mxu0 0.0
        %1608 = vmatpush.msra.mxu0 0.0
        %1609 = vmatpush.msra.mxu0 0.0
        %1610 = vmatpush.msra.mxu0 0.0
        %1611 = vmatpush.msra.mxu0 0.0
        %1612 = vmatpush.msra.mxu0 0.0
        %1613 = vmatpush.msra.mxu0 0.0
        %1614 = vmatpush.msra.mxu0 %v198
        %1615 = vmatpush.msra.mxu0 %v197
        %1616 = vmatmul.f32.gmra.mxu0 %v1598
        %v1617 = vpop.f32.mrf.mxu0
        %v1618 = vadd.f32 %v1596, %v1617
        %1619 = vdwg.mxu0
        %v1621 = vrot.slane %v1572, 1
        %v1622 = vsel %vm204, %v1621, 0
        %1624 = vmatpush.msra.mxu0 0.0
        %1625 = vmatpush.msra.mxu0 0.0
        %1626 = vmatpush.msra.mxu0 0.0
        %1627 = vmatpush.msra.mxu0 0.0
        %1628 = vmatpush.msra.mxu0 0.0
        %1629 = vmatpush.msra.mxu0 0.0
        %1630 = vmatpush.msra.mxu0 0.0
        %1631 = vmatpush.msra.mxu0 0.0
        %1632 = vmatpush.msra.mxu0 0.0
        %1633 = vmatpush.msra.mxu0 0.0
        %1634 = vmatpush.msra.mxu0 0.0
        %1635 = vmatpush.msra.mxu0 0.0
        %1636 = vmatpush.msra.mxu0 0.0
        %1637 = vmatpush.msra.mxu0 0.0
        %1638 = vmatpush.msra.mxu0 %v201
        %1639 = vmatpush.msra.mxu0 %v200
        %1640 = vmatmul.f32.gmra.mxu0 %v1622
        %v1641 = vpop.f32.mrf.mxu0
        %v1642 = vadd.f32 0.0, %v1641
        %1643 = vdwg.mxu0
        %v1644 = vsel %vm204, %v1572, 0
        %1646 = vmatpush.msra.mxu0 0.0
        %1647 = vmatpush.msra.mxu0 0.0
        %1648 = vmatpush.msra.mxu0 0.0
        %1649 = vmatpush.msra.mxu0 0.0
        %1650 = vmatpush.msra.mxu0 0.0
        %1651 = vmatpush.msra.mxu0 0.0
        %1652 = vmatpush.msra.mxu0 0.0
        %1653 = vmatpush.msra.mxu0 0.0
        %1654 = vmatpush.msra.mxu0 0.0
        %1655 = vmatpush.msra.mxu0 0.0
        %1656 = vmatpush.msra.mxu0 0.0
        %1657 = vmatpush.msra.mxu0 0.0
        %1658 = vmatpush.msra.mxu0 0.0
        %1659 = vmatpush.msra.mxu0 0.0
        %1660 = vmatpush.msra.mxu0 %v198
        %1661 = vmatpush.msra.mxu0 %v197
        %1662 = vmatmul.f32.gmra.mxu0 %v1644
        %v1663 = vpop.f32.mrf.mxu0
        %v1664 = vadd.f32 %v1642, %v1663
        %1665 = vdwg.mxu0
        %v1666 = vrot.slane %v1567, 2
        %v1667 = vsel %vm204, %v1666, 0
        %1669 = vmatpush.msra.mxu0 0.0
        %1670 = vmatpush.msra.mxu0 0.0
        %1671 = vmatpush.msra.mxu0 0.0
        %1672 = vmatpush.msra.mxu0 0.0
        %1673 = vmatpush.msra.mxu0 0.0
        %1674 = vmatpush.msra.mxu0 0.0
        %1675 = vmatpush.msra.mxu0 0.0
        %1676 = vmatpush.msra.mxu0 0.0
        %1677 = vmatpush.msra.mxu0 0.0
        %1678 = vmatpush.msra.mxu0 0.0
        %1679 = vmatpush.msra.mxu0 0.0
        %1680 = vmatpush.msra.mxu0 0.0
        %1681 = vmatpush.msra.mxu0 0.0
        %1682 = vmatpush.msra.mxu0 0.0
        %1683 = vmatpush.msra.mxu0 %v297
        %1684 = vmatpush.msra.mxu0 %v296
        %1685 = vmatmul.f32.gmra.mxu0 %v1667
        %v1686 = vpop.f32.mrf.mxu0
        %v1687 = vadd.f32 0.0, %v1686
        %1688 = vdwg.mxu0
        %v1689 = vadd.f32 %v1618, %v1687
        %v1690 = vrot.slane %v1572, 2
        %v1691 = vsel %vm204, %v1690, 0
        %1693 = vmatpush.msra.mxu0 0.0
        %1694 = vmatpush.msra.mxu0 0.0
        %1695 = vmatpush.msra.mxu0 0.0
        %1696 = vmatpush.msra.mxu0 0.0
        %1697 = vmatpush.msra.mxu0 0.0
        %1698 = vmatpush.msra.mxu0 0.0
        %1699 = vmatpush.msra.mxu0 0.0
        %1700 = vmatpush.msra.mxu0 0.0
        %1701 = vmatpush.msra.mxu0 0.0
        %1702 = vmatpush.msra.mxu0 0.0
        %1703 = vmatpush.msra.mxu0 0.0
        %1704 = vmatpush.msra.mxu0 0.0
        %1705 = vmatpush.msra.mxu0 0.0
        %1706 = vmatpush.msra.mxu0 0.0
        %1707 = vmatpush.msra.mxu0 %v297
        %1708 = vmatpush.msra.mxu0 %v296
        %1709 = vmatmul.f32.gmra.mxu0 %v1691
        %v1710 = vpop.f32.mrf.mxu0
        %v1711 = vadd.f32 0.0, %v1710
        %1712 = vdwg.mxu0
        %v1713 = vadd.f32 %v1664, %v1711
        %v1714 = vrot.slane %v1567, 3
        %v1715 = vsel %vm204, %v1714, 0
        %1717 = vmatpush.msra.mxu0 0.0
        %1718 = vmatpush.msra.mxu0 0.0
        %1719 = vmatpush.msra.mxu0 0.0
        %1720 = vmatpush.msra.mxu0 0.0
        %1721 = vmatpush.msra.mxu0 0.0
        %1722 = vmatpush.msra.mxu0 0.0
        %1723 = vmatpush.msra.mxu0 0.0
        %1724 = vmatpush.msra.mxu0 0.0
        %1725 = vmatpush.msra.mxu0 0.0
        %1726 = vmatpush.msra.mxu0 0.0
        %1727 = vmatpush.msra.mxu0 0.0
        %1728 = vmatpush.msra.mxu0 0.0
        %1729 = vmatpush.msra.mxu0 0.0
        %1730 = vmatpush.msra.mxu0 0.0
        %1731 = vmatpush.msra.mxu0 %v348
        %1732 = vmatpush.msra.mxu0 %v347
        %1733 = vmatmul.f32.gmra.mxu0 %v1715
        %v1734 = vpop.f32.mrf.mxu0
        %v1735 = vadd.f32 0.0, %v1734
        %1736 = vdwg.mxu0
        %v1737 = vadd.f32 %v1689, %v1735
        %v1738 = vrot.slane %v1572, 3
        %v1739 = vsel %vm204, %v1738, 0
        %1741 = vmatpush.msra.mxu0 0.0
        %1742 = vmatpush.msra.mxu0 0.0
        %1743 = vmatpush.msra.mxu0 0.0
        %1744 = vmatpush.msra.mxu0 0.0
        %1745 = vmatpush.msra.mxu0 0.0
        %1746 = vmatpush.msra.mxu0 0.0
        %1747 = vmatpush.msra.mxu0 0.0
        %1748 = vmatpush.msra.mxu0 0.0
        %1749 = vmatpush.msra.mxu0 0.0
        %1750 = vmatpush.msra.mxu0 0.0
        %1751 = vmatpush.msra.mxu0 0.0
        %1752 = vmatpush.msra.mxu0 0.0
        %1753 = vmatpush.msra.mxu0 0.0
        %1754 = vmatpush.msra.mxu0 0.0
        %1755 = vmatpush.msra.mxu0 %v348
        %1756 = vmatpush.msra.mxu0 %v347
        %1757 = vmatmul.f32.gmra.mxu0 %v1739
        %v1758 = vpop.f32.mrf.mxu0
        %v1759 = vadd.f32 0.0, %v1758
        %1760 = vdwg.mxu0
        %v1761 = vadd.f32 %v1713, %v1759
        %v1762 = vrot.slane %v1567, 4
        %v1763 = vsel %vm204, %v1762, 0
        %1765 = vmatpush.msra.mxu0 0.0
        %1766 = vmatpush.msra.mxu0 0.0
        %1767 = vmatpush.msra.mxu0 0.0
        %1768 = vmatpush.msra.mxu0 0.0
        %1769 = vmatpush.msra.mxu0 0.0
        %1770 = vmatpush.msra.mxu0 0.0
        %1771 = vmatpush.msra.mxu0 0.0
        %1772 = vmatpush.msra.mxu0 0.0
        %1773 = vmatpush.msra.mxu0 0.0
        %1774 = vmatpush.msra.mxu0 0.0
        %1775 = vmatpush.msra.mxu0 0.0
        %1776 = vmatpush.msra.mxu0 0.0
        %1777 = vmatpush.msra.mxu0 0.0
        %1778 = vmatpush.msra.mxu0 0.0
        %1779 = vmatpush.msra.mxu0 %v399
        %1780 = vmatpush.msra.mxu0 %v398
        %1781 = vmatmul.f32.gmra.mxu0 %v1763
        %v1782 = vpop.f32.mrf.mxu0
        %v1783 = vadd.f32 0.0, %v1782
        %1784 = vdwg.mxu0
        %v1785 = vadd.f32 %v1737, %v1783
        %v1786 = vrot.slane %v1572, 4
        %v1787 = vsel %vm204, %v1786, 0
        %1789 = vmatpush.msra.mxu0 0.0
        %1790 = vmatpush.msra.mxu0 0.0
        %1791 = vmatpush.msra.mxu0 0.0
        %1792 = vmatpush.msra.mxu0 0.0
        %1793 = vmatpush.msra.mxu0 0.0
        %1794 = vmatpush.msra.mxu0 0.0
        %1795 = vmatpush.msra.mxu0 0.0
        %1796 = vmatpush.msra.mxu0 0.0
        %1797 = vmatpush.msra.mxu0 0.0
        %1798 = vmatpush.msra.mxu0 0.0
        %1799 = vmatpush.msra.mxu0 0.0
        %1800 = vmatpush.msra.mxu0 0.0
        %1801 = vmatpush.msra.mxu0 0.0
        %1802 = vmatpush.msra.mxu0 0.0
        %1803 = vmatpush.msra.mxu0 %v399
        %1804 = vmatpush.msra.mxu0 %v398
        %1805 = vmatmul.f32.gmra.mxu0 %v1787
        %v1806 = vpop.f32.mrf.mxu0
        %v1807 = vadd.f32 0.0, %v1806
        %1808 = vdwg.mxu0
        %v1809 = vadd.f32 %v1761, %v1807
        %v1811 = vrot.slane %v1567, 5
        %v1812 = vrot.slane %v1568, 5
        %v1813 = vsel %vm452, %v1811, %v1812
        %v1814 = vsel %vm204, %v1813, 0
        %1816 = vmatpush.msra.mxu0 0.0
        %1817 = vmatpush.msra.mxu0 0.0
        %1818 = vmatpush.msra.mxu0 0.0
        %1819 = vmatpush.msra.mxu0 0.0
        %1820 = vmatpush.msra.mxu0 0.0
        %1821 = vmatpush.msra.mxu0 0.0
        %1822 = vmatpush.msra.mxu0 0.0
        %1823 = vmatpush.msra.mxu0 0.0
        %1824 = vmatpush.msra.mxu0 0.0
        %1825 = vmatpush.msra.mxu0 0.0
        %1826 = vmatpush.msra.mxu0 0.0
        %1827 = vmatpush.msra.mxu0 0.0
        %1828 = vmatpush.msra.mxu0 0.0
        %1829 = vmatpush.msra.mxu0 0.0
        %1830 = vmatpush.msra.mxu0 %v450
        %1831 = vmatpush.msra.mxu0 %v449
        %1832 = vmatmul.f32.gmra.mxu0 %v1814
        %v1833 = vpop.f32.mrf.mxu0
        %v1834 = vadd.f32 0.0, %v1833
        %1835 = vdwg.mxu0
        %v1836 = vadd.f32 %v1785, %v1834
        %v1838 = vrot.slane %v1572, 5
        %v1839 = vrot.slane %v1573, 5
        %v1840 = vsel %vm452, %v1838, %v1839
        %v1841 = vsel %vm204, %v1840, 0
        %1843 = vmatpush.msra.mxu0 0.0
        %1844 = vmatpush.msra.mxu0 0.0
        %1845 = vmatpush.msra.mxu0 0.0
        %1846 = vmatpush.msra.mxu0 0.0
        %1847 = vmatpush.msra.mxu0 0.0
        %1848 = vmatpush.msra.mxu0 0.0
        %1849 = vmatpush.msra.mxu0 0.0
        %1850 = vmatpush.msra.mxu0 0.0
        %1851 = vmatpush.msra.mxu0 0.0
        %1852 = vmatpush.msra.mxu0 0.0
        %1853 = vmatpush.msra.mxu0 0.0
        %1854 = vmatpush.msra.mxu0 0.0
        %1855 = vmatpush.msra.mxu0 0.0
        %1856 = vmatpush.msra.mxu0 0.0
        %1857 = vmatpush.msra.mxu0 %v450
        %1858 = vmatpush.msra.mxu0 %v449
        %1859 = vmatmul.f32.gmra.mxu0 %v1841
        %v1860 = vpop.f32.mrf.mxu0
        %v1861 = vadd.f32 0.0, %v1860
        %1862 = vdwg.mxu0
        %v1863 = vadd.f32 %v1809, %v1861
        %v1864 = vrot.slane %v1567, 6
        %v1865 = vrot.slane %v1568, 6
        %v1866 = vsel %vm509, %v1864, %v1865
        %v1867 = vsel %vm204, %v1866, 0
        %1869 = vmatpush.msra.mxu0 0.0
        %1870 = vmatpush.msra.mxu0 0.0
        %1871 = vmatpush.msra.mxu0 0.0
        %1872 = vmatpush.msra.mxu0 0.0
        %1873 = vmatpush.msra.mxu0 0.0
        %1874 = vmatpush.msra.mxu0 0.0
        %1875 = vmatpush.msra.mxu0 0.0
        %1876 = vmatpush.msra.mxu0 0.0
        %1877 = vmatpush.msra.mxu0 0.0
        %1878 = vmatpush.msra.mxu0 0.0
        %1879 = vmatpush.msra.mxu0 0.0
        %1880 = vmatpush.msra.mxu0 0.0
        %1881 = vmatpush.msra.mxu0 0.0
        %1882 = vmatpush.msra.mxu0 0.0
        %1883 = vmatpush.msra.mxu0 %v508
        %1884 = vmatpush.msra.mxu0 %v507
        %1885 = vmatmul.f32.gmra.mxu0 %v1867
        %v1886 = vpop.f32.mrf.mxu0
        %v1887 = vadd.f32 0.0, %v1886
        %1888 = vdwg.mxu0
        %v1889 = vadd.f32 %v1836, %v1887
        %v1890 = vrot.slane %v1572, 6
        %v1891 = vrot.slane %v1573, 6
        %v1892 = vsel %vm509, %v1890, %v1891
        %v1893 = vsel %vm204, %v1892, 0
        %1895 = vmatpush.msra.mxu0 0.0
        %1896 = vmatpush.msra.mxu0 0.0
        %1897 = vmatpush.msra.mxu0 0.0
        %1898 = vmatpush.msra.mxu0 0.0
        %1899 = vmatpush.msra.mxu0 0.0
        %1900 = vmatpush.msra.mxu0 0.0
        %1901 = vmatpush.msra.mxu0 0.0
        %1902 = vmatpush.msra.mxu0 0.0
        %1903 = vmatpush.msra.mxu0 0.0
        %1904 = vmatpush.msra.mxu0 0.0
        %1905 = vmatpush.msra.mxu0 0.0
        %1906 = vmatpush.msra.mxu0 0.0
        %1907 = vmatpush.msra.mxu0 0.0
        %1908 = vmatpush.msra.mxu0 0.0
        %1909 = vmatpush.msra.mxu0 %v508
        %1910 = vmatpush.msra.mxu0 %v507
        %1911 = vmatmul.f32.gmra.mxu0 %v1893
        %v1912 = vpop.f32.mrf.mxu0
        %v1913 = vadd.f32 0.0, %v1912
        %1914 = vdwg.mxu0
        %v1915 = vadd.f32 %v1863, %v1913
        %v1916 = vrot.slane %v1567, 7
        %v1917 = vrot.slane %v1568, 7
        %v1918 = vsel %vm565, %v1916, %v1917
        %v1919 = vsel %vm204, %v1918, 0
        %1921 = vmatpush.msra.mxu0 0.0
        %1922 = vmatpush.msra.mxu0 0.0
        %1923 = vmatpush.msra.mxu0 0.0
        %1924 = vmatpush.msra.mxu0 0.0
        %1925 = vmatpush.msra.mxu0 0.0
        %1926 = vmatpush.msra.mxu0 0.0
        %1927 = vmatpush.msra.mxu0 0.0
        %1928 = vmatpush.msra.mxu0 0.0
        %1929 = vmatpush.msra.mxu0 0.0
        %1930 = vmatpush.msra.mxu0 0.0
        %1931 = vmatpush.msra.mxu0 0.0
        %1932 = vmatpush.msra.mxu0 0.0
        %1933 = vmatpush.msra.mxu0 0.0
        %1934 = vmatpush.msra.mxu0 0.0
        %1935 = vmatpush.msra.mxu0 %v564
        %1936 = vmatpush.msra.mxu0 %v563
        %1937 = vmatmul.f32.gmra.mxu0 %v1919
        %v1938 = vpop.f32.mrf.mxu0
        %v1939 = vadd.f32 0.0, %v1938
        %1940 = vdwg.mxu0
        %v1941 = vadd.f32 %v1889, %v1939
        %v1942 = vrot.slane %v1572, 7
        %v1943 = vrot.slane %v1573, 7
        %v1944 = vsel %vm565, %v1942, %v1943
        %v1945 = vsel %vm204, %v1944, 0
        %1947 = vmatpush.msra.mxu0 0.0
        %1948 = vmatpush.msra.mxu0 0.0
        %1949 = vmatpush.msra.mxu0 0.0
        %1950 = vmatpush.msra.mxu0 0.0
        %1951 = vmatpush.msra.mxu0 0.0
        %1952 = vmatpush.msra.mxu0 0.0
        %1953 = vmatpush.msra.mxu0 0.0
        %1954 = vmatpush.msra.mxu0 0.0
        %1955 = vmatpush.msra.mxu0 0.0
        %1956 = vmatpush.msra.mxu0 0.0
        %1957 = vmatpush.msra.mxu0 0.0
        %1958 = vmatpush.msra.mxu0 0.0
        %1959 = vmatpush.msra.mxu0 0.0
        %1960 = vmatpush.msra.mxu0 0.0
        %1961 = vmatpush.msra.mxu0 %v564
        %1962 = vmatpush.msra.mxu0 %v563
        %1963 = vmatmul.f32.gmra.mxu0 %v1945
        %v1964 = vpop.f32.mrf.mxu0
        %v1965 = vadd.f32 0.0, %v1964
        %1966 = vdwg.mxu0
        %v1967 = vadd.f32 %v1915, %v1965
        %v1968 = vsel %vm204, %v1568, 0
        %1970 = vmatpush.msra.mxu0 0.0
        %1971 = vmatpush.msra.mxu0 0.0
        %1972 = vmatpush.msra.mxu0 0.0
        %1973 = vmatpush.msra.mxu0 0.0
        %1974 = vmatpush.msra.mxu0 0.0
        %1975 = vmatpush.msra.mxu0 0.0
        %1976 = vmatpush.msra.mxu0 0.0
        %1977 = vmatpush.msra.mxu0 0.0
        %1978 = vmatpush.msra.mxu0 0.0
        %1979 = vmatpush.msra.mxu0 0.0
        %1980 = vmatpush.msra.mxu0 0.0
        %1981 = vmatpush.msra.mxu0 0.0
        %1982 = vmatpush.msra.mxu0 0.0
        %1983 = vmatpush.msra.mxu0 0.0
        %1984 = vmatpush.msra.mxu0 %v620
        %1985 = vmatpush.msra.mxu0 %v619
        %1986 = vmatmul.f32.gmra.mxu0 %v1968
        %v1987 = vpop.f32.mrf.mxu0
        %v1988 = vadd.f32 0.0, %v1987
        %1989 = vdwg.mxu0
        %v1990 = vadd.f32 %v1941, %v1988
        %v1991 = vsel %vm204, %v1573, 0
        %1993 = vmatpush.msra.mxu0 0.0
        %1994 = vmatpush.msra.mxu0 0.0
        %1995 = vmatpush.msra.mxu0 0.0
        %1996 = vmatpush.msra.mxu0 0.0
        %1997 = vmatpush.msra.mxu0 0.0
        %1998 = vmatpush.msra.mxu0 0.0
        %1999 = vmatpush.msra.mxu0 0.0
        %2000 = vmatpush.msra.mxu0 0.0
        %2001 = vmatpush.msra.mxu0 0.0
        %2002 = vmatpush.msra.mxu0 0.0
        %2003 = vmatpush.msra.mxu0 0.0
        %2004 = vmatpush.msra.mxu0 0.0
        %2005 = vmatpush.msra.mxu0 0.0
        %2006 = vmatpush.msra.mxu0 0.0
        %2007 = vmatpush.msra.mxu0 %v620
        %2008 = vmatpush.msra.mxu0 %v619
        %2009 = vmatmul.f32.gmra.mxu0 %v1991
        %v2010 = vpop.f32.mrf.mxu0
        %v2011 = vadd.f32 0.0, %v2010
        %2012 = vdwg.mxu0
        %v2013 = vadd.f32 %v1967, %v2011
        %v2014 = vrot.slane %v1568, 1
        %v2015 = vsel %vm204, %v2014, 0
        %2017 = vmatpush.msra.mxu0 0.0
        %2018 = vmatpush.msra.mxu0 0.0
        %2019 = vmatpush.msra.mxu0 0.0
        %2020 = vmatpush.msra.mxu0 0.0
        %2021 = vmatpush.msra.mxu0 0.0
        %2022 = vmatpush.msra.mxu0 0.0
        %2023 = vmatpush.msra.mxu0 0.0
        %2024 = vmatpush.msra.mxu0 0.0
        %2025 = vmatpush.msra.mxu0 0.0
        %2026 = vmatpush.msra.mxu0 0.0
        %2027 = vmatpush.msra.mxu0 0.0
        %2028 = vmatpush.msra.mxu0 0.0
        %2029 = vmatpush.msra.mxu0 0.0
        %2030 = vmatpush.msra.mxu0 0.0
        %2031 = vmatpush.msra.mxu0 %v669
        %2032 = vmatpush.msra.mxu0 %v668
        %2033 = vmatmul.f32.gmra.mxu0 %v2015
        %v2034 = vpop.f32.mrf.mxu0
        %v2035 = vadd.f32 0.0, %v2034
        %2036 = vdwg.mxu0
        %v2037 = vadd.f32 %v1990, %v2035
        %v2038 = vrot.slane %v1573, 1
        %v2039 = vsel %vm204, %v2038, 0
        %2041 = vmatpush.msra.mxu0 0.0
        %2042 = vmatpush.msra.mxu0 0.0
        %2043 = vmatpush.msra.mxu0 0.0
        %2044 = vmatpush.msra.mxu0 0.0
        %2045 = vmatpush.msra.mxu0 0.0
        %2046 = vmatpush.msra.mxu0 0.0
        %2047 = vmatpush.msra.mxu0 0.0
        %2048 = vmatpush.msra.mxu0 0.0
        %2049 = vmatpush.msra.mxu0 0.0
        %2050 = vmatpush.msra.mxu0 0.0
        %2051 = vmatpush.msra.mxu0 0.0
        %2052 = vmatpush.msra.mxu0 0.0
        %2053 = vmatpush.msra.mxu0 0.0
        %2054 = vmatpush.msra.mxu0 0.0
        %2055 = vmatpush.msra.mxu0 %v669
        %2056 = vmatpush.msra.mxu0 %v668
        %2057 = vmatmul.f32.gmra.mxu0 %v2039
        %v2058 = vpop.f32.mrf.mxu0
        %v2059 = vadd.f32 0.0, %v2058
        %2060 = vdwg.mxu0
        %v2061 = vadd.f32 %v2013, %v2059
        %v2062 = vrot.slane %v1568, 2
        %v2063 = vsel %vm204, %v2062, 0
        %2065 = vmatpush.msra.mxu0 0.0
        %2066 = vmatpush.msra.mxu0 0.0
        %2067 = vmatpush.msra.mxu0 0.0
        %2068 = vmatpush.msra.mxu0 0.0
        %2069 = vmatpush.msra.mxu0 0.0
        %2070 = vmatpush.msra.mxu0 0.0
        %2071 = vmatpush.msra.mxu0 0.0
        %2072 = vmatpush.msra.mxu0 0.0
        %2073 = vmatpush.msra.mxu0 0.0
        %2074 = vmatpush.msra.mxu0 0.0
        %2075 = vmatpush.msra.mxu0 0.0
        %2076 = vmatpush.msra.mxu0 0.0
        %2077 = vmatpush.msra.mxu0 0.0
        %2078 = vmatpush.msra.mxu0 0.0
        %2079 = vmatpush.msra.mxu0 %v720
        %2080 = vmatpush.msra.mxu0 %v719
        %2081 = vmatmul.f32.gmra.mxu0 %v2063
        %v2082 = vpop.f32.mrf.mxu0
        %v2083 = vadd.f32 0.0, %v2082
        %2084 = vdwg.mxu0
        %v2085 = vadd.f32 %v2037, %v2083
        %v2086 = vrot.slane %v1573, 2
        %v2087 = vsel %vm204, %v2086, 0
        %2089 = vmatpush.msra.mxu0 0.0
        %2090 = vmatpush.msra.mxu0 0.0
        %2091 = vmatpush.msra.mxu0 0.0
        %2092 = vmatpush.msra.mxu0 0.0
        %2093 = vmatpush.msra.mxu0 0.0
        %2094 = vmatpush.msra.mxu0 0.0
        %2095 = vmatpush.msra.mxu0 0.0
        %2096 = vmatpush.msra.mxu0 0.0
        %2097 = vmatpush.msra.mxu0 0.0
        %2098 = vmatpush.msra.mxu0 0.0
        %2099 = vmatpush.msra.mxu0 0.0
        %2100 = vmatpush.msra.mxu0 0.0
        %2101 = vmatpush.msra.mxu0 0.0
        %2102 = vmatpush.msra.mxu0 0.0
        %2103 = vmatpush.msra.mxu0 %v720
        %2104 = vmatpush.msra.mxu0 %v719
        %2105 = vmatmul.f32.gmra.mxu0 %v2087
        %v2106 = vpop.f32.mrf.mxu0
        %v2107 = vadd.f32 0.0, %v2106
        %2108 = vdwg.mxu0
        %v2109 = vadd.f32 %v2061, %v2107
        %v2110 = vrot.slane %v1568, 3
        %v2111 = vsel %vm204, %v2110, 0
        %2113 = vmatpush.msra.mxu0 0.0
        %2114 = vmatpush.msra.mxu0 0.0
        %2115 = vmatpush.msra.mxu0 0.0
        %2116 = vmatpush.msra.mxu0 0.0
        %2117 = vmatpush.msra.mxu0 0.0
        %2118 = vmatpush.msra.mxu0 0.0
        %2119 = vmatpush.msra.mxu0 0.0
        %2120 = vmatpush.msra.mxu0 0.0
        %2121 = vmatpush.msra.mxu0 0.0
        %2122 = vmatpush.msra.mxu0 0.0
        %2123 = vmatpush.msra.mxu0 0.0
        %2124 = vmatpush.msra.mxu0 0.0
        %2125 = vmatpush.msra.mxu0 0.0
        %2126 = vmatpush.msra.mxu0 0.0
        %2127 = vmatpush.msra.mxu0 %v771
        %2128 = vmatpush.msra.mxu0 %v770
        %2129 = vmatmul.f32.gmra.mxu0 %v2111
        %v2130 = vpop.f32.mrf.mxu0
        %v2131 = vadd.f32 0.0, %v2130
        %2132 = vdwg.mxu0
        %v2133 = vadd.f32 %v2085, %v2131
        %v2134 = vrot.slane %v1573, 3
        %v2135 = vsel %vm204, %v2134, 0
        %2137 = vmatpush.msra.mxu0 0.0
        %2138 = vmatpush.msra.mxu0 0.0
        %2139 = vmatpush.msra.mxu0 0.0
        %2140 = vmatpush.msra.mxu0 0.0
        %2141 = vmatpush.msra.mxu0 0.0
        %2142 = vmatpush.msra.mxu0 0.0
        %2143 = vmatpush.msra.mxu0 0.0
        %2144 = vmatpush.msra.mxu0 0.0
        %2145 = vmatpush.msra.mxu0 0.0
        %2146 = vmatpush.msra.mxu0 0.0
        %2147 = vmatpush.msra.mxu0 0.0
        %2148 = vmatpush.msra.mxu0 0.0
        %2149 = vmatpush.msra.mxu0 0.0
        %2150 = vmatpush.msra.mxu0 0.0
        %2151 = vmatpush.msra.mxu0 %v771
        %2152 = vmatpush.msra.mxu0 %v770
        %2153 = vmatmul.f32.gmra.mxu0 %v2135
        %v2154 = vpop.f32.mrf.mxu0
        %v2155 = vadd.f32 0.0, %v2154
        %2156 = vdwg.mxu0
        %v2157 = vadd.f32 %v2109, %v2155
        %v2158 = vrot.slane %v1568, 4
        %v2159 = vsel %vm204, %v2158, 0
        %2161 = vmatpush.msra.mxu0 0.0
        %2162 = vmatpush.msra.mxu0 0.0
        %2163 = vmatpush.msra.mxu0 0.0
        %2164 = vmatpush.msra.mxu0 0.0
        %2165 = vmatpush.msra.mxu0 0.0
        %2166 = vmatpush.msra.mxu0 0.0
        %2167 = vmatpush.msra.mxu0 0.0
        %2168 = vmatpush.msra.mxu0 0.0
        %2169 = vmatpush.msra.mxu0 0.0
        %2170 = vmatpush.msra.mxu0 0.0
        %2171 = vmatpush.msra.mxu0 0.0
        %2172 = vmatpush.msra.mxu0 0.0
        %2173 = vmatpush.msra.mxu0 0.0
        %2174 = vmatpush.msra.mxu0 0.0
        %2175 = vmatpush.msra.mxu0 %v822
        %2176 = vmatpush.msra.mxu0 %v821
        %2177 = vmatmul.f32.gmra.mxu0 %v2159
        %v2178 = vpop.f32.mrf.mxu0
        %v2179 = vadd.f32 0.0, %v2178
        %2180 = vdwg.mxu0
        %v2181 = vadd.f32 %v2133, %v2179
        %v2182 = vrot.slane %v1573, 4
        %v2183 = vsel %vm204, %v2182, 0
        %2185 = vmatpush.msra.mxu0 0.0
        %2186 = vmatpush.msra.mxu0 0.0
        %2187 = vmatpush.msra.mxu0 0.0
        %2188 = vmatpush.msra.mxu0 0.0
        %2189 = vmatpush.msra.mxu0 0.0
        %2190 = vmatpush.msra.mxu0 0.0
        %2191 = vmatpush.msra.mxu0 0.0
        %2192 = vmatpush.msra.mxu0 0.0
        %2193 = vmatpush.msra.mxu0 0.0
        %2194 = vmatpush.msra.mxu0 0.0
        %2195 = vmatpush.msra.mxu0 0.0
        %2196 = vmatpush.msra.mxu0 0.0
        %2197 = vmatpush.msra.mxu0 0.0
        %2198 = vmatpush.msra.mxu0 0.0
        %2199 = vmatpush.msra.mxu0 %v822
        %2200 = vmatpush.msra.mxu0 %v821
        %2201 = vmatmul.f32.gmra.mxu0 %v2183
        %v2202 = vpop.f32.mrf.mxu0
        %v2203 = vadd.f32 0.0, %v2202
        %2204 = vdwg.mxu0
        %v2205 = vadd.f32 %v2157, %v2203
        %v2206 = vsub.f32 %v2181, %v2205
        %v2207 = vmul.f32 %v2206, %v2206
        %v2208 = vsel %vm873, %v2207, 0.0
        %2209 = vadd.xlane.f32.xlu0 %v2208
        %v2210 = vpop.xlane.xlu0 %2209
        %v2211 = vrot.slane %v2210, 4
        %v2212 = vadd.f32 %v2210, %v2211
        %v2213 = vrot.slane %v2212, 2
        %v2214 = vadd.f32 %v2212, %v2213
        %v2215 = vrot.slane %v2214, 1
        %v2216 = vadd.f32 %v2214, %v2215
        %s2217 = vtos %v2216
        %s2218 = sadd.f32 %s1551, %s2217
        %v2219 = vmul.f32 %v2181, %v2181
        %v2220 = vsel %vm873, %v2219, 0.0
        %2221 = vadd.xlane.f32.xlu0 %v2220
        %v2222 = vpop.xlane.xlu0 %2221
        %v2223 = vrot.slane %v2222, 4
        %v2224 = vadd.f32 %v2222, %v2223
        %v2225 = vrot.slane %v2224, 2
        %v2226 = vadd.f32 %v2224, %v2225
        %v2227 = vrot.slane %v2226, 1
        %v2228 = vadd.f32 %v2226, %v2227
        %s2229 = vtos %v2228
        %s2230 = sadd.f32 %s1563, %s2229
        %s2231 = scalar_lea.vmem %s183, 48
        %v2232 = vld [vmem:[%s2231] sm:$0xff]
        %v2233 = vld [vmem:[%s2231 + $0x8] sm:$0xff]
        %v2234 = vand.u32 2147483647, %v2232
        %v2235 = vand.u32 2147483647, %v2233
        %s2236 = scalar_lea.vmem %s188, 48
        %v2237 = vld [vmem:[%s2236] sm:$0xff]
        %v2238 = vld [vmem:[%s2236 + $0x8] sm:$0xff]
        %v2239 = vand.u32 2147483647, %v2237
        %v2240 = vand.u32 2147483647, %v2238
        %v2242 = vrot.slane %v2234, 1
        %v2243 = vsel %vm204, %v2242, 0
        %2245 = vmatpush.msra.mxu0 0.0
        %2246 = vmatpush.msra.mxu0 0.0
        %2247 = vmatpush.msra.mxu0 0.0
        %2248 = vmatpush.msra.mxu0 0.0
        %2249 = vmatpush.msra.mxu0 0.0
        %2250 = vmatpush.msra.mxu0 0.0
        %2251 = vmatpush.msra.mxu0 0.0
        %2252 = vmatpush.msra.mxu0 0.0
        %2253 = vmatpush.msra.mxu0 0.0
        %2254 = vmatpush.msra.mxu0 0.0
        %2255 = vmatpush.msra.mxu0 0.0
        %2256 = vmatpush.msra.mxu0 0.0
        %2257 = vmatpush.msra.mxu0 0.0
        %2258 = vmatpush.msra.mxu0 0.0
        %2259 = vmatpush.msra.mxu0 %v201
        %2260 = vmatpush.msra.mxu0 %v200
        %2261 = vmatmul.f32.gmra.mxu0 %v2243
        %v2262 = vpop.f32.mrf.mxu0
        %v2263 = vadd.f32 0.0, %v2262
        %2264 = vdwg.mxu0
        %v2265 = vsel %vm204, %v2234, 0
        %2267 = vmatpush.msra.mxu0 0.0
        %2268 = vmatpush.msra.mxu0 0.0
        %2269 = vmatpush.msra.mxu0 0.0
        %2270 = vmatpush.msra.mxu0 0.0
        %2271 = vmatpush.msra.mxu0 0.0
        %2272 = vmatpush.msra.mxu0 0.0
        %2273 = vmatpush.msra.mxu0 0.0
        %2274 = vmatpush.msra.mxu0 0.0
        %2275 = vmatpush.msra.mxu0 0.0
        %2276 = vmatpush.msra.mxu0 0.0
        %2277 = vmatpush.msra.mxu0 0.0
        %2278 = vmatpush.msra.mxu0 0.0
        %2279 = vmatpush.msra.mxu0 0.0
        %2280 = vmatpush.msra.mxu0 0.0
        %2281 = vmatpush.msra.mxu0 %v198
        %2282 = vmatpush.msra.mxu0 %v197
        %2283 = vmatmul.f32.gmra.mxu0 %v2265
        %v2284 = vpop.f32.mrf.mxu0
        %v2285 = vadd.f32 %v2263, %v2284
        %2286 = vdwg.mxu0
        %v2288 = vrot.slane %v2239, 1
        %v2289 = vsel %vm204, %v2288, 0
        %2291 = vmatpush.msra.mxu0 0.0
        %2292 = vmatpush.msra.mxu0 0.0
        %2293 = vmatpush.msra.mxu0 0.0
        %2294 = vmatpush.msra.mxu0 0.0
        %2295 = vmatpush.msra.mxu0 0.0
        %2296 = vmatpush.msra.mxu0 0.0
        %2297 = vmatpush.msra.mxu0 0.0
        %2298 = vmatpush.msra.mxu0 0.0
        %2299 = vmatpush.msra.mxu0 0.0
        %2300 = vmatpush.msra.mxu0 0.0
        %2301 = vmatpush.msra.mxu0 0.0
        %2302 = vmatpush.msra.mxu0 0.0
        %2303 = vmatpush.msra.mxu0 0.0
        %2304 = vmatpush.msra.mxu0 0.0
        %2305 = vmatpush.msra.mxu0 %v201
        %2306 = vmatpush.msra.mxu0 %v200
        %2307 = vmatmul.f32.gmra.mxu0 %v2289
        %v2308 = vpop.f32.mrf.mxu0
        %v2309 = vadd.f32 0.0, %v2308
        %2310 = vdwg.mxu0
        %v2311 = vsel %vm204, %v2239, 0
        %2313 = vmatpush.msra.mxu0 0.0
        %2314 = vmatpush.msra.mxu0 0.0
        %2315 = vmatpush.msra.mxu0 0.0
        %2316 = vmatpush.msra.mxu0 0.0
        %2317 = vmatpush.msra.mxu0 0.0
        %2318 = vmatpush.msra.mxu0 0.0
        %2319 = vmatpush.msra.mxu0 0.0
        %2320 = vmatpush.msra.mxu0 0.0
        %2321 = vmatpush.msra.mxu0 0.0
        %2322 = vmatpush.msra.mxu0 0.0
        %2323 = vmatpush.msra.mxu0 0.0
        %2324 = vmatpush.msra.mxu0 0.0
        %2325 = vmatpush.msra.mxu0 0.0
        %2326 = vmatpush.msra.mxu0 0.0
        %2327 = vmatpush.msra.mxu0 %v198
        %2328 = vmatpush.msra.mxu0 %v197
        %2329 = vmatmul.f32.gmra.mxu0 %v2311
        %v2330 = vpop.f32.mrf.mxu0
        %v2331 = vadd.f32 %v2309, %v2330
        %2332 = vdwg.mxu0
        %v2333 = vrot.slane %v2234, 2
        %v2334 = vsel %vm204, %v2333, 0
        %2336 = vmatpush.msra.mxu0 0.0
        %2337 = vmatpush.msra.mxu0 0.0
        %2338 = vmatpush.msra.mxu0 0.0
        %2339 = vmatpush.msra.mxu0 0.0
        %2340 = vmatpush.msra.mxu0 0.0
        %2341 = vmatpush.msra.mxu0 0.0
        %2342 = vmatpush.msra.mxu0 0.0
        %2343 = vmatpush.msra.mxu0 0.0
        %2344 = vmatpush.msra.mxu0 0.0
        %2345 = vmatpush.msra.mxu0 0.0
        %2346 = vmatpush.msra.mxu0 0.0
        %2347 = vmatpush.msra.mxu0 0.0
        %2348 = vmatpush.msra.mxu0 0.0
        %2349 = vmatpush.msra.mxu0 0.0
        %2350 = vmatpush.msra.mxu0 %v297
        %2351 = vmatpush.msra.mxu0 %v296
        %2352 = vmatmul.f32.gmra.mxu0 %v2334
        %v2353 = vpop.f32.mrf.mxu0
        %v2354 = vadd.f32 0.0, %v2353
        %2355 = vdwg.mxu0
        %v2356 = vadd.f32 %v2285, %v2354
        %v2357 = vrot.slane %v2239, 2
        %v2358 = vsel %vm204, %v2357, 0
        %2360 = vmatpush.msra.mxu0 0.0
        %2361 = vmatpush.msra.mxu0 0.0
        %2362 = vmatpush.msra.mxu0 0.0
        %2363 = vmatpush.msra.mxu0 0.0
        %2364 = vmatpush.msra.mxu0 0.0
        %2365 = vmatpush.msra.mxu0 0.0
        %2366 = vmatpush.msra.mxu0 0.0
        %2367 = vmatpush.msra.mxu0 0.0
        %2368 = vmatpush.msra.mxu0 0.0
        %2369 = vmatpush.msra.mxu0 0.0
        %2370 = vmatpush.msra.mxu0 0.0
        %2371 = vmatpush.msra.mxu0 0.0
        %2372 = vmatpush.msra.mxu0 0.0
        %2373 = vmatpush.msra.mxu0 0.0
        %2374 = vmatpush.msra.mxu0 %v297
        %2375 = vmatpush.msra.mxu0 %v296
        %2376 = vmatmul.f32.gmra.mxu0 %v2358
        %v2377 = vpop.f32.mrf.mxu0
        %v2378 = vadd.f32 0.0, %v2377
        %2379 = vdwg.mxu0
        %v2380 = vadd.f32 %v2331, %v2378
        %v2381 = vrot.slane %v2234, 3
        %v2382 = vsel %vm204, %v2381, 0
        %2384 = vmatpush.msra.mxu0 0.0
        %2385 = vmatpush.msra.mxu0 0.0
        %2386 = vmatpush.msra.mxu0 0.0
        %2387 = vmatpush.msra.mxu0 0.0
        %2388 = vmatpush.msra.mxu0 0.0
        %2389 = vmatpush.msra.mxu0 0.0
        %2390 = vmatpush.msra.mxu0 0.0
        %2391 = vmatpush.msra.mxu0 0.0
        %2392 = vmatpush.msra.mxu0 0.0
        %2393 = vmatpush.msra.mxu0 0.0
        %2394 = vmatpush.msra.mxu0 0.0
        %2395 = vmatpush.msra.mxu0 0.0
        %2396 = vmatpush.msra.mxu0 0.0
        %2397 = vmatpush.msra.mxu0 0.0
        %2398 = vmatpush.msra.mxu0 %v348
        %2399 = vmatpush.msra.mxu0 %v347
        %2400 = vmatmul.f32.gmra.mxu0 %v2382
        %v2401 = vpop.f32.mrf.mxu0
        %v2402 = vadd.f32 0.0, %v2401
        %2403 = vdwg.mxu0
        %v2404 = vadd.f32 %v2356, %v2402
        %v2405 = vrot.slane %v2239, 3
        %v2406 = vsel %vm204, %v2405, 0
        %2408 = vmatpush.msra.mxu0 0.0
        %2409 = vmatpush.msra.mxu0 0.0
        %2410 = vmatpush.msra.mxu0 0.0
        %2411 = vmatpush.msra.mxu0 0.0
        %2412 = vmatpush.msra.mxu0 0.0
        %2413 = vmatpush.msra.mxu0 0.0
        %2414 = vmatpush.msra.mxu0 0.0
        %2415 = vmatpush.msra.mxu0 0.0
        %2416 = vmatpush.msra.mxu0 0.0
        %2417 = vmatpush.msra.mxu0 0.0
        %2418 = vmatpush.msra.mxu0 0.0
        %2419 = vmatpush.msra.mxu0 0.0
        %2420 = vmatpush.msra.mxu0 0.0
        %2421 = vmatpush.msra.mxu0 0.0
        %2422 = vmatpush.msra.mxu0 %v348
        %2423 = vmatpush.msra.mxu0 %v347
        %2424 = vmatmul.f32.gmra.mxu0 %v2406
        %v2425 = vpop.f32.mrf.mxu0
        %v2426 = vadd.f32 0.0, %v2425
        %2427 = vdwg.mxu0
        %v2428 = vadd.f32 %v2380, %v2426
        %v2429 = vrot.slane %v2234, 4
        %v2430 = vsel %vm204, %v2429, 0
        %2432 = vmatpush.msra.mxu0 0.0
        %2433 = vmatpush.msra.mxu0 0.0
        %2434 = vmatpush.msra.mxu0 0.0
        %2435 = vmatpush.msra.mxu0 0.0
        %2436 = vmatpush.msra.mxu0 0.0
        %2437 = vmatpush.msra.mxu0 0.0
        %2438 = vmatpush.msra.mxu0 0.0
        %2439 = vmatpush.msra.mxu0 0.0
        %2440 = vmatpush.msra.mxu0 0.0
        %2441 = vmatpush.msra.mxu0 0.0
        %2442 = vmatpush.msra.mxu0 0.0
        %2443 = vmatpush.msra.mxu0 0.0
        %2444 = vmatpush.msra.mxu0 0.0
        %2445 = vmatpush.msra.mxu0 0.0
        %2446 = vmatpush.msra.mxu0 %v399
        %2447 = vmatpush.msra.mxu0 %v398
        %2448 = vmatmul.f32.gmra.mxu0 %v2430
        %v2449 = vpop.f32.mrf.mxu0
        %v2450 = vadd.f32 0.0, %v2449
        %2451 = vdwg.mxu0
        %v2452 = vadd.f32 %v2404, %v2450
        %v2453 = vrot.slane %v2239, 4
        %v2454 = vsel %vm204, %v2453, 0
        %2456 = vmatpush.msra.mxu0 0.0
        %2457 = vmatpush.msra.mxu0 0.0
        %2458 = vmatpush.msra.mxu0 0.0
        %2459 = vmatpush.msra.mxu0 0.0
        %2460 = vmatpush.msra.mxu0 0.0
        %2461 = vmatpush.msra.mxu0 0.0
        %2462 = vmatpush.msra.mxu0 0.0
        %2463 = vmatpush.msra.mxu0 0.0
        %2464 = vmatpush.msra.mxu0 0.0
        %2465 = vmatpush.msra.mxu0 0.0
        %2466 = vmatpush.msra.mxu0 0.0
        %2467 = vmatpush.msra.mxu0 0.0
        %2468 = vmatpush.msra.mxu0 0.0
        %2469 = vmatpush.msra.mxu0 0.0
        %2470 = vmatpush.msra.mxu0 %v399
        %2471 = vmatpush.msra.mxu0 %v398
        %2472 = vmatmul.f32.gmra.mxu0 %v2454
        %v2473 = vpop.f32.mrf.mxu0
        %v2474 = vadd.f32 0.0, %v2473
        %2475 = vdwg.mxu0
        %v2476 = vadd.f32 %v2428, %v2474
        %v2478 = vrot.slane %v2234, 5
        %v2479 = vrot.slane %v2235, 5
        %v2480 = vsel %vm452, %v2478, %v2479
        %v2481 = vsel %vm204, %v2480, 0
        %2483 = vmatpush.msra.mxu0 0.0
        %2484 = vmatpush.msra.mxu0 0.0
        %2485 = vmatpush.msra.mxu0 0.0
        %2486 = vmatpush.msra.mxu0 0.0
        %2487 = vmatpush.msra.mxu0 0.0
        %2488 = vmatpush.msra.mxu0 0.0
        %2489 = vmatpush.msra.mxu0 0.0
        %2490 = vmatpush.msra.mxu0 0.0
        %2491 = vmatpush.msra.mxu0 0.0
        %2492 = vmatpush.msra.mxu0 0.0
        %2493 = vmatpush.msra.mxu0 0.0
        %2494 = vmatpush.msra.mxu0 0.0
        %2495 = vmatpush.msra.mxu0 0.0
        %2496 = vmatpush.msra.mxu0 0.0
        %2497 = vmatpush.msra.mxu0 %v450
        %2498 = vmatpush.msra.mxu0 %v449
        %2499 = vmatmul.f32.gmra.mxu0 %v2481
        %v2500 = vpop.f32.mrf.mxu0
        %v2501 = vadd.f32 0.0, %v2500
        %2502 = vdwg.mxu0
        %v2503 = vadd.f32 %v2452, %v2501
        %v2505 = vrot.slane %v2239, 5
        %v2506 = vrot.slane %v2240, 5
        %v2507 = vsel %vm452, %v2505, %v2506
        %v2508 = vsel %vm204, %v2507, 0
        %2510 = vmatpush.msra.mxu0 0.0
        %2511 = vmatpush.msra.mxu0 0.0
        %2512 = vmatpush.msra.mxu0 0.0
        %2513 = vmatpush.msra.mxu0 0.0
        %2514 = vmatpush.msra.mxu0 0.0
        %2515 = vmatpush.msra.mxu0 0.0
        %2516 = vmatpush.msra.mxu0 0.0
        %2517 = vmatpush.msra.mxu0 0.0
        %2518 = vmatpush.msra.mxu0 0.0
        %2519 = vmatpush.msra.mxu0 0.0
        %2520 = vmatpush.msra.mxu0 0.0
        %2521 = vmatpush.msra.mxu0 0.0
        %2522 = vmatpush.msra.mxu0 0.0
        %2523 = vmatpush.msra.mxu0 0.0
        %2524 = vmatpush.msra.mxu0 %v450
        %2525 = vmatpush.msra.mxu0 %v449
        %2526 = vmatmul.f32.gmra.mxu0 %v2508
        %v2527 = vpop.f32.mrf.mxu0
        %v2528 = vadd.f32 0.0, %v2527
        %2529 = vdwg.mxu0
        %v2530 = vadd.f32 %v2476, %v2528
        %v2531 = vrot.slane %v2234, 6
        %v2532 = vrot.slane %v2235, 6
        %v2533 = vsel %vm509, %v2531, %v2532
        %v2534 = vsel %vm204, %v2533, 0
        %2536 = vmatpush.msra.mxu0 0.0
        %2537 = vmatpush.msra.mxu0 0.0
        %2538 = vmatpush.msra.mxu0 0.0
        %2539 = vmatpush.msra.mxu0 0.0
        %2540 = vmatpush.msra.mxu0 0.0
        %2541 = vmatpush.msra.mxu0 0.0
        %2542 = vmatpush.msra.mxu0 0.0
        %2543 = vmatpush.msra.mxu0 0.0
        %2544 = vmatpush.msra.mxu0 0.0
        %2545 = vmatpush.msra.mxu0 0.0
        %2546 = vmatpush.msra.mxu0 0.0
        %2547 = vmatpush.msra.mxu0 0.0
        %2548 = vmatpush.msra.mxu0 0.0
        %2549 = vmatpush.msra.mxu0 0.0
        %2550 = vmatpush.msra.mxu0 %v508
        %2551 = vmatpush.msra.mxu0 %v507
        %2552 = vmatmul.f32.gmra.mxu0 %v2534
        %v2553 = vpop.f32.mrf.mxu0
        %v2554 = vadd.f32 0.0, %v2553
        %2555 = vdwg.mxu0
        %v2556 = vadd.f32 %v2503, %v2554
        %v2557 = vrot.slane %v2239, 6
        %v2558 = vrot.slane %v2240, 6
        %v2559 = vsel %vm509, %v2557, %v2558
        %v2560 = vsel %vm204, %v2559, 0
        %2562 = vmatpush.msra.mxu0 0.0
        %2563 = vmatpush.msra.mxu0 0.0
        %2564 = vmatpush.msra.mxu0 0.0
        %2565 = vmatpush.msra.mxu0 0.0
        %2566 = vmatpush.msra.mxu0 0.0
        %2567 = vmatpush.msra.mxu0 0.0
        %2568 = vmatpush.msra.mxu0 0.0
        %2569 = vmatpush.msra.mxu0 0.0
        %2570 = vmatpush.msra.mxu0 0.0
        %2571 = vmatpush.msra.mxu0 0.0
        %2572 = vmatpush.msra.mxu0 0.0
        %2573 = vmatpush.msra.mxu0 0.0
        %2574 = vmatpush.msra.mxu0 0.0
        %2575 = vmatpush.msra.mxu0 0.0
        %2576 = vmatpush.msra.mxu0 %v508
        %2577 = vmatpush.msra.mxu0 %v507
        %2578 = vmatmul.f32.gmra.mxu0 %v2560
        %v2579 = vpop.f32.mrf.mxu0
        %v2580 = vadd.f32 0.0, %v2579
        %2581 = vdwg.mxu0
        %v2582 = vadd.f32 %v2530, %v2580
        %v2583 = vrot.slane %v2234, 7
        %v2584 = vrot.slane %v2235, 7
        %v2585 = vsel %vm565, %v2583, %v2584
        %v2586 = vsel %vm204, %v2585, 0
        %2588 = vmatpush.msra.mxu0 0.0
        %2589 = vmatpush.msra.mxu0 0.0
        %2590 = vmatpush.msra.mxu0 0.0
        %2591 = vmatpush.msra.mxu0 0.0
        %2592 = vmatpush.msra.mxu0 0.0
        %2593 = vmatpush.msra.mxu0 0.0
        %2594 = vmatpush.msra.mxu0 0.0
        %2595 = vmatpush.msra.mxu0 0.0
        %2596 = vmatpush.msra.mxu0 0.0
        %2597 = vmatpush.msra.mxu0 0.0
        %2598 = vmatpush.msra.mxu0 0.0
        %2599 = vmatpush.msra.mxu0 0.0
        %2600 = vmatpush.msra.mxu0 0.0
        %2601 = vmatpush.msra.mxu0 0.0
        %2602 = vmatpush.msra.mxu0 %v564
        %2603 = vmatpush.msra.mxu0 %v563
        %2604 = vmatmul.f32.gmra.mxu0 %v2586
        %v2605 = vpop.f32.mrf.mxu0
        %v2606 = vadd.f32 0.0, %v2605
        %2607 = vdwg.mxu0
        %v2608 = vadd.f32 %v2556, %v2606
        %v2609 = vrot.slane %v2239, 7
        %v2610 = vrot.slane %v2240, 7
        %v2611 = vsel %vm565, %v2609, %v2610
        %v2612 = vsel %vm204, %v2611, 0
        %2614 = vmatpush.msra.mxu0 0.0
        %2615 = vmatpush.msra.mxu0 0.0
        %2616 = vmatpush.msra.mxu0 0.0
        %2617 = vmatpush.msra.mxu0 0.0
        %2618 = vmatpush.msra.mxu0 0.0
        %2619 = vmatpush.msra.mxu0 0.0
        %2620 = vmatpush.msra.mxu0 0.0
        %2621 = vmatpush.msra.mxu0 0.0
        %2622 = vmatpush.msra.mxu0 0.0
        %2623 = vmatpush.msra.mxu0 0.0
        %2624 = vmatpush.msra.mxu0 0.0
        %2625 = vmatpush.msra.mxu0 0.0
        %2626 = vmatpush.msra.mxu0 0.0
        %2627 = vmatpush.msra.mxu0 0.0
        %2628 = vmatpush.msra.mxu0 %v564
        %2629 = vmatpush.msra.mxu0 %v563
        %2630 = vmatmul.f32.gmra.mxu0 %v2612
        %v2631 = vpop.f32.mrf.mxu0
        %v2632 = vadd.f32 0.0, %v2631
        %2633 = vdwg.mxu0
        %v2634 = vadd.f32 %v2582, %v2632
        %v2635 = vsel %vm204, %v2235, 0
        %2637 = vmatpush.msra.mxu0 0.0
        %2638 = vmatpush.msra.mxu0 0.0
        %2639 = vmatpush.msra.mxu0 0.0
        %2640 = vmatpush.msra.mxu0 0.0
        %2641 = vmatpush.msra.mxu0 0.0
        %2642 = vmatpush.msra.mxu0 0.0
        %2643 = vmatpush.msra.mxu0 0.0
        %2644 = vmatpush.msra.mxu0 0.0
        %2645 = vmatpush.msra.mxu0 0.0
        %2646 = vmatpush.msra.mxu0 0.0
        %2647 = vmatpush.msra.mxu0 0.0
        %2648 = vmatpush.msra.mxu0 0.0
        %2649 = vmatpush.msra.mxu0 0.0
        %2650 = vmatpush.msra.mxu0 0.0
        %2651 = vmatpush.msra.mxu0 %v620
        %2652 = vmatpush.msra.mxu0 %v619
        %2653 = vmatmul.f32.gmra.mxu0 %v2635
        %v2654 = vpop.f32.mrf.mxu0
        %v2655 = vadd.f32 0.0, %v2654
        %2656 = vdwg.mxu0
        %v2657 = vadd.f32 %v2608, %v2655
        %v2658 = vsel %vm204, %v2240, 0
        %2660 = vmatpush.msra.mxu0 0.0
        %2661 = vmatpush.msra.mxu0 0.0
        %2662 = vmatpush.msra.mxu0 0.0
        %2663 = vmatpush.msra.mxu0 0.0
        %2664 = vmatpush.msra.mxu0 0.0
        %2665 = vmatpush.msra.mxu0 0.0
        %2666 = vmatpush.msra.mxu0 0.0
        %2667 = vmatpush.msra.mxu0 0.0
        %2668 = vmatpush.msra.mxu0 0.0
        %2669 = vmatpush.msra.mxu0 0.0
        %2670 = vmatpush.msra.mxu0 0.0
        %2671 = vmatpush.msra.mxu0 0.0
        %2672 = vmatpush.msra.mxu0 0.0
        %2673 = vmatpush.msra.mxu0 0.0
        %2674 = vmatpush.msra.mxu0 %v620
        %2675 = vmatpush.msra.mxu0 %v619
        %2676 = vmatmul.f32.gmra.mxu0 %v2658
        %v2677 = vpop.f32.mrf.mxu0
        %v2678 = vadd.f32 0.0, %v2677
        %2679 = vdwg.mxu0
        %v2680 = vadd.f32 %v2634, %v2678
        %v2681 = vrot.slane %v2235, 1
        %v2682 = vsel %vm204, %v2681, 0
        %2684 = vmatpush.msra.mxu0 0.0
        %2685 = vmatpush.msra.mxu0 0.0
        %2686 = vmatpush.msra.mxu0 0.0
        %2687 = vmatpush.msra.mxu0 0.0
        %2688 = vmatpush.msra.mxu0 0.0
        %2689 = vmatpush.msra.mxu0 0.0
        %2690 = vmatpush.msra.mxu0 0.0
        %2691 = vmatpush.msra.mxu0 0.0
        %2692 = vmatpush.msra.mxu0 0.0
        %2693 = vmatpush.msra.mxu0 0.0
        %2694 = vmatpush.msra.mxu0 0.0
        %2695 = vmatpush.msra.mxu0 0.0
        %2696 = vmatpush.msra.mxu0 0.0
        %2697 = vmatpush.msra.mxu0 0.0
        %2698 = vmatpush.msra.mxu0 %v669
        %2699 = vmatpush.msra.mxu0 %v668
        %2700 = vmatmul.f32.gmra.mxu0 %v2682
        %v2701 = vpop.f32.mrf.mxu0
        %v2702 = vadd.f32 0.0, %v2701
        %2703 = vdwg.mxu0
        %v2704 = vadd.f32 %v2657, %v2702
        %v2705 = vrot.slane %v2240, 1
        %v2706 = vsel %vm204, %v2705, 0
        %2708 = vmatpush.msra.mxu0 0.0
        %2709 = vmatpush.msra.mxu0 0.0
        %2710 = vmatpush.msra.mxu0 0.0
        %2711 = vmatpush.msra.mxu0 0.0
        %2712 = vmatpush.msra.mxu0 0.0
        %2713 = vmatpush.msra.mxu0 0.0
        %2714 = vmatpush.msra.mxu0 0.0
        %2715 = vmatpush.msra.mxu0 0.0
        %2716 = vmatpush.msra.mxu0 0.0
        %2717 = vmatpush.msra.mxu0 0.0
        %2718 = vmatpush.msra.mxu0 0.0
        %2719 = vmatpush.msra.mxu0 0.0
        %2720 = vmatpush.msra.mxu0 0.0
        %2721 = vmatpush.msra.mxu0 0.0
        %2722 = vmatpush.msra.mxu0 %v669
        %2723 = vmatpush.msra.mxu0 %v668
        %2724 = vmatmul.f32.gmra.mxu0 %v2706
        %v2725 = vpop.f32.mrf.mxu0
        %v2726 = vadd.f32 0.0, %v2725
        %2727 = vdwg.mxu0
        %v2728 = vadd.f32 %v2680, %v2726
        %v2729 = vrot.slane %v2235, 2
        %v2730 = vsel %vm204, %v2729, 0
        %2732 = vmatpush.msra.mxu0 0.0
        %2733 = vmatpush.msra.mxu0 0.0
        %2734 = vmatpush.msra.mxu0 0.0
        %2735 = vmatpush.msra.mxu0 0.0
        %2736 = vmatpush.msra.mxu0 0.0
        %2737 = vmatpush.msra.mxu0 0.0
        %2738 = vmatpush.msra.mxu0 0.0
        %2739 = vmatpush.msra.mxu0 0.0
        %2740 = vmatpush.msra.mxu0 0.0
        %2741 = vmatpush.msra.mxu0 0.0
        %2742 = vmatpush.msra.mxu0 0.0
        %2743 = vmatpush.msra.mxu0 0.0
        %2744 = vmatpush.msra.mxu0 0.0
        %2745 = vmatpush.msra.mxu0 0.0
        %2746 = vmatpush.msra.mxu0 %v720
        %2747 = vmatpush.msra.mxu0 %v719
        %2748 = vmatmul.f32.gmra.mxu0 %v2730
        %v2749 = vpop.f32.mrf.mxu0
        %v2750 = vadd.f32 0.0, %v2749
        %2751 = vdwg.mxu0
        %v2752 = vadd.f32 %v2704, %v2750
        %v2753 = vrot.slane %v2240, 2
        %v2754 = vsel %vm204, %v2753, 0
        %2756 = vmatpush.msra.mxu0 0.0
        %2757 = vmatpush.msra.mxu0 0.0
        %2758 = vmatpush.msra.mxu0 0.0
        %2759 = vmatpush.msra.mxu0 0.0
        %2760 = vmatpush.msra.mxu0 0.0
        %2761 = vmatpush.msra.mxu0 0.0
        %2762 = vmatpush.msra.mxu0 0.0
        %2763 = vmatpush.msra.mxu0 0.0
        %2764 = vmatpush.msra.mxu0 0.0
        %2765 = vmatpush.msra.mxu0 0.0
        %2766 = vmatpush.msra.mxu0 0.0
        %2767 = vmatpush.msra.mxu0 0.0
        %2768 = vmatpush.msra.mxu0 0.0
        %2769 = vmatpush.msra.mxu0 0.0
        %2770 = vmatpush.msra.mxu0 %v720
        %2771 = vmatpush.msra.mxu0 %v719
        %2772 = vmatmul.f32.gmra.mxu0 %v2754
        %v2773 = vpop.f32.mrf.mxu0
        %v2774 = vadd.f32 0.0, %v2773
        %2775 = vdwg.mxu0
        %v2776 = vadd.f32 %v2728, %v2774
        %v2777 = vrot.slane %v2235, 3
        %v2778 = vsel %vm204, %v2777, 0
        %2780 = vmatpush.msra.mxu0 0.0
        %2781 = vmatpush.msra.mxu0 0.0
        %2782 = vmatpush.msra.mxu0 0.0
        %2783 = vmatpush.msra.mxu0 0.0
        %2784 = vmatpush.msra.mxu0 0.0
        %2785 = vmatpush.msra.mxu0 0.0
        %2786 = vmatpush.msra.mxu0 0.0
        %2787 = vmatpush.msra.mxu0 0.0
        %2788 = vmatpush.msra.mxu0 0.0
        %2789 = vmatpush.msra.mxu0 0.0
        %2790 = vmatpush.msra.mxu0 0.0
        %2791 = vmatpush.msra.mxu0 0.0
        %2792 = vmatpush.msra.mxu0 0.0
        %2793 = vmatpush.msra.mxu0 0.0
        %2794 = vmatpush.msra.mxu0 %v771
        %2795 = vmatpush.msra.mxu0 %v770
        %2796 = vmatmul.f32.gmra.mxu0 %v2778
        %v2797 = vpop.f32.mrf.mxu0
        %v2798 = vadd.f32 0.0, %v2797
        %2799 = vdwg.mxu0
        %v2800 = vadd.f32 %v2752, %v2798
        %v2801 = vrot.slane %v2240, 3
        %v2802 = vsel %vm204, %v2801, 0
        %2804 = vmatpush.msra.mxu0 0.0
        %2805 = vmatpush.msra.mxu0 0.0
        %2806 = vmatpush.msra.mxu0 0.0
        %2807 = vmatpush.msra.mxu0 0.0
        %2808 = vmatpush.msra.mxu0 0.0
        %2809 = vmatpush.msra.mxu0 0.0
        %2810 = vmatpush.msra.mxu0 0.0
        %2811 = vmatpush.msra.mxu0 0.0
        %2812 = vmatpush.msra.mxu0 0.0
        %2813 = vmatpush.msra.mxu0 0.0
        %2814 = vmatpush.msra.mxu0 0.0
        %2815 = vmatpush.msra.mxu0 0.0
        %2816 = vmatpush.msra.mxu0 0.0
        %2817 = vmatpush.msra.mxu0 0.0
        %2818 = vmatpush.msra.mxu0 %v771
        %2819 = vmatpush.msra.mxu0 %v770
        %2820 = vmatmul.f32.gmra.mxu0 %v2802
        %v2821 = vpop.f32.mrf.mxu0
        %v2822 = vadd.f32 0.0, %v2821
        %2823 = vdwg.mxu0
        %v2824 = vadd.f32 %v2776, %v2822
        %v2825 = vrot.slane %v2235, 4
        %v2826 = vsel %vm204, %v2825, 0
        %2828 = vmatpush.msra.mxu0 0.0
        %2829 = vmatpush.msra.mxu0 0.0
        %2830 = vmatpush.msra.mxu0 0.0
        %2831 = vmatpush.msra.mxu0 0.0
        %2832 = vmatpush.msra.mxu0 0.0
        %2833 = vmatpush.msra.mxu0 0.0
        %2834 = vmatpush.msra.mxu0 0.0
        %2835 = vmatpush.msra.mxu0 0.0
        %2836 = vmatpush.msra.mxu0 0.0
        %2837 = vmatpush.msra.mxu0 0.0
        %2838 = vmatpush.msra.mxu0 0.0
        %2839 = vmatpush.msra.mxu0 0.0
        %2840 = vmatpush.msra.mxu0 0.0
        %2841 = vmatpush.msra.mxu0 0.0
        %2842 = vmatpush.msra.mxu0 %v822
        %2843 = vmatpush.msra.mxu0 %v821
        %2844 = vmatmul.f32.gmra.mxu0 %v2826
        %v2845 = vpop.f32.mrf.mxu0
        %v2846 = vadd.f32 0.0, %v2845
        %2847 = vdwg.mxu0
        %v2848 = vadd.f32 %v2800, %v2846
        %v2849 = vrot.slane %v2240, 4
        %v2850 = vsel %vm204, %v2849, 0
        %2852 = vmatpush.msra.mxu0 0.0
        %2853 = vmatpush.msra.mxu0 0.0
        %2854 = vmatpush.msra.mxu0 0.0
        %2855 = vmatpush.msra.mxu0 0.0
        %2856 = vmatpush.msra.mxu0 0.0
        %2857 = vmatpush.msra.mxu0 0.0
        %2858 = vmatpush.msra.mxu0 0.0
        %2859 = vmatpush.msra.mxu0 0.0
        %2860 = vmatpush.msra.mxu0 0.0
        %2861 = vmatpush.msra.mxu0 0.0
        %2862 = vmatpush.msra.mxu0 0.0
        %2863 = vmatpush.msra.mxu0 0.0
        %2864 = vmatpush.msra.mxu0 0.0
        %2865 = vmatpush.msra.mxu0 0.0
        %2866 = vmatpush.msra.mxu0 %v822
        %2867 = vmatpush.msra.mxu0 %v821
        %2868 = vmatmul.f32.gmra.mxu0 %v2850
        %v2869 = vpop.f32.mrf.mxu0
        %v2870 = vadd.f32 0.0, %v2869
        %2871 = vdwg.mxu0
        %v2872 = vadd.f32 %v2824, %v2870
        %v2873 = vsub.f32 %v2848, %v2872
        %v2874 = vmul.f32 %v2873, %v2873
        %v2875 = vsel %vm873, %v2874, 0.0
        %2876 = vadd.xlane.f32.xlu0 %v2875
        %v2877 = vpop.xlane.xlu0 %2876
        %v2878 = vrot.slane %v2877, 4
        %v2879 = vadd.f32 %v2877, %v2878
        %v2880 = vrot.slane %v2879, 2
        %v2881 = vadd.f32 %v2879, %v2880
        %v2882 = vrot.slane %v2881, 1
        %v2883 = vadd.f32 %v2881, %v2882
        %s2884 = vtos %v2883
        %s2885 = sadd.f32 %s2218, %s2884
        %v2886 = vmul.f32 %v2848, %v2848
        %v2887 = vsel %vm873, %v2886, 0.0
        %2888 = vadd.xlane.f32.xlu0 %v2887
        %v2889 = vpop.xlane.xlu0 %2888
        %v2890 = vrot.slane %v2889, 4
        %v2891 = vadd.f32 %v2889, %v2890
        %v2892 = vrot.slane %v2891, 2
        %v2893 = vadd.f32 %v2891, %v2892
        %v2894 = vrot.slane %v2893, 1
        %v2895 = vadd.f32 %v2893, %v2894
        %s2896 = vtos %v2895
        %s2897 = sadd.f32 %s2230, %s2896
        %v2898 = vstv %s2885
        %v2899 = vrsqrt.pop %v2898
        %v2900 = vmul.f32 %v2899, %v2898
        %v2901 = vmul.f32 %v2900, %v2899
        %v2902 = vmul.f32 0.5, %v2901
        %v2903 = vsub.f32 1.5, %v2902
        %v2904 = vmul.f32 %v2899, %v2903
        %v2905 = vmul.f32 %v2898, %v2904
        %vm2906 = vcmp.eq.f32.partialorder %v2898, inf
        %v2907 = vsel %vm2906, %v2898, %v2905
        %vm2908 = vcmp.eq.f32.partialorder %v2898, 0.0
        %v2909 = vand.u32 %v2898, 2147483648
        %v2910 = vsel %vm2908, %v2909, %v2907
        %s2911 = vtos %v2910
        %v2912 = vstv %s2897
        %v2913 = vrsqrt.pop %v2912
        %v2914 = vmul.f32 %v2913, %v2912
        %v2915 = vmul.f32 %v2914, %v2913
        %v2916 = vmul.f32 0.5, %v2915
        %v2917 = vsub.f32 1.5, %v2916
        %v2918 = vmul.f32 %v2913, %v2917
        %v2919 = vmul.f32 %v2912, %v2918
        %vm2920 = vcmp.eq.f32.partialorder %v2912, inf
        %v2921 = vsel %vm2920, %v2912, %v2919
        %vm2922 = vcmp.eq.f32.partialorder %v2912, 0.0
        %v2923 = vand.u32 %v2912, 2147483648
        %v2924 = vsel %vm2922, %v2923, %v2921
        %s2925 = vtos %v2924
        %v2926 = vstv %s2925
        %v2927 = vrcp.pop %v2926
        %v2928 = vmul.f32 %v2926, %v2927
        %v2929 = vsub.f32 1.0, %v2928
        %v2930 = vmul.f32 %v2927, %v2929
        %v2931 = vadd.f32 %v2927, %v2930
        %vm2932 = vweird.f32 %v2926
        %vm2933 = vweird.f32 %v2927
        %vm2934 = vmor %vm2932, %vm2933
        %v2935 = vsel %vm2934, %v2927, %v2931
        %v2936 = vand.u32 2147483647, %v2926
        %vm2937 = vcmp.eq.f32.partialorder %v2936, 8.507059e+37
        %v2938 = vand.u32 %v2926, 2147483648
        %v2939 = vor.u32 1.1754944e-38, %v2938
        %v2940 = vsel %vm2937, %v2939, %v2935
        %s2941 = vtos %v2940
        %s2942 = smul.f32 %s2911, %s2941
        %v2943 = vstv %s2942
        %2944 = vst [vmem:[%s178] sm:$0xff] %v2943
        %s2945 = sand.u32 %s98, 1
        %s2946 = scalar_lea.sflag [#allocation3], %s2945
        %s2947 = sand.u32 %s98, 1
        %s2948 = smul.addr %s2947, 8
        %s2949 = scalar_lea.vmem [#allocation2], %s2948
        // Predicated region
        $region33: #{tpu_custom_call.1} parent=31 // pred_check
          %p2950 = pneg %p108
        $region34: #{tpu_custom_call.1} parent=31 // pred_check_branch
          %2952 = sbr.rel (%p2950) target = $region36
        $region35: #{tpu_custom_call.1} parent=31 // pred_region
          %2954 = vsyncadd %s2946, 0
          %s2955 = smul.addr %s17, 8
          %s2956 = scalar_lea.hbm %s3, %s2955
          %s2958 = sshll.u32 %s2949, 4
          %s2959 = int_to_ptr.vmem [resolvable:$true] %s2958
          %s2960 = sshll.u32 %s2956, 4
          %s2961 = int_to_ptr.hbm [resolvable:$true] %s2960
          %2963 = dma.vmem_to_hbm [thread:$0]  %s2959, 128, %s2961, %s2946
        $region36: #{tpu_custom_call.1} parent=31 // pred_fallthru
          _
      $region32: #{tpu_custom_call.1} parent=5 // pred_fallthru
        _
      %p2964 = scmp.le.s32.totalorder 2, %s12
      // Predicated region
      $region37: #{tpu_custom_call.1} parent=5 // pred_check
        %p2965 = pneg %p2964
      $region38: #{tpu_custom_call.1} parent=5 // pred_check_branch
        %2967 = sbr.rel (%p2965) target = $region40
      $region39: #{tpu_custom_call.1} parent=5 // pred_region
        %s2968 = ssub.s32 %s12, 2
        // Predicated region
        $region41: #{tpu_custom_call.1} parent=39 // pred_check
          %p2969 = pneg %p114
        $region42: #{tpu_custom_call.1} parent=39 // pred_check_branch
          %2971 = sbr.rel (%p2969) target = $region44
        $region43: #{tpu_custom_call.1} parent=39 // pred_region
          %s2972 = sand.u32 %s99, 1
          %s2973 = scalar_lea.sflag [#allocation3], %s2972
          %s2974 = sand.u32 %s99, 1
          %s2975 = smul.addr %s2974, 8
          %s2976 = scalar_lea.vmem [#allocation2], %s2975
          %2978 = dma.done %s2973, 128
        $region44: #{tpu_custom_call.1} parent=39 // pred_fallthru
          _
      $region40: #{tpu_custom_call.1} parent=5 // pred_fallthru
        _
    $region6: #{tpu_custom_call.1} parent=1 // loop_footer
      %s16 = sadd.s32 1, %s12
    $region7: #{tpu_custom_call.1} parent=1 // loop_footer_branch
      %11 = sbr.rel target = $region3
    $region8: #{tpu_custom_call.1} parent=1 // loop_exit
      _
    %2979 = vsyncpa [#allocation3], 1
    %s2980 = scalar_lea.sflag [#allocation3], 1
    %2981 = vsyncpa %s2980, 1

</llo_original>
